<compile_context>
chip_gen: v7x
topology: tpu7x:2x2x1
jax: 0.10.0
libtpu: 0.0.40
codegen_flags: <defaults>
</compile_context>

<pallas_src>
import jax
import jax.numpy as jnp
from jax import lax
from jax.experimental import pallas as pl
from jax.experimental.pallas import tpu as pltpu

LANES = 128
SUBLANES = 8
CHUNK_ROWS = 128            # per-loss working chunk: bounds vreg live ranges
MAX_TILE_ROWS = 1024        # 14 streams x 2 bufs x (1024,128) f32 ~= 14 MiB VMEM
VMEM_LIMIT_BYTES = 32 * 1024 * 1024

_LOSS_NAMES = ("M1", "B1", "E1", "M2", "B2", "E2",
               "M3", "B3", "E3", "M4", "B4", "E4")


def _make_cel_kernel(*, n, tr, num_tiles):
    """Kernel over one (tr, 128) row tile of all 14 streams.

    refs: p0..p11 (tr,128) prediction tiles, tseg, tedge (tr,128) target tiles,
          out_ref (1, 12, 8, 128) per-tile partial sums.
    """
    chunk = min(CHUNK_ROWS, tr)
    assert tr % chunk == 0 and chunk % SUBLANES == 0
    trips = tr // chunk
    # Does the final tile cover element indices >= n (zero-pad or garbage
    # overhang)?  Trace-time constant.
    needs_mask = (num_tiles * tr * LANES) != n

    def kernel(*refs):
        pred_refs = refs[:12]
        tseg_ref, tedge_ref = refs[12], refs[13]
        out_ref = refs[14]
        t = pl.program_id(0)

        def accum_one(i, masked):
            pred_ref = pred_refs[i]
            tgt_ref = tseg_ref if (i % 3) < 2 else tedge_ref

            def chunk_body(c, acc):
                r0 = c * chunk
                if not isinstance(r0, int):
                    r0 = pl.multiple_of(r0, chunk)
                x = pred_ref[pl.ds(r0, chunk), :].astype(jnp.float32)
                tt = tgt_ref[pl.ds(r0, chunk), :].astype(jnp.float32)
                if (i % 3) < 2:
                    # F.binary_cross_entropy_with_logits (PyTorch-stable form):
                    #   max(x,0) - x*t + log1p(exp(-|x|))
                    ell = (jnp.maximum(x, 0.0) - x * tt
                           + jnp.log1p(jnp.exp(-jnp.abs(x))))
                else:
                    # F.binary_cross_entropy on probabilities; PyTorch clamps
                    # log() at -100 to avoid -inf * 0.
                    logp = jnp.maximum(jnp.log(x), -100.0)
                    log1mp = jnp.maximum(jnp.log(1.0 - x), -100.0)
                    ell = -(tt * logp + (1.0 - tt) * log1mp)
                if masked:
                    # Overhang rows of the last tile hold unspecified VMEM;
                    # select (not multiply) so log(garbage)=NaN cannot leak.
                    rid = lax.broadcasted_iota(jnp.int32, (chunk, LANES), 0)
                    lid = lax.broadcasted_iota(jnp.int32, (chunk, LANES), 1)
                    idx = (t * tr + r0 + rid) * LANES + lid
                    ell = jnp.where(idx < n, ell, 0.0)
                # (chunk,128) -> (8,128): pure vreg adds, no XLU work here.
                part = ell.reshape(chunk // SUBLANES, SUBLANES, LANES).sum(axis=0)
                return acc + part

            acc0 = jnp.zeros((SUBLANES, LANES), jnp.float32)
            if trips == 1:
                acc = chunk_body(0, acc0)
            else:
                acc = lax.fori_loop(0, trips, chunk_body, acc0)
            out_ref[0, i] = acc

        def accum_all(masked):
            for i in range(12):   # static unroll; i % 3 branch is trace-time
                accum_one(i, masked)

        if not needs_mask:
            accum_all(False)
        elif num_tiles == 1:
            accum_all(True)
        else:
            @pl.when(t < num_tiles - 1)
            def _():
                accum_all(False)     # full tiles: no masking work at all

            @pl.when(t == num_tiles - 1)
            def _():
                accum_all(True)      # only the last tile pays for the mask

    return kernel


@jax.jit
def cel_forward(pred, masks):
    """pred: tuple/list of 12 arrays (B,1,H,W) (M/B logits, E probabilities);
    masks: (B,2,H,W) -> channel 0 segmentation target, channel 1 edge target.
    Returns dict of 12 scalar mean losses (M1,B1,E1,...,M4,B4,E4)."""
    assert len(pred) == 12
    target = masks[:, 0:1, :, :]
    edge_m = masks[:, 1:2, :, :]
    b, c, h, w = target.shape
    n = b * c * h * w

    rows = -(-n // LANES)                              # ceil(n / 128)
    # tr is a multiple of 128 and (for realistic sizes) <= rows, so no input
    # padding/copies are needed; only the final block overhangs the array.
    tr = min(MAX_TILE_ROWS, max(CHUNK_ROWS, (rows // CHUNK_ROWS) * CHUNK_ROWS))
    num_tiles = -(-rows // tr)
    rows_arr = max(rows, tr)            # > rows only for tiny (<128-row) inputs
    pad_elems = rows_arr * LANES - n    # 0 in the common case -> zero-copy prep

    def prep(x):
        # Keep bf16 inputs as bf16 (halves HBM read bytes); upcast in-kernel.
        if not jnp.issubdtype(x.dtype, jnp.floating):
            x = x.astype(jnp.float32)
        flat = jnp.reshape(x, (-1,))
        if pad_elems:
            # TODO(synk): only tiny inputs (<128 rows) or n % 128 != 0 hit this
            # copy; a dedicated sub-128-element tail path would remove it too.
            flat = jnp.pad(flat, (0, pad_elems))
        return jnp.reshape(flat, (rows_arr, LANES))

    pred_2d = [prep(p) for p in pred]
    tseg = prep(target)      # shared by all M*/B* losses
    tedge = prep(edge_m)     # shared by all E* losses

    kernel = _make_cel_kernel(n=n, tr=tr, num_tiles=num_tiles)
    tile_spec = pl.BlockSpec((tr, LANES), lambda t: (t, 0))

    partials = pl.pallas_call(
        kernel,
        out_shape=jax.ShapeDtypeStruct((num_tiles, 12, SUBLANES, LANES),
                                       jnp.float32),
        grid=(num_tiles,),
        in_specs=[tile_spec] * 14,
        out_specs=pl.BlockSpec((1, 12, SUBLANES, LANES),
                               lambda t: (t, 0, 0, 0)),
        compiler_params=pltpu.CompilerParams(
            # Fully parallel tiles, no carried state: megacore (v7x) shards the
            # axis across both TensorCores; a no-op on 1-core v5e/v6e.
            dimension_semantics=("parallel",),
            vmem_limit_bytes=VMEM_LIMIT_BYTES,
        ),
    )(*pred_2d, tseg, tedge)

    sums = jnp.sum(partials, axis=(0, 2, 3))           # tiny (T,12,8,128) reduce
    means = sums / jnp.float32(n)
    return {name: means[i] for i, name in enumerate(_LOSS_NAMES)}


def _reference(pred, masks):
    """Pure-JAX reference for verification."""
    target = masks[:, 0:1, :, :].astype(jnp.float32)
    edge_m = masks[:, 1:2, :, :].astype(jnp.float32)
    out = {}
    for i, name in enumerate(_LOSS_NAMES):
        x = pred[i].astype(jnp.float32)
        if i % 3 < 2:
            ell = jnp.maximum(x, 0.0) - x * target + jnp.log1p(jnp.exp(-jnp.abs(x)))
        else:
            ell = -(
                edge_m * jnp.maximum(jnp.log(x), -100.0)
                + (1.0 - edge_m) * jnp.maximum(jnp.log(1.0 - x), -100.0)
            )
        out[name] = jnp.mean(ell)
    return out


if __name__ == "__main__":
    key = jax.random.PRNGKey(0)
    B, H, W = 2, 16, 16

    keys = jax.random.split(key, 5)
    # masks: channel 0 = segmentation target, channel 1 = edge target (both {0,1})
    masks = (jax.random.uniform(keys[0], (B, 2, H, W)) > 0.5).astype(jnp.float32)

    pred = []
    for g in range(4):
        k0, k1, k2 = jax.random.split(keys[1 + g], 3)
        pred.append(jax.random.normal(k0, (B, 1, H, W), jnp.float32))              # logits (M)
        pred.append(jax.random.normal(k1, (B, 1, H, W), jnp.float32))              # logits (B)
        pred.append(jax.nn.sigmoid(jax.random.normal(k2, (B, 1, H, W), jnp.float32)))  # probs (E)
    pred = tuple(pred)

    losses = cel_forward(pred, masks)
    losses = {k: jax.block_until_ready(v) for k, v in losses.items()}

    ref = _reference(pred, masks)
    for k in losses:
        a, r_ = float(losses[k]), float(ref[k])
        assert abs(a - r_) < 1e-5 + 1e-5 * abs(r_), (k, a, r_)

    print("KERNEL_OK")
</pallas_src>

<mosaic_0001>
module attributes {stable_mosaic.version = 11 : i64} {
  func.func @kernel(%arg0: i32, %arg1: memref<128x128xf32, #tpu.memory_space<vmem>>, %arg2: memref<128x128xf32, #tpu.memory_space<vmem>>, %arg3: memref<128x128xf32, #tpu.memory_space<vmem>>, %arg4: memref<128x128xf32, #tpu.memory_space<vmem>>, %arg5: memref<128x128xf32, #tpu.memory_space<vmem>>, %arg6: memref<128x128xf32, #tpu.memory_space<vmem>>, %arg7: memref<128x128xf32, #tpu.memory_space<vmem>>, %arg8: memref<128x128xf32, #tpu.memory_space<vmem>>, %arg9: memref<128x128xf32, #tpu.memory_space<vmem>>, %arg10: memref<128x128xf32, #tpu.memory_space<vmem>>, %arg11: memref<128x128xf32, #tpu.memory_space<vmem>>, %arg12: memref<128x128xf32, #tpu.memory_space<vmem>>, %arg13: memref<128x128xf32, #tpu.memory_space<vmem>>, %arg14: memref<128x128xf32, #tpu.memory_space<vmem>>, %arg15: memref<1x12x8x128xf32, #tpu.memory_space<vmem>>) attributes {dimension_semantics = [#tpu.dimension_semantics<parallel>], iteration_bounds = array<i64: 1>, scalar_prefetch = 0 : i64, scratch_operands = 0 : i64, tpu.core_type = #tpu.core_type<tc>, window_params = [{transform_indices = @transform_0, window_bounds = array<i64: 128, 128>}, {transform_indices = @transform_1, window_bounds = array<i64: 128, 128>}, {transform_indices = @transform_2, window_bounds = array<i64: 128, 128>}, {transform_indices = @transform_3, window_bounds = array<i64: 128, 128>}, {transform_indices = @transform_4, window_bounds = array<i64: 128, 128>}, {transform_indices = @transform_5, window_bounds = array<i64: 128, 128>}, {transform_indices = @transform_6, window_bounds = array<i64: 128, 128>}, {transform_indices = @transform_7, window_bounds = array<i64: 128, 128>}, {transform_indices = @transform_8, window_bounds = array<i64: 128, 128>}, {transform_indices = @transform_9, window_bounds = array<i64: 128, 128>}, {transform_indices = @transform_10, window_bounds = array<i64: 128, 128>}, {transform_indices = @transform_11, window_bounds = array<i64: 128, 128>}, {transform_indices = @transform_12, window_bounds = array<i64: 128, 128>}, {transform_indices = @transform_13, window_bounds = array<i64: 128, 128>}, {transform_indices = @transform_14, window_bounds = array<i64: 1, 12, 8, 128>}]} {
    %cst = arith.constant 0.000000e+00 : f32
    %0 = vector.broadcast %cst : f32 to vector<8x128xf32>
    %c0 = arith.constant 0 : index
    %c0_0 = arith.constant 0 : index
    %1 = vector.load %arg1[%c0, %c0_0] : memref<128x128xf32, #tpu.memory_space<vmem>>, vector<128x128xf32>
    %c0_1 = arith.constant 0 : index
    %c0_2 = arith.constant 0 : index
    %2 = vector.load %arg13[%c0_1, %c0_2] : memref<128x128xf32, #tpu.memory_space<vmem>>, vector<128x128xf32>
    %cst_3 = arith.constant 0.000000e+00 : f32
    %3 = vector.broadcast %cst_3 : f32 to vector<128x128xf32>
    %4 = arith.maximumf %1, %3 : vector<128x128xf32>
    %5 = arith.mulf %1, %2 : vector<128x128xf32>
    %6 = arith.subf %4, %5 : vector<128x128xf32>
    %7 = math.absf %1 : vector<128x128xf32>
    %cst_4 = arith.constant 0.000000e+00 : f32
    %8 = vector.broadcast %cst_4 : f32 to vector<128x128xf32>
    %9 = arith.subf %8, %7 : vector<128x128xf32>
    %10 = math.exp %9 : vector<128x128xf32>
    %11 = math.log1p %10 : vector<128x128xf32>
    %12 = arith.addf %6, %11 : vector<128x128xf32>
    %13 = tpu.iota {dimensions = array<i32: 0>} : vector<128x128xi32>
    %14 = tpu.iota {dimensions = array<i32: 1>} : vector<128x128xi32>
    %c128_i32 = arith.constant 128 : i32
    %15 = arith.muli %arg0, %c128_i32 : i32
    %c0_i32 = arith.constant 0 : i32
    %16 = arith.addi %15, %c0_i32 : i32
    %17 = vector.broadcast %16 : i32 to vector<128x128xi32>
    %18 = arith.addi %17, %13 : vector<128x128xi32>
    %c128_i32_5 = arith.constant 128 : i32
    %19 = vector.broadcast %c128_i32_5 : i32 to vector<128x128xi32>
    %20 = arith.muli %18, %19 : vector<128x128xi32>
    %21 = arith.addi %20, %14 : vector<128x128xi32>
    %c512_i32 = arith.constant 512 : i32
    %22 = vector.broadcast %c512_i32 : i32 to vector<128x128xi32>
    %23 = arith.cmpi slt, %21, %22 : vector<128x128xi32>
    %cst_6 = arith.constant 0.000000e+00 : f32
    %24 = vector.broadcast %cst_6 : f32 to vector<128x128xf32>
    %25 = arith.select %23, %12, %24 : vector<128x128xi1>, vector<128x128xf32>
    %26 = vector.shape_cast %25 : vector<128x128xf32> to vector<16x8x128xf32>
    %cst_7 = arith.constant dense<0.000000e+00> : vector<8x128xf32>
    %27 = vector.multi_reduction <add>, %26, %cst_7 [0] : vector<16x8x128xf32> to vector<8x128xf32>
    %28 = arith.addf %0, %27 : vector<8x128xf32>
    %c0_8 = arith.constant 0 : index
    %c0_9 = arith.constant 0 : index
    %c0_10 = arith.constant 0 : index
    %c0_11 = arith.constant 0 : index
    %29 = vector.load %arg15[%c0_8, %c0_9, %c0_10, %c0_11] : memref<1x12x8x128xf32, #tpu.memory_space<vmem>>, vector<1x1x8x128xf32>
    %30 = vector.shape_cast %29 : vector<1x1x8x128xf32> to vector<8x128xf32>
    %31 = vector.shape_cast %28 : vector<8x128xf32> to vector<1x1x8x128xf32>
    tpu.vector_store %arg15[%c0_8, %c0_9, %c0_10, %c0_11], %31 {strides = array<i32>} : memref<1x12x8x128xf32, #tpu.memory_space<vmem>>, vector<1x1x8x128xf32>,
    %cst_12 = arith.constant 0.000000e+00 : f32
    %32 = vector.broadcast %cst_12 : f32 to vector<8x128xf32>
    %c0_13 = arith.constant 0 : index
    %c0_14 = arith.constant 0 : index
    %33 = vector.load %arg2[%c0_13, %c0_14] : memref<128x128xf32, #tpu.memory_space<vmem>>, vector<128x128xf32>
    %c0_15 = arith.constant 0 : index
    %c0_16 = arith.constant 0 : index
    %34 = vector.load %arg13[%c0_15, %c0_16] : memref<128x128xf32, #tpu.memory_space<vmem>>, vector<128x128xf32>
    %cst_17 = arith.constant 0.000000e+00 : f32
    %35 = vector.broadcast %cst_17 : f32 to vector<128x128xf32>
    %36 = arith.maximumf %33, %35 : vector<128x128xf32>
    %37 = arith.mulf %33, %34 : vector<128x128xf32>
    %38 = arith.subf %36, %37 : vector<128x128xf32>
    %39 = math.absf %33 : vector<128x128xf32>
    %cst_18 = arith.constant 0.000000e+00 : f32
    %40 = vector.broadcast %cst_18 : f32 to vector<128x128xf32>
    %41 = arith.subf %40, %39 : vector<128x128xf32>
    %42 = math.exp %41 : vector<128x128xf32>
    %43 = math.log1p %42 : vector<128x128xf32>
    %44 = arith.addf %38, %43 : vector<128x128xf32>
    %45 = tpu.iota {dimensions = array<i32: 0>} : vector<128x128xi32>
    %46 = tpu.iota {dimensions = array<i32: 1>} : vector<128x128xi32>
    %c128_i32_19 = arith.constant 128 : i32
    %47 = arith.muli %arg0, %c128_i32_19 : i32
    %c0_i32_20 = arith.constant 0 : i32
    %48 = arith.addi %47, %c0_i32_20 : i32
    %49 = vector.broadcast %48 : i32 to vector<128x128xi32>
    %50 = arith.addi %49, %45 : vector<128x128xi32>
    %c128_i32_21 = arith.constant 128 : i32
    %51 = vector.broadcast %c128_i32_21 : i32 to vector<128x128xi32>
    %52 = arith.muli %50, %51 : vector<128x128xi32>
    %53 = arith.addi %52, %46 : vector<128x128xi32>
    %c512_i32_22 = arith.constant 512 : i32
    %54 = vector.broadcast %c512_i32_22 : i32 to vector<128x128xi32>
    %55 = arith.cmpi slt, %53, %54 : vector<128x128xi32>
    %cst_23 = arith.constant 0.000000e+00 : f32
    %56 = vector.broadcast %cst_23 : f32 to vector<128x128xf32>
    %57 = arith.select %55, %44, %56 : vector<128x128xi1>, vector<128x128xf32>
    %58 = vector.shape_cast %57 : vector<128x128xf32> to vector<16x8x128xf32>
    %cst_24 = arith.constant dense<0.000000e+00> : vector<8x128xf32>
    %59 = vector.multi_reduction <add>, %58, %cst_24 [0] : vector<16x8x128xf32> to vector<8x128xf32>
    %60 = arith.addf %32, %59 : vector<8x128xf32>
    %c0_25 = arith.constant 0 : index
    %c1 = arith.constant 1 : index
    %c0_26 = arith.constant 0 : index
    %c0_27 = arith.constant 0 : index
    %61 = vector.load %arg15[%c0_25, %c1, %c0_26, %c0_27] : memref<1x12x8x128xf32, #tpu.memory_space<vmem>>, vector<1x1x8x128xf32>
    %62 = vector.shape_cast %61 : vector<1x1x8x128xf32> to vector<8x128xf32>
    %63 = vector.shape_cast %60 : vector<8x128xf32> to vector<1x1x8x128xf32>
    tpu.vector_store %arg15[%c0_25, %c1, %c0_26, %c0_27], %63 {strides = array<i32>} : memref<1x12x8x128xf32, #tpu.memory_space<vmem>>, vector<1x1x8x128xf32>,
    %cst_28 = arith.constant 0.000000e+00 : f32
    %64 = vector.broadcast %cst_28 : f32 to vector<8x128xf32>
    %c0_29 = arith.constant 0 : index
    %c0_30 = arith.constant 0 : index
    %65 = vector.load %arg3[%c0_29, %c0_30] : memref<128x128xf32, #tpu.memory_space<vmem>>, vector<128x128xf32>
    %c0_31 = arith.constant 0 : index
    %c0_32 = arith.constant 0 : index
    %66 = vector.load %arg14[%c0_31, %c0_32] : memref<128x128xf32, #tpu.memory_space<vmem>>, vector<128x128xf32>
    %67 = math.log %65 : vector<128x128xf32>
    %cst_33 = arith.constant -1.000000e+02 : f32
    %68 = vector.broadcast %cst_33 : f32 to vector<128x128xf32>
    %69 = arith.maximumf %67, %68 : vector<128x128xf32>
    %cst_34 = arith.constant 1.000000e+00 : f32
    %70 = vector.broadcast %cst_34 : f32 to vector<128x128xf32>
    %71 = arith.subf %70, %65 : vector<128x128xf32>
    %72 = math.log %71 : vector<128x128xf32>
    %cst_35 = arith.constant -1.000000e+02 : f32
    %73 = vector.broadcast %cst_35 : f32 to vector<128x128xf32>
    %74 = arith.maximumf %72, %73 : vector<128x128xf32>
    %75 = arith.mulf %66, %69 : vector<128x128xf32>
    %cst_36 = arith.constant 1.000000e+00 : f32
    %76 = vector.broadcast %cst_36 : f32 to vector<128x128xf32>
    %77 = arith.subf %76, %66 : vector<128x128xf32>
    %78 = arith.mulf %77, %74 : vector<128x128xf32>
    %79 = arith.addf %75, %78 : vector<128x128xf32>
    %cst_37 = arith.constant 0.000000e+00 : f32
    %80 = vector.broadcast %cst_37 : f32 to vector<128x128xf32>
    %81 = arith.subf %80, %79 : vector<128x128xf32>
    %82 = tpu.iota {dimensions = array<i32: 0>} : vector<128x128xi32>
    %83 = tpu.iota {dimensions = array<i32: 1>} : vector<128x128xi32>
    %c128_i32_38 = arith.constant 128 : i32
    %84 = arith.muli %arg0, %c128_i32_38 : i32
    %c0_i32_39 = arith.constant 0 : i32
    %85 = arith.addi %84, %c0_i32_39 : i32
    %86 = vector.broadcast %85 : i32 to vector<128x128xi32>
    %87 = arith.addi %86, %82 : vector<128x128xi32>
    %c128_i32_40 = arith.constant 128 : i32
    %88 = vector.broadcast %c128_i32_40 : i32 to vector<128x128xi32>
    %89 = arith.muli %87, %88 : vector<128x128xi32>
    %90 = arith.addi %89, %83 : vector<128x128xi32>
    %c512_i32_41 = arith.constant 512 : i32
    %91 = vector.broadcast %c512_i32_41 : i32 to vector<128x128xi32>
    %92 = arith.cmpi slt, %90, %91 : vector<128x128xi32>
    %cst_42 = arith.constant 0.000000e+00 : f32
    %93 = vector.broadcast %cst_42 : f32 to vector<128x128xf32>
    %94 = arith.select %92, %81, %93 : vector<128x128xi1>, vector<128x128xf32>
    %95 = vector.shape_cast %94 : vector<128x128xf32> to vector<16x8x128xf32>
    %cst_43 = arith.constant dense<0.000000e+00> : vector<8x128xf32>
    %96 = vector.multi_reduction <add>, %95, %cst_43 [0] : vector<16x8x128xf32> to vector<8x128xf32>
    %97 = arith.addf %64, %96 : vector<8x128xf32>
    %c0_44 = arith.constant 0 : index
    %c2 = arith.constant 2 : index
    %c0_45 = arith.constant 0 : index
    %c0_46 = arith.constant 0 : index
    %98 = vector.load %arg15[%c0_44, %c2, %c0_45, %c0_46] : memref<1x12x8x128xf32, #tpu.memory_space<vmem>>, vector<1x1x8x128xf32>
    %99 = vector.shape_cast %98 : vector<1x1x8x128xf32> to vector<8x128xf32>
    %100 = vector.shape_cast %97 : vector<8x128xf32> to vector<1x1x8x128xf32>
    tpu.vector_store %arg15[%c0_44, %c2, %c0_45, %c0_46], %100 {strides = array<i32>} : memref<1x12x8x128xf32, #tpu.memory_space<vmem>>, vector<1x1x8x128xf32>,
    %cst_47 = arith.constant 0.000000e+00 : f32
    %101 = vector.broadcast %cst_47 : f32 to vector<8x128xf32>
    %c0_48 = arith.constant 0 : index
    %c0_49 = arith.constant 0 : index
    %102 = vector.load %arg4[%c0_48, %c0_49] : memref<128x128xf32, #tpu.memory_space<vmem>>, vector<128x128xf32>
    %c0_50 = arith.constant 0 : index
    %c0_51 = arith.constant 0 : index
    %103 = vector.load %arg13[%c0_50, %c0_51] : memref<128x128xf32, #tpu.memory_space<vmem>>, vector<128x128xf32>
    %cst_52 = arith.constant 0.000000e+00 : f32
    %104 = vector.broadcast %cst_52 : f32 to vector<128x128xf32>
    %105 = arith.maximumf %102, %104 : vector<128x128xf32>
    %106 = arith.mulf %102, %103 : vector<128x128xf32>
    %107 = arith.subf %105, %106 : vector<128x128xf32>
    %108 = math.absf %102 : vector<128x128xf32>
    %cst_53 = arith.constant 0.000000e+00 : f32
    %109 = vector.broadcast %cst_53 : f32 to vector<128x128xf32>
    %110 = arith.subf %109, %108 : vector<128x128xf32>
    %111 = math.exp %110 : vector<128x128xf32>
    %112 = math.log1p %111 : vector<128x128xf32>
    %113 = arith.addf %107, %112 : vector<128x128xf32>
    %114 = tpu.iota {dimensions = array<i32: 0>} : vector<128x128xi32>
    %115 = tpu.iota {dimensions = array<i32: 1>} : vector<128x128xi32>
    %c128_i32_54 = arith.constant 128 : i32
    %116 = arith.muli %arg0, %c128_i32_54 : i32
    %c0_i32_55 = arith.constant 0 : i32
    %117 = arith.addi %116, %c0_i32_55 : i32
    %118 = vector.broadcast %117 : i32 to vector<128x128xi32>
    %119 = arith.addi %118, %114 : vector<128x128xi32>
    %c128_i32_56 = arith.constant 128 : i32
    %120 = vector.broadcast %c128_i32_56 : i32 to vector<128x128xi32>
    %121 = arith.muli %119, %120 : vector<128x128xi32>
    %122 = arith.addi %121, %115 : vector<128x128xi32>
    %c512_i32_57 = arith.constant 512 : i32
    %123 = vector.broadcast %c512_i32_57 : i32 to vector<128x128xi32>
    %124 = arith.cmpi slt, %122, %123 : vector<128x128xi32>
    %cst_58 = arith.constant 0.000000e+00 : f32
    %125 = vector.broadcast %cst_58 : f32 to vector<128x128xf32>
    %126 = arith.select %124, %113, %125 : vector<128x128xi1>, vector<128x128xf32>
    %127 = vector.shape_cast %126 : vector<128x128xf32> to vector<16x8x128xf32>
    %cst_59 = arith.constant dense<0.000000e+00> : vector<8x128xf32>
    %128 = vector.multi_reduction <add>, %127, %cst_59 [0] : vector<16x8x128xf32> to vector<8x128xf32>
    %129 = arith.addf %101, %128 : vector<8x128xf32>
    %c0_60 = arith.constant 0 : index
    %c3 = arith.constant 3 : index
    %c0_61 = arith.constant 0 : index
    %c0_62 = arith.constant 0 : index
    %130 = vector.load %arg15[%c0_60, %c3, %c0_61, %c0_62] : memref<1x12x8x128xf32, #tpu.memory_space<vmem>>, vector<1x1x8x128xf32>
    %131 = vector.shape_cast %130 : vector<1x1x8x128xf32> to vector<8x128xf32>
    %132 = vector.shape_cast %129 : vector<8x128xf32> to vector<1x1x8x128xf32>
    tpu.vector_store %arg15[%c0_60, %c3, %c0_61, %c0_62], %132 {strides = array<i32>} : memref<1x12x8x128xf32, #tpu.memory_space<vmem>>, vector<1x1x8x128xf32>,
    %cst_63 = arith.constant 0.000000e+00 : f32
    %133 = vector.broadcast %cst_63 : f32 to vector<8x128xf32>
    %c0_64 = arith.constant 0 : index
    %c0_65 = arith.constant 0 : index
    %134 = vector.load %arg5[%c0_64, %c0_65] : memref<128x128xf32, #tpu.memory_space<vmem>>, vector<128x128xf32>
    %c0_66 = arith.constant 0 : index
    %c0_67 = arith.constant 0 : index
    %135 = vector.load %arg13[%c0_66, %c0_67] : memref<128x128xf32, #tpu.memory_space<vmem>>, vector<128x128xf32>
    %cst_68 = arith.constant 0.000000e+00 : f32
    %136 = vector.broadcast %cst_68 : f32 to vector<128x128xf32>
    %137 = arith.maximumf %134, %136 : vector<128x128xf32>
    %138 = arith.mulf %134, %135 : vector<128x128xf32>
    %139 = arith.subf %137, %138 : vector<128x128xf32>
    %140 = math.absf %134 : vector<128x128xf32>
    %cst_69 = arith.constant 0.000000e+00 : f32
    %141 = vector.broadcast %cst_69 : f32 to vector<128x128xf32>
    %142 = arith.subf %141, %140 : vector<128x128xf32>
    %143 = math.exp %142 : vector<128x128xf32>
    %144 = math.log1p %143 : vector<128x128xf32>
    %145 = arith.addf %139, %144 : vector<128x128xf32>
    %146 = tpu.iota {dimensions = array<i32: 0>} : vector<128x128xi32>
    %147 = tpu.iota {dimensions = array<i32: 1>} : vector<128x128xi32>
    %c128_i32_70 = arith.constant 128 : i32
    %148 = arith.muli %arg0, %c128_i32_70 : i32
    %c0_i32_71 = arith.constant 0 : i32
    %149 = arith.addi %148, %c0_i32_71 : i32
    %150 = vector.broadcast %149 : i32 to vector<128x128xi32>
    %151 = arith.addi %150, %146 : vector<128x128xi32>
    %c128_i32_72 = arith.constant 128 : i32
    %152 = vector.broadcast %c128_i32_72 : i32 to vector<128x128xi32>
    %153 = arith.muli %151, %152 : vector<128x128xi32>
    %154 = arith.addi %153, %147 : vector<128x128xi32>
    %c512_i32_73 = arith.constant 512 : i32
    %155 = vector.broadcast %c512_i32_73 : i32 to vector<128x128xi32>
    %156 = arith.cmpi slt, %154, %155 : vector<128x128xi32>
    %cst_74 = arith.constant 0.000000e+00 : f32
    %157 = vector.broadcast %cst_74 : f32 to vector<128x128xf32>
    %158 = arith.select %156, %145, %157 : vector<128x128xi1>, vector<128x128xf32>
    %159 = vector.shape_cast %158 : vector<128x128xf32> to vector<16x8x128xf32>
    %cst_75 = arith.constant dense<0.000000e+00> : vector<8x128xf32>
    %160 = vector.multi_reduction <add>, %159, %cst_75 [0] : vector<16x8x128xf32> to vector<8x128xf32>
    %161 = arith.addf %133, %160 : vector<8x128xf32>
    %c0_76 = arith.constant 0 : index
    %c4 = arith.constant 4 : index
    %c0_77 = arith.constant 0 : index
    %c0_78 = arith.constant 0 : index
    %162 = vector.load %arg15[%c0_76, %c4, %c0_77, %c0_78] : memref<1x12x8x128xf32, #tpu.memory_space<vmem>>, vector<1x1x8x128xf32>
    %163 = vector.shape_cast %162 : vector<1x1x8x128xf32> to vector<8x128xf32>
    %164 = vector.shape_cast %161 : vector<8x128xf32> to vector<1x1x8x128xf32>
    tpu.vector_store %arg15[%c0_76, %c4, %c0_77, %c0_78], %164 {strides = array<i32>} : memref<1x12x8x128xf32, #tpu.memory_space<vmem>>, vector<1x1x8x128xf32>,
    %cst_79 = arith.constant 0.000000e+00 : f32
    %165 = vector.broadcast %cst_79 : f32 to vector<8x128xf32>
    %c0_80 = arith.constant 0 : index
    %c0_81 = arith.constant 0 : index
    %166 = vector.load %arg6[%c0_80, %c0_81] : memref<128x128xf32, #tpu.memory_space<vmem>>, vector<128x128xf32>
    %c0_82 = arith.constant 0 : index
    %c0_83 = arith.constant 0 : index
    %167 = vector.load %arg14[%c0_82, %c0_83] : memref<128x128xf32, #tpu.memory_space<vmem>>, vector<128x128xf32>
    %168 = math.log %166 : vector<128x128xf32>
    %cst_84 = arith.constant -1.000000e+02 : f32
    %169 = vector.broadcast %cst_84 : f32 to vector<128x128xf32>
    %170 = arith.maximumf %168, %169 : vector<128x128xf32>
    %cst_85 = arith.constant 1.000000e+00 : f32
    %171 = vector.broadcast %cst_85 : f32 to vector<128x128xf32>
    %172 = arith.subf %171, %166 : vector<128x128xf32>
    %173 = math.log %172 : vector<128x128xf32>
    %cst_86 = arith.constant -1.000000e+02 : f32
    %174 = vector.broadcast %cst_86 : f32 to vector<128x128xf32>
    %175 = arith.maximumf %173, %174 : vector<128x128xf32>
    %176 = arith.mulf %167, %170 : vector<128x128xf32>
    %cst_87 = arith.constant 1.000000e+00 : f32
    %177 = vector.broadcast %cst_87 : f32 to vector<128x128xf32>
    %178 = arith.subf %177, %167 : vector<128x128xf32>
    %179 = arith.mulf %178, %175 : vector<128x128xf32>
    %180 = arith.addf %176, %179 : vector<128x128xf32>
    %cst_88 = arith.constant 0.000000e+00 : f32
    %181 = vector.broadcast %cst_88 : f32 to vector<128x128xf32>
    %182 = arith.subf %181, %180 : vector<128x128xf32>
    %183 = tpu.iota {dimensions = array<i32: 0>} : vector<128x128xi32>
    %184 = tpu.iota {dimensions = array<i32: 1>} : vector<128x128xi32>
    %c128_i32_89 = arith.constant 128 : i32
    %185 = arith.muli %arg0, %c128_i32_89 : i32
    %c0_i32_90 = arith.constant 0 : i32
    %186 = arith.addi %185, %c0_i32_90 : i32
    %187 = vector.broadcast %186 : i32 to vector<128x128xi32>
    %188 = arith.addi %187, %183 : vector<128x128xi32>
    %c128_i32_91 = arith.constant 128 : i32
    %189 = vector.broadcast %c128_i32_91 : i32 to vector<128x128xi32>
    %190 = arith.muli %188, %189 : vector<128x128xi32>
    %191 = arith.addi %190, %184 : vector<128x128xi32>
    %c512_i32_92 = arith.constant 512 : i32
    %192 = vector.broadcast %c512_i32_92 : i32 to vector<128x128xi32>
    %193 = arith.cmpi slt, %191, %192 : vector<128x128xi32>
    %cst_93 = arith.constant 0.000000e+00 : f32
    %194 = vector.broadcast %cst_93 : f32 to vector<128x128xf32>
    %195 = arith.select %193, %182, %194 : vector<128x128xi1>, vector<128x128xf32>
    %196 = vector.shape_cast %195 : vector<128x128xf32> to vector<16x8x128xf32>
    %cst_94 = arith.constant dense<0.000000e+00> : vector<8x128xf32>
    %197 = vector.multi_reduction <add>, %196, %cst_94 [0] : vector<16x8x128xf32> to vector<8x128xf32>
    %198 = arith.addf %165, %197 : vector<8x128xf32>
    %c0_95 = arith.constant 0 : index
    %c5 = arith.constant 5 : index
    %c0_96 = arith.constant 0 : index
    %c0_97 = arith.constant 0 : index
    %199 = vector.load %arg15[%c0_95, %c5, %c0_96, %c0_97] : memref<1x12x8x128xf32, #tpu.memory_space<vmem>>, vector<1x1x8x128xf32>
    %200 = vector.shape_cast %199 : vector<1x1x8x128xf32> to vector<8x128xf32>
    %201 = vector.shape_cast %198 : vector<8x128xf32> to vector<1x1x8x128xf32>
    tpu.vector_store %arg15[%c0_95, %c5, %c0_96, %c0_97], %201 {strides = array<i32>} : memref<1x12x8x128xf32, #tpu.memory_space<vmem>>, vector<1x1x8x128xf32>,
    %cst_98 = arith.constant 0.000000e+00 : f32
    %202 = vector.broadcast %cst_98 : f32 to vector<8x128xf32>
    %c0_99 = arith.constant 0 : index
    %c0_100 = arith.constant 0 : index
    %203 = vector.load %arg7[%c0_99, %c0_100] : memref<128x128xf32, #tpu.memory_space<vmem>>, vector<128x128xf32>
    %c0_101 = arith.constant 0 : index
    %c0_102 = arith.constant 0 : index
    %204 = vector.load %arg13[%c0_101, %c0_102] : memref<128x128xf32, #tpu.memory_space<vmem>>, vector<128x128xf32>
    %cst_103 = arith.constant 0.000000e+00 : f32
    %205 = vector.broadcast %cst_103 : f32 to vector<128x128xf32>
    %206 = arith.maximumf %203, %205 : vector<128x128xf32>
    %207 = arith.mulf %203, %204 : vector<128x128xf32>
    %208 = arith.subf %206, %207 : vector<128x128xf32>
    %209 = math.absf %203 : vector<128x128xf32>
    %cst_104 = arith.constant 0.000000e+00 : f32
    %210 = vector.broadcast %cst_104 : f32 to vector<128x128xf32>
    %211 = arith.subf %210, %209 : vector<128x128xf32>
    %212 = math.exp %211 : vector<128x128xf32>
    %213 = math.log1p %212 : vector<128x128xf32>
    %214 = arith.addf %208, %213 : vector<128x128xf32>
    %215 = tpu.iota {dimensions = array<i32: 0>} : vector<128x128xi32>
    %216 = tpu.iota {dimensions = array<i32: 1>} : vector<128x128xi32>
    %c128_i32_105 = arith.constant 128 : i32
    %217 = arith.muli %arg0, %c128_i32_105 : i32
    %c0_i32_106 = arith.constant 0 : i32
    %218 = arith.addi %217, %c0_i32_106 : i32
    %219 = vector.broadcast %218 : i32 to vector<128x128xi32>
    %220 = arith.addi %219, %215 : vector<128x128xi32>
    %c128_i32_107 = arith.constant 128 : i32
    %221 = vector.broadcast %c128_i32_107 : i32 to vector<128x128xi32>
    %222 = arith.muli %220, %221 : vector<128x128xi32>
    %223 = arith.addi %222, %216 : vector<128x128xi32>
    %c512_i32_108 = arith.constant 512 : i32
    %224 = vector.broadcast %c512_i32_108 : i32 to vector<128x128xi32>
    %225 = arith.cmpi slt, %223, %224 : vector<128x128xi32>
    %cst_109 = arith.constant 0.000000e+00 : f32
    %226 = vector.broadcast %cst_109 : f32 to vector<128x128xf32>
    %227 = arith.select %225, %214, %226 : vector<128x128xi1>, vector<128x128xf32>
    %228 = vector.shape_cast %227 : vector<128x128xf32> to vector<16x8x128xf32>
    %cst_110 = arith.constant dense<0.000000e+00> : vector<8x128xf32>
    %229 = vector.multi_reduction <add>, %228, %cst_110 [0] : vector<16x8x128xf32> to vector<8x128xf32>
    %230 = arith.addf %202, %229 : vector<8x128xf32>
    %c0_111 = arith.constant 0 : index
    %c6 = arith.constant 6 : index
    %c0_112 = arith.constant 0 : index
    %c0_113 = arith.constant 0 : index
    %231 = vector.load %arg15[%c0_111, %c6, %c0_112, %c0_113] : memref<1x12x8x128xf32, #tpu.memory_space<vmem>>, vector<1x1x8x128xf32>
    %232 = vector.shape_cast %231 : vector<1x1x8x128xf32> to vector<8x128xf32>
    %233 = vector.shape_cast %230 : vector<8x128xf32> to vector<1x1x8x128xf32>
    tpu.vector_store %arg15[%c0_111, %c6, %c0_112, %c0_113], %233 {strides = array<i32>} : memref<1x12x8x128xf32, #tpu.memory_space<vmem>>, vector<1x1x8x128xf32>,
    %cst_114 = arith.constant 0.000000e+00 : f32
    %234 = vector.broadcast %cst_114 : f32 to vector<8x128xf32>
    %c0_115 = arith.constant 0 : index
    %c0_116 = arith.constant 0 : index
    %235 = vector.load %arg8[%c0_115, %c0_116] : memref<128x128xf32, #tpu.memory_space<vmem>>, vector<128x128xf32>
    %c0_117 = arith.constant 0 : index
    %c0_118 = arith.constant 0 : index
    %236 = vector.load %arg13[%c0_117, %c0_118] : memref<128x128xf32, #tpu.memory_space<vmem>>, vector<128x128xf32>
    %cst_119 = arith.constant 0.000000e+00 : f32
    %237 = vector.broadcast %cst_119 : f32 to vector<128x128xf32>
    %238 = arith.maximumf %235, %237 : vector<128x128xf32>
    %239 = arith.mulf %235, %236 : vector<128x128xf32>
    %240 = arith.subf %238, %239 : vector<128x128xf32>
    %241 = math.absf %235 : vector<128x128xf32>
    %cst_120 = arith.constant 0.000000e+00 : f32
    %242 = vector.broadcast %cst_120 : f32 to vector<128x128xf32>
    %243 = arith.subf %242, %241 : vector<128x128xf32>
    %244 = math.exp %243 : vector<128x128xf32>
    %245 = math.log1p %244 : vector<128x128xf32>
    %246 = arith.addf %240, %245 : vector<128x128xf32>
    %247 = tpu.iota {dimensions = array<i32: 0>} : vector<128x128xi32>
    %248 = tpu.iota {dimensions = array<i32: 1>} : vector<128x128xi32>
    %c128_i32_121 = arith.constant 128 : i32
    %249 = arith.muli %arg0, %c128_i32_121 : i32
    %c0_i32_122 = arith.constant 0 : i32
    %250 = arith.addi %249, %c0_i32_122 : i32
    %251 = vector.broadcast %250 : i32 to vector<128x128xi32>
    %252 = arith.addi %251, %247 : vector<128x128xi32>
    %c128_i32_123 = arith.constant 128 : i32
    %253 = vector.broadcast %c128_i32_123 : i32 to vector<128x128xi32>
    %254 = arith.muli %252, %253 : vector<128x128xi32>
    %255 = arith.addi %254, %248 : vector<128x128xi32>
    %c512_i32_124 = arith.constant 512 : i32
    %256 = vector.broadcast %c512_i32_124 : i32 to vector<128x128xi32>
    %257 = arith.cmpi slt, %255, %256 : vector<128x128xi32>
    %cst_125 = arith.constant 0.000000e+00 : f32
    %258 = vector.broadcast %cst_125 : f32 to vector<128x128xf32>
    %259 = arith.select %257, %246, %258 : vector<128x128xi1>, vector<128x128xf32>
    %260 = vector.shape_cast %259 : vector<128x128xf32> to vector<16x8x128xf32>
    %cst_126 = arith.constant dense<0.000000e+00> : vector<8x128xf32>
    %261 = vector.multi_reduction <add>, %260, %cst_126 [0] : vector<16x8x128xf32> to vector<8x128xf32>
    %262 = arith.addf %234, %261 : vector<8x128xf32>
    %c0_127 = arith.constant 0 : index
    %c7 = arith.constant 7 : index
    %c0_128 = arith.constant 0 : index
    %c0_129 = arith.constant 0 : index
    %263 = vector.load %arg15[%c0_127, %c7, %c0_128, %c0_129] : memref<1x12x8x128xf32, #tpu.memory_space<vmem>>, vector<1x1x8x128xf32>
    %264 = vector.shape_cast %263 : vector<1x1x8x128xf32> to vector<8x128xf32>
    %265 = vector.shape_cast %262 : vector<8x128xf32> to vector<1x1x8x128xf32>
    tpu.vector_store %arg15[%c0_127, %c7, %c0_128, %c0_129], %265 {strides = array<i32>} : memref<1x12x8x128xf32, #tpu.memory_space<vmem>>, vector<1x1x8x128xf32>,
    %cst_130 = arith.constant 0.000000e+00 : f32
    %266 = vector.broadcast %cst_130 : f32 to vector<8x128xf32>
    %c0_131 = arith.constant 0 : index
    %c0_132 = arith.constant 0 : index
    %267 = vector.load %arg9[%c0_131, %c0_132] : memref<128x128xf32, #tpu.memory_space<vmem>>, vector<128x128xf32>
    %c0_133 = arith.constant 0 : index
    %c0_134 = arith.constant 0 : index
    %268 = vector.load %arg14[%c0_133, %c0_134] : memref<128x128xf32, #tpu.memory_space<vmem>>, vector<128x128xf32>
    %269 = math.log %267 : vector<128x128xf32>
    %cst_135 = arith.constant -1.000000e+02 : f32
    %270 = vector.broadcast %cst_135 : f32 to vector<128x128xf32>
    %271 = arith.maximumf %269, %270 : vector<128x128xf32>
    %cst_136 = arith.constant 1.000000e+00 : f32
    %272 = vector.broadcast %cst_136 : f32 to vector<128x128xf32>
    %273 = arith.subf %272, %267 : vector<128x128xf32>
    %274 = math.log %273 : vector<128x128xf32>
    %cst_137 = arith.constant -1.000000e+02 : f32
    %275 = vector.broadcast %cst_137 : f32 to vector<128x128xf32>
    %276 = arith.maximumf %274, %275 : vector<128x128xf32>
    %277 = arith.mulf %268, %271 : vector<128x128xf32>
    %cst_138 = arith.constant 1.000000e+00 : f32
    %278 = vector.broadcast %cst_138 : f32 to vector<128x128xf32>
    %279 = arith.subf %278, %268 : vector<128x128xf32>
    %280 = arith.mulf %279, %276 : vector<128x128xf32>
    %281 = arith.addf %277, %280 : vector<128x128xf32>
    %cst_139 = arith.constant 0.000000e+00 : f32
    %282 = vector.broadcast %cst_139 : f32 to vector<128x128xf32>
    %283 = arith.subf %282, %281 : vector<128x128xf32>
    %284 = tpu.iota {dimensions = array<i32: 0>} : vector<128x128xi32>
    %285 = tpu.iota {dimensions = array<i32: 1>} : vector<128x128xi32>
    %c128_i32_140 = arith.constant 128 : i32
    %286 = arith.muli %arg0, %c128_i32_140 : i32
    %c0_i32_141 = arith.constant 0 : i32
    %287 = arith.addi %286, %c0_i32_141 : i32
    %288 = vector.broadcast %287 : i32 to vector<128x128xi32>
    %289 = arith.addi %288, %284 : vector<128x128xi32>
    %c128_i32_142 = arith.constant 128 : i32
    %290 = vector.broadcast %c128_i32_142 : i32 to vector<128x128xi32>
    %291 = arith.muli %289, %290 : vector<128x128xi32>
    %292 = arith.addi %291, %285 : vector<128x128xi32>
    %c512_i32_143 = arith.constant 512 : i32
    %293 = vector.broadcast %c512_i32_143 : i32 to vector<128x128xi32>
    %294 = arith.cmpi slt, %292, %293 : vector<128x128xi32>
    %cst_144 = arith.constant 0.000000e+00 : f32
    %295 = vector.broadcast %cst_144 : f32 to vector<128x128xf32>
    %296 = arith.select %294, %283, %295 : vector<128x128xi1>, vector<128x128xf32>
    %297 = vector.shape_cast %296 : vector<128x128xf32> to vector<16x8x128xf32>
    %cst_145 = arith.constant dense<0.000000e+00> : vector<8x128xf32>
    %298 = vector.multi_reduction <add>, %297, %cst_145 [0] : vector<16x8x128xf32> to vector<8x128xf32>
    %299 = arith.addf %266, %298 : vector<8x128xf32>
    %c0_146 = arith.constant 0 : index
    %c8 = arith.constant 8 : index
    %c0_147 = arith.constant 0 : index
    %c0_148 = arith.constant 0 : index
    %300 = vector.load %arg15[%c0_146, %c8, %c0_147, %c0_148] : memref<1x12x8x128xf32, #tpu.memory_space<vmem>>, vector<1x1x8x128xf32>
    %301 = vector.shape_cast %300 : vector<1x1x8x128xf32> to vector<8x128xf32>
    %302 = vector.shape_cast %299 : vector<8x128xf32> to vector<1x1x8x128xf32>
    tpu.vector_store %arg15[%c0_146, %c8, %c0_147, %c0_148], %302 {strides = array<i32>} : memref<1x12x8x128xf32, #tpu.memory_space<vmem>>, vector<1x1x8x128xf32>,
    %cst_149 = arith.constant 0.000000e+00 : f32
    %303 = vector.broadcast %cst_149 : f32 to vector<8x128xf32>
    %c0_150 = arith.constant 0 : index
    %c0_151 = arith.constant 0 : index
    %304 = vector.load %arg10[%c0_150, %c0_151] : memref<128x128xf32, #tpu.memory_space<vmem>>, vector<128x128xf32>
    %c0_152 = arith.constant 0 : index
    %c0_153 = arith.constant 0 : index
    %305 = vector.load %arg13[%c0_152, %c0_153] : memref<128x128xf32, #tpu.memory_space<vmem>>, vector<128x128xf32>
    %cst_154 = arith.constant 0.000000e+00 : f32
    %306 = vector.broadcast %cst_154 : f32 to vector<128x128xf32>
    %307 = arith.maximumf %304, %306 : vector<128x128xf32>
    %308 = arith.mulf %304, %305 : vector<128x128xf32>
    %309 = arith.subf %307, %308 : vector<128x128xf32>
    %310 = math.absf %304 : vector<128x128xf32>
    %cst_155 = arith.constant 0.000000e+00 : f32
    %311 = vector.broadcast %cst_155 : f32 to vector<128x128xf32>
    %312 = arith.subf %311, %310 : vector<128x128xf32>
    %313 = math.exp %312 : vector<128x128xf32>
    %314 = math.log1p %313 : vector<128x128xf32>
    %315 = arith.addf %309, %314 : vector<128x128xf32>
    %316 = tpu.iota {dimensions = array<i32: 0>} : vector<128x128xi32>
    %317 = tpu.iota {dimensions = array<i32: 1>} : vector<128x128xi32>
    %c128_i32_156 = arith.constant 128 : i32
    %318 = arith.muli %arg0, %c128_i32_156 : i32
    %c0_i32_157 = arith.constant 0 : i32
    %319 = arith.addi %318, %c0_i32_157 : i32
    %320 = vector.broadcast %319 : i32 to vector<128x128xi32>
    %321 = arith.addi %320, %316 : vector<128x128xi32>
    %c128_i32_158 = arith.constant 128 : i32
    %322 = vector.broadcast %c128_i32_158 : i32 to vector<128x128xi32>
    %323 = arith.muli %321, %322 : vector<128x128xi32>
    %324 = arith.addi %323, %317 : vector<128x128xi32>
    %c512_i32_159 = arith.constant 512 : i32
    %325 = vector.broadcast %c512_i32_159 : i32 to vector<128x128xi32>
    %326 = arith.cmpi slt, %324, %325 : vector<128x128xi32>
    %cst_160 = arith.constant 0.000000e+00 : f32
    %327 = vector.broadcast %cst_160 : f32 to vector<128x128xf32>
    %328 = arith.select %326, %315, %327 : vector<128x128xi1>, vector<128x128xf32>
    %329 = vector.shape_cast %328 : vector<128x128xf32> to vector<16x8x128xf32>
    %cst_161 = arith.constant dense<0.000000e+00> : vector<8x128xf32>
    %330 = vector.multi_reduction <add>, %329, %cst_161 [0] : vector<16x8x128xf32> to vector<8x128xf32>
    %331 = arith.addf %303, %330 : vector<8x128xf32>
    %c0_162 = arith.constant 0 : index
    %c9 = arith.constant 9 : index
    %c0_163 = arith.constant 0 : index
    %c0_164 = arith.constant 0 : index
    %332 = vector.load %arg15[%c0_162, %c9, %c0_163, %c0_164] : memref<1x12x8x128xf32, #tpu.memory_space<vmem>>, vector<1x1x8x128xf32>
    %333 = vector.shape_cast %332 : vector<1x1x8x128xf32> to vector<8x128xf32>
    %334 = vector.shape_cast %331 : vector<8x128xf32> to vector<1x1x8x128xf32>
    tpu.vector_store %arg15[%c0_162, %c9, %c0_163, %c0_164], %334 {strides = array<i32>} : memref<1x12x8x128xf32, #tpu.memory_space<vmem>>, vector<1x1x8x128xf32>,
    %cst_165 = arith.constant 0.000000e+00 : f32
    %335 = vector.broadcast %cst_165 : f32 to vector<8x128xf32>
    %c0_166 = arith.constant 0 : index
    %c0_167 = arith.constant 0 : index
    %336 = vector.load %arg11[%c0_166, %c0_167] : memref<128x128xf32, #tpu.memory_space<vmem>>, vector<128x128xf32>
    %c0_168 = arith.constant 0 : index
    %c0_169 = arith.constant 0 : index
    %337 = vector.load %arg13[%c0_168, %c0_169] : memref<128x128xf32, #tpu.memory_space<vmem>>, vector<128x128xf32>
    %cst_170 = arith.constant 0.000000e+00 : f32
    %338 = vector.broadcast %cst_170 : f32 to vector<128x128xf32>
    %339 = arith.maximumf %336, %338 : vector<128x128xf32>
    %340 = arith.mulf %336, %337 : vector<128x128xf32>
    %341 = arith.subf %339, %340 : vector<128x128xf32>
    %342 = math.absf %336 : vector<128x128xf32>
    %cst_171 = arith.constant 0.000000e+00 : f32
    %343 = vector.broadcast %cst_171 : f32 to vector<128x128xf32>
    %344 = arith.subf %343, %342 : vector<128x128xf32>
    %345 = math.exp %344 : vector<128x128xf32>
    %346 = math.log1p %345 : vector<128x128xf32>
    %347 = arith.addf %341, %346 : vector<128x128xf32>
    %348 = tpu.iota {dimensions = array<i32: 0>} : vector<128x128xi32>
    %349 = tpu.iota {dimensions = array<i32: 1>} : vector<128x128xi32>
    %c128_i32_172 = arith.constant 128 : i32
    %350 = arith.muli %arg0, %c128_i32_172 : i32
    %c0_i32_173 = arith.constant 0 : i32
    %351 = arith.addi %350, %c0_i32_173 : i32
    %352 = vector.broadcast %351 : i32 to vector<128x128xi32>
    %353 = arith.addi %352, %348 : vector<128x128xi32>
    %c128_i32_174 = arith.constant 128 : i32
    %354 = vector.broadcast %c128_i32_174 : i32 to vector<128x128xi32>
    %355 = arith.muli %353, %354 : vector<128x128xi32>
    %356 = arith.addi %355, %349 : vector<128x128xi32>
    %c512_i32_175 = arith.constant 512 : i32
    %357 = vector.broadcast %c512_i32_175 : i32 to vector<128x128xi32>
    %358 = arith.cmpi slt, %356, %357 : vector<128x128xi32>
    %cst_176 = arith.constant 0.000000e+00 : f32
    %359 = vector.broadcast %cst_176 : f32 to vector<128x128xf32>
    %360 = arith.select %358, %347, %359 : vector<128x128xi1>, vector<128x128xf32>
    %361 = vector.shape_cast %360 : vector<128x128xf32> to vector<16x8x128xf32>
    %cst_177 = arith.constant dense<0.000000e+00> : vector<8x128xf32>
    %362 = vector.multi_reduction <add>, %361, %cst_177 [0] : vector<16x8x128xf32> to vector<8x128xf32>
    %363 = arith.addf %335, %362 : vector<8x128xf32>
    %c0_178 = arith.constant 0 : index
    %c10 = arith.constant 10 : index
    %c0_179 = arith.constant 0 : index
    %c0_180 = arith.constant 0 : index
    %364 = vector.load %arg15[%c0_178, %c10, %c0_179, %c0_180] : memref<1x12x8x128xf32, #tpu.memory_space<vmem>>, vector<1x1x8x128xf32>
    %365 = vector.shape_cast %364 : vector<1x1x8x128xf32> to vector<8x128xf32>
    %366 = vector.shape_cast %363 : vector<8x128xf32> to vector<1x1x8x128xf32>
    tpu.vector_store %arg15[%c0_178, %c10, %c0_179, %c0_180], %366 {strides = array<i32>} : memref<1x12x8x128xf32, #tpu.memory_space<vmem>>, vector<1x1x8x128xf32>,
    %cst_181 = arith.constant 0.000000e+00 : f32
    %367 = vector.broadcast %cst_181 : f32 to vector<8x128xf32>
    %c0_182 = arith.constant 0 : index
    %c0_183 = arith.constant 0 : index
    %368 = vector.load %arg12[%c0_182, %c0_183] : memref<128x128xf32, #tpu.memory_space<vmem>>, vector<128x128xf32>
    %c0_184 = arith.constant 0 : index
    %c0_185 = arith.constant 0 : index
    %369 = vector.load %arg14[%c0_184, %c0_185] : memref<128x128xf32, #tpu.memory_space<vmem>>, vector<128x128xf32>
    %370 = math.log %368 : vector<128x128xf32>
    %cst_186 = arith.constant -1.000000e+02 : f32
    %371 = vector.broadcast %cst_186 : f32 to vector<128x128xf32>
    %372 = arith.maximumf %370, %371 : vector<128x128xf32>
    %cst_187 = arith.constant 1.000000e+00 : f32
    %373 = vector.broadcast %cst_187 : f32 to vector<128x128xf32>
    %374 = arith.subf %373, %368 : vector<128x128xf32>
    %375 = math.log %374 : vector<128x128xf32>
    %cst_188 = arith.constant -1.000000e+02 : f32
    %376 = vector.broadcast %cst_188 : f32 to vector<128x128xf32>
    %377 = arith.maximumf %375, %376 : vector<128x128xf32>
    %378 = arith.mulf %369, %372 : vector<128x128xf32>
    %cst_189 = arith.constant 1.000000e+00 : f32
    %379 = vector.broadcast %cst_189 : f32 to vector<128x128xf32>
    %380 = arith.subf %379, %369 : vector<128x128xf32>
    %381 = arith.mulf %380, %377 : vector<128x128xf32>
    %382 = arith.addf %378, %381 : vector<128x128xf32>
    %cst_190 = arith.constant 0.000000e+00 : f32
    %383 = vector.broadcast %cst_190 : f32 to vector<128x128xf32>
    %384 = arith.subf %383, %382 : vector<128x128xf32>
    %385 = tpu.iota {dimensions = array<i32: 0>} : vector<128x128xi32>
    %386 = tpu.iota {dimensions = array<i32: 1>} : vector<128x128xi32>
    %c128_i32_191 = arith.constant 128 : i32
    %387 = arith.muli %arg0, %c128_i32_191 : i32
    %c0_i32_192 = arith.constant 0 : i32
    %388 = arith.addi %387, %c0_i32_192 : i32
    %389 = vector.broadcast %388 : i32 to vector<128x128xi32>
    %390 = arith.addi %389, %385 : vector<128x128xi32>
    %c128_i32_193 = arith.constant 128 : i32
    %391 = vector.broadcast %c128_i32_193 : i32 to vector<128x128xi32>
    %392 = arith.muli %390, %391 : vector<128x128xi32>
    %393 = arith.addi %392, %386 : vector<128x128xi32>
    %c512_i32_194 = arith.constant 512 : i32
    %394 = vector.broadcast %c512_i32_194 : i32 to vector<128x128xi32>
    %395 = arith.cmpi slt, %393, %394 : vector<128x128xi32>
    %cst_195 = arith.constant 0.000000e+00 : f32
    %396 = vector.broadcast %cst_195 : f32 to vector<128x128xf32>
    %397 = arith.select %395, %384, %396 : vector<128x128xi1>, vector<128x128xf32>
    %398 = vector.shape_cast %397 : vector<128x128xf32> to vector<16x8x128xf32>
    %cst_196 = arith.constant dense<0.000000e+00> : vector<8x128xf32>
    %399 = vector.multi_reduction <add>, %398, %cst_196 [0] : vector<16x8x128xf32> to vector<8x128xf32>
    %400 = arith.addf %367, %399 : vector<8x128xf32>
    %c0_197 = arith.constant 0 : index
    %c11 = arith.constant 11 : index
    %c0_198 = arith.constant 0 : index
    %c0_199 = arith.constant 0 : index
    %401 = vector.load %arg15[%c0_197, %c11, %c0_198, %c0_199] : memref<1x12x8x128xf32, #tpu.memory_space<vmem>>, vector<1x1x8x128xf32>
    %402 = vector.shape_cast %401 : vector<1x1x8x128xf32> to vector<8x128xf32>
    %403 = vector.shape_cast %400 : vector<8x128xf32> to vector<1x1x8x128xf32>
    tpu.vector_store %arg15[%c0_197, %c11, %c0_198, %c0_199], %403 {strides = array<i32>} : memref<1x12x8x128xf32, #tpu.memory_space<vmem>>, vector<1x1x8x128xf32>,
    return
  }
  func.func @transform_0(%arg0: i32) -> (i32, i32) {
    %c0_i32 = arith.constant 0 : i32
    %c0_i32_0 = arith.constant 0 : i32
    return %arg0, %c0_i32 : i32, i32
  }
  func.func @transform_1(%arg0: i32) -> (i32, i32) {
    %c0_i32 = arith.constant 0 : i32
    %c0_i32_0 = arith.constant 0 : i32
    return %arg0, %c0_i32 : i32, i32
  }
  func.func @transform_2(%arg0: i32) -> (i32, i32) {
    %c0_i32 = arith.constant 0 : i32
    %c0_i32_0 = arith.constant 0 : i32
    return %arg0, %c0_i32 : i32, i32
  }
  func.func @transform_3(%arg0: i32) -> (i32, i32) {
    %c0_i32 = arith.constant 0 : i32
    %c0_i32_0 = arith.constant 0 : i32
    return %arg0, %c0_i32 : i32, i32
  }
  func.func @transform_4(%arg0: i32) -> (i32, i32) {
    %c0_i32 = arith.constant 0 : i32
    %c0_i32_0 = arith.constant 0 : i32
    return %arg0, %c0_i32 : i32, i32
  }
  func.func @transform_5(%arg0: i32) -> (i32, i32) {
    %c0_i32 = arith.constant 0 : i32
    %c0_i32_0 = arith.constant 0 : i32
    return %arg0, %c0_i32 : i32, i32
  }
  func.func @transform_6(%arg0: i32) -> (i32, i32) {
    %c0_i32 = arith.constant 0 : i32
    %c0_i32_0 = arith.constant 0 : i32
    return %arg0, %c0_i32 : i32, i32
  }
  func.func @transform_7(%arg0: i32) -> (i32, i32) {
    %c0_i32 = arith.constant 0 : i32
    %c0_i32_0 = arith.constant 0 : i32
    return %arg0, %c0_i32 : i32, i32
  }
  func.func @transform_8(%arg0: i32) -> (i32, i32) {
    %c0_i32 = arith.constant 0 : i32
    %c0_i32_0 = arith.constant 0 : i32
    return %arg0, %c0_i32 : i32, i32
  }
  func.func @transform_9(%arg0: i32) -> (i32, i32) {
    %c0_i32 = arith.constant 0 : i32
    %c0_i32_0 = arith.constant 0 : i32
    return %arg0, %c0_i32 : i32, i32
  }
  func.func @transform_10(%arg0: i32) -> (i32, i32) {
    %c0_i32 = arith.constant 0 : i32
    %c0_i32_0 = arith.constant 0 : i32
    return %arg0, %c0_i32 : i32, i32
  }
  func.func @transform_11(%arg0: i32) -> (i32, i32) {
    %c0_i32 = arith.constant 0 : i32
    %c0_i32_0 = arith.constant 0 : i32
    return %arg0, %c0_i32 : i32, i32
  }
  func.func @transform_12(%arg0: i32) -> (i32, i32) {
    %c0_i32 = arith.constant 0 : i32
    %c0_i32_0 = arith.constant 0 : i32
    return %arg0, %c0_i32 : i32, i32
  }
  func.func @transform_13(%arg0: i32) -> (i32, i32) {
    %c0_i32 = arith.constant 0 : i32
    %c0_i32_0 = arith.constant 0 : i32
    return %arg0, %c0_i32 : i32, i32
  }
  func.func @transform_14(%arg0: i32) -> (i32, i32, i32, i32) {
    %c0_i32 = arith.constant 0 : i32
    %c0_i32_0 = arith.constant 0 : i32
    %c0_i32_1 = arith.constant 0 : i32
    %c0_i32_2 = arith.constant 0 : i32
    return %arg0, %c0_i32, %c0_i32_0, %c0_i32_1 : i32, i32, i32, i32
  }
}

</mosaic_0001>

<llo_original>
// kernel: cel_forward.1
$region0: #{cel_forward.1}
  #allocation0 [shape = 'u32[]', space=smem, size = 0x4, offset = 0x4, fixed_abs, tag = 'smem constant byte address 0x4 - core index']
  #allocation1 [shape = 'u32[144,128]{1,0:T(1,128)}', space=vmem, size = 0x12000, scoped, tag = 'internal scratch']
  %s0 = inlined_call_operand.vmem [shape: f32[128,128], index: 0, kind: input, shape index: {}]
  %s1 = inlined_call_operand.vmem [shape: f32[128,128], index: 1, kind: input, shape index: {}]
  %s2 = inlined_call_operand.vmem [shape: f32[128,128], index: 2, kind: input, shape index: {}]
  %s3 = inlined_call_operand.vmem [shape: f32[128,128], index: 3, kind: input, shape index: {}]
  %s4 = inlined_call_operand.vmem [shape: f32[128,128], index: 4, kind: input, shape index: {}]
  %s5 = inlined_call_operand.vmem [shape: f32[128,128], index: 5, kind: input, shape index: {}]
  %s6 = inlined_call_operand.vmem [shape: f32[128,128], index: 6, kind: input, shape index: {}]
  %s7 = inlined_call_operand.vmem [shape: f32[128,128], index: 7, kind: input, shape index: {}]
  %s8 = inlined_call_operand.vmem [shape: f32[128,128], index: 8, kind: input, shape index: {}]
  %s9 = inlined_call_operand.vmem [shape: f32[128,128], index: 9, kind: input, shape index: {}]
  %s10 = inlined_call_operand.vmem [shape: f32[128,128], index: 10, kind: input, shape index: {}]
  %s11 = inlined_call_operand.vmem [shape: f32[128,128], index: 11, kind: input, shape index: {}]
  %s12 = inlined_call_operand.vmem [shape: f32[128,128], index: 12, kind: input, shape index: {}]
  %s13 = inlined_call_operand.vmem [shape: f32[128,128], index: 13, kind: input, shape index: {}]
  %s14 = inlined_call_operand.vmem [shape: f32[1,12,8,128], index: 14, kind: output, shape index: {}]
  %s15 = sld [smem:[#allocation0]]
  $region66: #{cel_forward.1} parent=0
    _
  %s17 = ssub.s32 1, %s15
  %s18 = scalar_select 0, %s17, %s15
  // Predicated region
  $region2: #{cel_forward.1} parent=0 // pred_check
    _
  $region3: #{cel_forward.1} parent=0 // pred_check_branch
    %20 = sbr.rel (0) target = $region5
  $region4: #{cel_forward.1} parent=0 // pred_region
    _
  $region5: #{cel_forward.1} parent=0 // pred_fallthru
    _
  // Predicated region
  $region6: #{cel_forward.1} parent=0 // pred_check
    _
  $region7: #{cel_forward.1} parent=0 // pred_check_branch
    %22 = sbr.rel (0) target = $region9
  $region8: #{cel_forward.1} parent=0 // pred_region
    _
  $region9: #{cel_forward.1} parent=0 // pred_fallthru
    _
  // Predicated region
  $region10: #{cel_forward.1} parent=0 // pred_check
    _
  $region11: #{cel_forward.1} parent=0 // pred_check_branch
    %24 = sbr.rel (0) target = $region13
  $region12: #{cel_forward.1} parent=0 // pred_region
    _
  $region13: #{cel_forward.1} parent=0 // pred_fallthru
    _
  // Predicated region
  $region14: #{cel_forward.1} parent=0 // pred_check
    _
  $region15: #{cel_forward.1} parent=0 // pred_check_branch
    %26 = sbr.rel (0) target = $region17
  $region16: #{cel_forward.1} parent=0 // pred_region
    _
  $region17: #{cel_forward.1} parent=0 // pred_fallthru
    _
  // Predicated region
  $region18: #{cel_forward.1} parent=0 // pred_check
    _
  $region19: #{cel_forward.1} parent=0 // pred_check_branch
    %28 = sbr.rel (0) target = $region21
  $region20: #{cel_forward.1} parent=0 // pred_region
    _
  $region21: #{cel_forward.1} parent=0 // pred_fallthru
    _
  // Predicated region
  $region22: #{cel_forward.1} parent=0 // pred_check
    _
  $region23: #{cel_forward.1} parent=0 // pred_check_branch
    %30 = sbr.rel (0) target = $region25
  $region24: #{cel_forward.1} parent=0 // pred_region
    _
  $region25: #{cel_forward.1} parent=0 // pred_fallthru
    _
  // Predicated region
  $region26: #{cel_forward.1} parent=0 // pred_check
    _
  $region27: #{cel_forward.1} parent=0 // pred_check_branch
    %32 = sbr.rel (0) target = $region29
  $region28: #{cel_forward.1} parent=0 // pred_region
    _
  $region29: #{cel_forward.1} parent=0 // pred_fallthru
    _
  // Predicated region
  $region30: #{cel_forward.1} parent=0 // pred_check
    _
  $region31: #{cel_forward.1} parent=0 // pred_check_branch
    %34 = sbr.rel (0) target = $region33
  $region32: #{cel_forward.1} parent=0 // pred_region
    _
  $region33: #{cel_forward.1} parent=0 // pred_fallthru
    _
  // Predicated region
  $region34: #{cel_forward.1} parent=0 // pred_check
    _
  $region35: #{cel_forward.1} parent=0 // pred_check_branch
    %36 = sbr.rel (0) target = $region37
  $region36: #{cel_forward.1} parent=0 // pred_region
    _
  $region37: #{cel_forward.1} parent=0 // pred_fallthru
    _
  // Predicated region
  $region38: #{cel_forward.1} parent=0 // pred_check
    _
  $region39: #{cel_forward.1} parent=0 // pred_check_branch
    %38 = sbr.rel (0) target = $region41
  $region40: #{cel_forward.1} parent=0 // pred_region
    _
  $region41: #{cel_forward.1} parent=0 // pred_fallthru
    _
  // Predicated region
  $region42: #{cel_forward.1} parent=0 // pred_check
    _
  $region43: #{cel_forward.1} parent=0 // pred_check_branch
    %40 = sbr.rel (0) target = $region45
  $region44: #{cel_forward.1} parent=0 // pred_region
    _
  $region45: #{cel_forward.1} parent=0 // pred_fallthru
    _
  // Predicated region
  $region46: #{cel_forward.1} parent=0 // pred_check
    _
  $region47: #{cel_forward.1} parent=0 // pred_check_branch
    %42 = sbr.rel (0) target = $region49
  $region48: #{cel_forward.1} parent=0 // pred_region
    _
  $region49: #{cel_forward.1} parent=0 // pred_fallthru
    _
  // Predicated region
  $region50: #{cel_forward.1} parent=0 // pred_check
    _
  $region51: #{cel_forward.1} parent=0 // pred_check_branch
    %44 = sbr.rel (0) target = $region53
  $region52: #{cel_forward.1} parent=0 // pred_region
    _
  $region53: #{cel_forward.1} parent=0 // pred_fallthru
    _
  // Predicated region
  $region54: #{cel_forward.1} parent=0 // pred_check
    _
  $region55: #{cel_forward.1} parent=0 // pred_check_branch
    %46 = sbr.rel (0) target = $region57
  $region56: #{cel_forward.1} parent=0 // pred_region
    _
  $region57: #{cel_forward.1} parent=0 // pred_fallthru
    _
  %v47 = vld [vmem:[%s0] sm:$0xff]
  %v48 = vld [vmem:[%s0 + $0x8] sm:$0xff]
  %v49 = vld [vmem:[%s0 + $0x10] sm:$0xff]
  %v50 = vld [vmem:[%s0 + $0x18] sm:$0xff]
  %v51 = vld [vmem:[%s0 + $0x20] sm:$0xff]
  %v52 = vld [vmem:[%s0 + $0x28] sm:$0xff]
  %v53 = vld [vmem:[%s0 + $0x30] sm:$0xff]
  %v54 = vld [vmem:[%s0 + $0x38] sm:$0xff]
  %v55 = vld [vmem:[%s0 + $0x40] sm:$0xff]
  %v56 = vld [vmem:[%s0 + $0x48] sm:$0xff]
  %v57 = vld [vmem:[%s0 + $0x50] sm:$0xff]
  %v58 = vld [vmem:[%s0 + $0x58] sm:$0xff]
  %v59 = vld [vmem:[%s0 + $0x60] sm:$0xff]
  %v60 = vld [vmem:[%s0 + $0x68] sm:$0xff]
  %v61 = vld [vmem:[%s0 + $0x70] sm:$0xff]
  %v62 = vld [vmem:[%s0 + $0x78] sm:$0xff]
  %v63 = vld [vmem:[%s12] sm:$0xff]
  %v64 = vld [vmem:[%s12 + $0x8] sm:$0xff]
  %v65 = vld [vmem:[%s12 + $0x10] sm:$0xff]
  %v66 = vld [vmem:[%s12 + $0x18] sm:$0xff]
  %v67 = vld [vmem:[%s12 + $0x20] sm:$0xff]
  %v68 = vld [vmem:[%s12 + $0x28] sm:$0xff]
  %v69 = vld [vmem:[%s12 + $0x30] sm:$0xff]
  %v70 = vld [vmem:[%s12 + $0x38] sm:$0xff]
  %v71 = vld [vmem:[%s12 + $0x40] sm:$0xff]
  %v72 = vld [vmem:[%s12 + $0x48] sm:$0xff]
  %v73 = vld [vmem:[%s12 + $0x50] sm:$0xff]
  %v74 = vld [vmem:[%s12 + $0x58] sm:$0xff]
  %v75 = vld [vmem:[%s12 + $0x60] sm:$0xff]
  %v76 = vld [vmem:[%s12 + $0x68] sm:$0xff]
  %v77 = vld [vmem:[%s12 + $0x70] sm:$0xff]
  %v78 = vld [vmem:[%s12 + $0x78] sm:$0xff]
  %v79 = vmax.f32 %v47, 0.0
  %v80 = vmax.f32 %v48, 0.0
  %v81 = vmax.f32 %v49, 0.0
  %v82 = vmax.f32 %v50, 0.0
  %v83 = vmax.f32 %v51, 0.0
  %v84 = vmax.f32 %v52, 0.0
  %v85 = vmax.f32 %v53, 0.0
  %v86 = vmax.f32 %v54, 0.0
  %v87 = vmax.f32 %v55, 0.0
  %v88 = vmax.f32 %v56, 0.0
  %v89 = vmax.f32 %v57, 0.0
  %v90 = vmax.f32 %v58, 0.0
  %v91 = vmax.f32 %v59, 0.0
  %v92 = vmax.f32 %v60, 0.0
  %v93 = vmax.f32 %v61, 0.0
  %v94 = vmax.f32 %v62, 0.0
  %v95 = vmul.f32 %v47, %v63
  %v96 = vmul.f32 %v48, %v64
  %v97 = vmul.f32 %v49, %v65
  %v98 = vmul.f32 %v50, %v66
  %v99 = vmul.f32 %v51, %v67
  %v100 = vmul.f32 %v52, %v68
  %v101 = vmul.f32 %v53, %v69
  %v102 = vmul.f32 %v54, %v70
  %v103 = vmul.f32 %v55, %v71
  %v104 = vmul.f32 %v56, %v72
  %v105 = vmul.f32 %v57, %v73
  %v106 = vmul.f32 %v58, %v74
  %v107 = vmul.f32 %v59, %v75
  %v108 = vmul.f32 %v60, %v76
  %v109 = vmul.f32 %v61, %v77
  %v110 = vmul.f32 %v62, %v78
  %v111 = vsub.f32 %v79, %v95
  %v112 = vsub.f32 %v80, %v96
  %v113 = vsub.f32 %v81, %v97
  %v114 = vsub.f32 %v82, %v98
  %v115 = vsub.f32 %v83, %v99
  %v116 = vsub.f32 %v84, %v100
  %v117 = vsub.f32 %v85, %v101
  %v118 = vsub.f32 %v86, %v102
  %v119 = vsub.f32 %v87, %v103
  %v120 = vsub.f32 %v88, %v104
  %v121 = vsub.f32 %v89, %v105
  %v122 = vsub.f32 %v90, %v106
  %v123 = vsub.f32 %v91, %v107
  %v124 = vsub.f32 %v92, %v108
  %v125 = vsub.f32 %v93, %v109
  %v126 = vsub.f32 %v94, %v110
  %v127 = vand.u32 2147483647, %v47
  %v128 = vand.u32 2147483647, %v48
  %v129 = vand.u32 2147483647, %v49
  %v130 = vand.u32 2147483647, %v50
  %v131 = vand.u32 2147483647, %v51
  %v132 = vand.u32 2147483647, %v52
  %v133 = vand.u32 2147483647, %v53
  %v134 = vand.u32 2147483647, %v54
  %v135 = vand.u32 2147483647, %v55
  %v136 = vand.u32 2147483647, %v56
  %v137 = vand.u32 2147483647, %v57
  %v138 = vand.u32 2147483647, %v58
  %v139 = vand.u32 2147483647, %v59
  %v140 = vand.u32 2147483647, %v60
  %v141 = vand.u32 2147483647, %v61
  %v142 = vand.u32 2147483647, %v62
  %v143 = vsub.f32 0.0, %v127
  %v144 = vsub.f32 0.0, %v128
  %v145 = vsub.f32 0.0, %v129
  %v146 = vsub.f32 0.0, %v130
  %v147 = vsub.f32 0.0, %v131
  %v148 = vsub.f32 0.0, %v132
  %v149 = vsub.f32 0.0, %v133
  %v150 = vsub.f32 0.0, %v134
  %v151 = vsub.f32 0.0, %v135
  %v152 = vsub.f32 0.0, %v136
  %v153 = vsub.f32 0.0, %v137
  %v154 = vsub.f32 0.0, %v138
  %v155 = vsub.f32 0.0, %v139
  %v156 = vsub.f32 0.0, %v140
  %v157 = vsub.f32 0.0, %v141
  %v158 = vsub.f32 0.0, %v142
  %v159 = vmul.f32 %v143, 1.442695
  %v160 = vpow.pop %v159
  %v161 = vmul.f32 %v144, 1.442695
  %v162 = vpow.pop %v161
  %v163 = vmul.f32 %v145, 1.442695
  %v164 = vpow.pop %v163
  %v165 = vmul.f32 %v146, 1.442695
  %v166 = vpow.pop %v165
  %v167 = vmul.f32 %v147, 1.442695
  %v168 = vpow.pop %v167
  %v169 = vmul.f32 %v148, 1.442695
  %v170 = vpow.pop %v169
  %v171 = vmul.f32 %v149, 1.442695
  %v172 = vpow.pop %v171
  %v173 = vmul.f32 %v150, 1.442695
  %v174 = vpow.pop %v173
  %v175 = vmul.f32 %v151, 1.442695
  %v176 = vpow.pop %v175
  %v177 = vmul.f32 %v152, 1.442695
  %v178 = vpow.pop %v177
  %v179 = vmul.f32 %v153, 1.442695
  %v180 = vpow.pop %v179
  %v181 = vmul.f32 %v154, 1.442695
  %v182 = vpow.pop %v181
  %v183 = vmul.f32 %v155, 1.442695
  %v184 = vpow.pop %v183
  %v185 = vmul.f32 %v156, 1.442695
  %v186 = vpow.pop %v185
  %v187 = vmul.f32 %v157, 1.442695
  %v188 = vpow.pop %v187
  %v189 = vmul.f32 %v158, 1.442695
  %v190 = vpow.pop %v189
  %v191 = vadd.f32 %v160, 1.0
  %v192 = vlog2.pop %v191
  %v193 = vmul.f32 %v192, 0.6931472
  %v194 = vmul.f32 -0.5, %v160
  %v195 = vadd.f32 %v194, 1.0
  %v196 = vmul.f32 %v195, %v160
  %v197 = vand.u32 2147483647, %v160
  %vm198 = vcmp.lt.f32.partialorder %v197, 0.0004427343
  %v199 = vsel %vm198, %v196, %v193
  %v200 = vadd.f32 %v162, 1.0
  %v201 = vlog2.pop %v200
  %v202 = vmul.f32 %v201, 0.6931472
  %v203 = vmul.f32 -0.5, %v162
  %v204 = vadd.f32 %v203, 1.0
  %v205 = vmul.f32 %v204, %v162
  %v206 = vand.u32 2147483647, %v162
  %vm207 = vcmp.lt.f32.partialorder %v206, 0.0004427343
  %v208 = vsel %vm207, %v205, %v202
  %v209 = vadd.f32 %v164, 1.0
  %v210 = vlog2.pop %v209
  %v211 = vmul.f32 %v210, 0.6931472
  %v212 = vmul.f32 -0.5, %v164
  %v213 = vadd.f32 %v212, 1.0
  %v214 = vmul.f32 %v213, %v164
  %v215 = vand.u32 2147483647, %v164
  %vm216 = vcmp.lt.f32.partialorder %v215, 0.0004427343
  %v217 = vsel %vm216, %v214, %v211
  %v218 = vadd.f32 %v166, 1.0
  %v219 = vlog2.pop %v218
  %v220 = vmul.f32 %v219, 0.6931472
  %v221 = vmul.f32 -0.5, %v166
  %v222 = vadd.f32 %v221, 1.0
  %v223 = vmul.f32 %v222, %v166
  %v224 = vand.u32 2147483647, %v166
  %vm225 = vcmp.lt.f32.partialorder %v224, 0.0004427343
  %v226 = vsel %vm225, %v223, %v220
  %v227 = vadd.f32 %v168, 1.0
  %v228 = vlog2.pop %v227
  %v229 = vmul.f32 %v228, 0.6931472
  %v230 = vmul.f32 -0.5, %v168
  %v231 = vadd.f32 %v230, 1.0
  %v232 = vmul.f32 %v231, %v168
  %v233 = vand.u32 2147483647, %v168
  %vm234 = vcmp.lt.f32.partialorder %v233, 0.0004427343
  %v235 = vsel %vm234, %v232, %v229
  %v236 = vadd.f32 %v170, 1.0
  %v237 = vlog2.pop %v236
  %v238 = vmul.f32 %v237, 0.6931472
  %v239 = vmul.f32 -0.5, %v170
  %v240 = vadd.f32 %v239, 1.0
  %v241 = vmul.f32 %v240, %v170
  %v242 = vand.u32 2147483647, %v170
  %vm243 = vcmp.lt.f32.partialorder %v242, 0.0004427343
  %v244 = vsel %vm243, %v241, %v238
  %v245 = vadd.f32 %v172, 1.0
  %v246 = vlog2.pop %v245
  %v247 = vmul.f32 %v246, 0.6931472
  %v248 = vmul.f32 -0.5, %v172
  %v249 = vadd.f32 %v248, 1.0
  %v250 = vmul.f32 %v249, %v172
  %v251 = vand.u32 2147483647, %v172
  %vm252 = vcmp.lt.f32.partialorder %v251, 0.0004427343
  %v253 = vsel %vm252, %v250, %v247
  %v254 = vadd.f32 %v174, 1.0
  %v255 = vlog2.pop %v254
  %v256 = vmul.f32 %v255, 0.6931472
  %v257 = vmul.f32 -0.5, %v174
  %v258 = vadd.f32 %v257, 1.0
  %v259 = vmul.f32 %v258, %v174
  %v260 = vand.u32 2147483647, %v174
  %vm261 = vcmp.lt.f32.partialorder %v260, 0.0004427343
  %v262 = vsel %vm261, %v259, %v256
  %v263 = vadd.f32 %v176, 1.0
  %v264 = vlog2.pop %v263
  %v265 = vmul.f32 %v264, 0.6931472
  %v266 = vmul.f32 -0.5, %v176
  %v267 = vadd.f32 %v266, 1.0
  %v268 = vmul.f32 %v267, %v176
  %v269 = vand.u32 2147483647, %v176
  %vm270 = vcmp.lt.f32.partialorder %v269, 0.0004427343
  %v271 = vsel %vm270, %v268, %v265
  %v272 = vadd.f32 %v178, 1.0
  %v273 = vlog2.pop %v272
  %v274 = vmul.f32 %v273, 0.6931472
  %v275 = vmul.f32 -0.5, %v178
  %v276 = vadd.f32 %v275, 1.0
  %v277 = vmul.f32 %v276, %v178
  %v278 = vand.u32 2147483647, %v178
  %vm279 = vcmp.lt.f32.partialorder %v278, 0.0004427343
  %v280 = vsel %vm279, %v277, %v274
  %v281 = vadd.f32 %v180, 1.0
  %v282 = vlog2.pop %v281
  %v283 = vmul.f32 %v282, 0.6931472
  %v284 = vmul.f32 -0.5, %v180
  %v285 = vadd.f32 %v284, 1.0
  %v286 = vmul.f32 %v285, %v180
  %v287 = vand.u32 2147483647, %v180
  %vm288 = vcmp.lt.f32.partialorder %v287, 0.0004427343
  %v289 = vsel %vm288, %v286, %v283
  %v290 = vadd.f32 %v182, 1.0
  %v291 = vlog2.pop %v290
  %v292 = vmul.f32 %v291, 0.6931472
  %v293 = vmul.f32 -0.5, %v182
  %v294 = vadd.f32 %v293, 1.0
  %v295 = vmul.f32 %v294, %v182
  %v296 = vand.u32 2147483647, %v182
  %vm297 = vcmp.lt.f32.partialorder %v296, 0.0004427343
  %v298 = vsel %vm297, %v295, %v292
  %v299 = vadd.f32 %v184, 1.0
  %v300 = vlog2.pop %v299
  %v301 = vmul.f32 %v300, 0.6931472
  %v302 = vmul.f32 -0.5, %v184
  %v303 = vadd.f32 %v302, 1.0
  %v304 = vmul.f32 %v303, %v184
  %v305 = vand.u32 2147483647, %v184
  %vm306 = vcmp.lt.f32.partialorder %v305, 0.0004427343
  %v307 = vsel %vm306, %v304, %v301
  %v308 = vadd.f32 %v186, 1.0
  %v309 = vlog2.pop %v308
  %v310 = vmul.f32 %v309, 0.6931472
  %v311 = vmul.f32 -0.5, %v186
  %v312 = vadd.f32 %v311, 1.0
  %v313 = vmul.f32 %v312, %v186
  %v314 = vand.u32 2147483647, %v186
  %vm315 = vcmp.lt.f32.partialorder %v314, 0.0004427343
  %v316 = vsel %vm315, %v313, %v310
  %v317 = vadd.f32 %v188, 1.0
  %v318 = vlog2.pop %v317
  %v319 = vmul.f32 %v318, 0.6931472
  %v320 = vmul.f32 -0.5, %v188
  %v321 = vadd.f32 %v320, 1.0
  %v322 = vmul.f32 %v321, %v188
  %v323 = vand.u32 2147483647, %v188
  %vm324 = vcmp.lt.f32.partialorder %v323, 0.0004427343
  %v325 = vsel %vm324, %v322, %v319
  %v326 = vadd.f32 %v190, 1.0
  %v327 = vlog2.pop %v326
  %v328 = vmul.f32 %v327, 0.6931472
  %v329 = vmul.f32 -0.5, %v190
  %v330 = vadd.f32 %v329, 1.0
  %v331 = vmul.f32 %v330, %v190
  %v332 = vand.u32 2147483647, %v190
  %vm333 = vcmp.lt.f32.partialorder %v332, 0.0004427343
  %v334 = vsel %vm333, %v331, %v328
  %v335 = vadd.f32 %v111, %v199
  %v336 = vadd.f32 %v112, %v208
  %v337 = vadd.f32 %v113, %v217
  %v338 = vadd.f32 %v114, %v226
  %v339 = vadd.f32 %v115, %v235
  %v340 = vadd.f32 %v116, %v244
  %v341 = vadd.f32 %v117, %v253
  %v342 = vadd.f32 %v118, %v262
  %v343 = vadd.f32 %v119, %v271
  %v344 = vadd.f32 %v120, %v280
  %v345 = vadd.f32 %v121, %v289
  %v346 = vadd.f32 %v122, %v298
  %v347 = vadd.f32 %v123, %v307
  %v348 = vadd.f32 %v124, %v316
  %v349 = vadd.f32 %v125, %v325
  %v350 = vadd.f32 %v126, %v334
  %v351 = vlaneseq
  %v352 = vshrl.u32 %v351, 7
  %v353 = vadd.s32 %v352, 8
  %v354 = vadd.s32 %v352, 16
  %v355 = vadd.s32 %v352, 24
  %v356 = vadd.s32 %v352, 32
  %v357 = vadd.s32 %v352, 40
  %v358 = vadd.s32 %v352, 48
  %v359 = vadd.s32 %v352, 56
  %v360 = vadd.s32 %v352, 64
  %v361 = vadd.s32 %v352, 72
  %v362 = vadd.s32 %v352, 80
  %v363 = vadd.s32 %v352, 88
  %v364 = vadd.s32 %v352, 96
  %v365 = vadd.s32 %v352, 104
  %v366 = vadd.s32 %v352, 112
  %v367 = vadd.s32 %v352, 120
  %v368 = vlaneseq
  %v369 = vand.u32 %v368, 127
  %s370 = smul.u32 0, 128
  %v371 = vstv %s370
  %v372 = vadd.s32 %v371, %v352
  %v373 = vadd.s32 %v371, %v353
  %v374 = vadd.s32 %v371, %v354
  %v375 = vadd.s32 %v371, %v355
  %v376 = vadd.s32 %v371, %v356
  %v377 = vadd.s32 %v371, %v357
  %v378 = vadd.s32 %v371, %v358
  %v379 = vadd.s32 %v371, %v359
  %v380 = vadd.s32 %v371, %v360
  %v381 = vadd.s32 %v371, %v361
  %v382 = vadd.s32 %v371, %v362
  %v383 = vadd.s32 %v371, %v363
  %v384 = vadd.s32 %v371, %v364
  %v385 = vadd.s32 %v371, %v365
  %v386 = vadd.s32 %v371, %v366
  %v387 = vadd.s32 %v371, %v367
  %v388 = vmul.u32 %v372, 128
  %v389 = vmul.u32 %v373, 128
  %v390 = vmul.u32 %v374, 128
  %v391 = vmul.u32 %v375, 128
  %v392 = vmul.u32 %v376, 128
  %v393 = vmul.u32 %v377, 128
  %v394 = vmul.u32 %v378, 128
  %v395 = vmul.u32 %v379, 128
  %v396 = vmul.u32 %v380, 128
  %v397 = vmul.u32 %v381, 128
  %v398 = vmul.u32 %v382, 128
  %v399 = vmul.u32 %v383, 128
  %v400 = vmul.u32 %v384, 128
  %v401 = vmul.u32 %v385, 128
  %v402 = vmul.u32 %v386, 128
  %v403 = vmul.u32 %v387, 128
  %v404 = vadd.s32 %v388, %v369
  %v405 = vadd.s32 %v389, %v369
  %v406 = vadd.s32 %v390, %v369
  %v407 = vadd.s32 %v391, %v369
  %v408 = vadd.s32 %v392, %v369
  %v409 = vadd.s32 %v393, %v369
  %v410 = vadd.s32 %v394, %v369
  %v411 = vadd.s32 %v395, %v369
  %v412 = vadd.s32 %v396, %v369
  %v413 = vadd.s32 %v397, %v369
  %v414 = vadd.s32 %v398, %v369
  %v415 = vadd.s32 %v399, %v369
  %v416 = vadd.s32 %v400, %v369
  %v417 = vadd.s32 %v401, %v369
  %v418 = vadd.s32 %v402, %v369
  %v419 = vadd.s32 %v403, %v369
  %vm420 = vcmp.lt.s32.totalorder %v404, 512
  %vm421 = vcmp.lt.s32.totalorder %v405, 512
  %vm422 = vcmp.lt.s32.totalorder %v406, 512
  %vm423 = vcmp.lt.s32.totalorder %v407, 512
  %vm424 = vcmp.lt.s32.totalorder %v408, 512
  %vm425 = vcmp.lt.s32.totalorder %v409, 512
  %vm426 = vcmp.lt.s32.totalorder %v410, 512
  %vm427 = vcmp.lt.s32.totalorder %v411, 512
  %vm428 = vcmp.lt.s32.totalorder %v412, 512
  %vm429 = vcmp.lt.s32.totalorder %v413, 512
  %vm430 = vcmp.lt.s32.totalorder %v414, 512
  %vm431 = vcmp.lt.s32.totalorder %v415, 512
  %vm432 = vcmp.lt.s32.totalorder %v416, 512
  %vm433 = vcmp.lt.s32.totalorder %v417, 512
  %vm434 = vcmp.lt.s32.totalorder %v418, 512
  %vm435 = vcmp.lt.s32.totalorder %v419, 512
  %v436 = vsel %vm420, %v335, 0.0
  %v437 = vsel %vm421, %v336, 0.0
  %v438 = vsel %vm422, %v337, 0.0
  %v439 = vsel %vm423, %v338, 0.0
  %v440 = vsel %vm424, %v339, 0.0
  %v441 = vsel %vm425, %v340, 0.0
  %v442 = vsel %vm426, %v341, 0.0
  %v443 = vsel %vm427, %v342, 0.0
  %v444 = vsel %vm428, %v343, 0.0
  %v445 = vsel %vm429, %v344, 0.0
  %v446 = vsel %vm430, %v345, 0.0
  %v447 = vsel %vm431, %v346, 0.0
  %v448 = vsel %vm432, %v347, 0.0
  %v449 = vsel %vm433, %v348, 0.0
  %v450 = vsel %vm434, %v349, 0.0
  %v451 = vsel %vm435, %v350, 0.0
  %v452 = vadd.f32 %v436, %v437
  %v453 = vadd.f32 %v452, %v438
  %v454 = vadd.f32 %v453, %v439
  %v455 = vadd.f32 %v454, %v440
  %v456 = vadd.f32 %v455, %v441
  %v457 = vadd.f32 %v456, %v442
  %v458 = vadd.f32 %v457, %v443
  %v459 = vadd.f32 %v458, %v444
  %v460 = vadd.f32 %v459, %v445
  %v461 = vadd.f32 %v460, %v446
  %v462 = vadd.f32 %v461, %v447
  %v463 = vadd.f32 %v462, %v448
  %v464 = vadd.f32 %v463, %v449
  %v465 = vadd.f32 %v464, %v450
  %v466 = vadd.f32 %v465, %v451
  %v467 = vadd.f32 %v466, 0.0
  %468 = vst [vmem:[%s14] sm:$0xff] %v467
  %v469 = vld [vmem:[%s1] sm:$0xff]
  %v470 = vld [vmem:[%s1 + $0x8] sm:$0xff]
  %v471 = vld [vmem:[%s1 + $0x10] sm:$0xff]
  %v472 = vld [vmem:[%s1 + $0x18] sm:$0xff]
  %v473 = vld [vmem:[%s1 + $0x20] sm:$0xff]
  %v474 = vld [vmem:[%s1 + $0x28] sm:$0xff]
  %v475 = vld [vmem:[%s1 + $0x30] sm:$0xff]
  %v476 = vld [vmem:[%s1 + $0x38] sm:$0xff]
  %v477 = vld [vmem:[%s1 + $0x40] sm:$0xff]
  %v478 = vld [vmem:[%s1 + $0x48] sm:$0xff]
  %v479 = vld [vmem:[%s1 + $0x50] sm:$0xff]
  %v480 = vld [vmem:[%s1 + $0x58] sm:$0xff]
  %v481 = vld [vmem:[%s1 + $0x60] sm:$0xff]
  %v482 = vld [vmem:[%s1 + $0x68] sm:$0xff]
  %v483 = vld [vmem:[%s1 + $0x70] sm:$0xff]
  %v484 = vld [vmem:[%s1 + $0x78] sm:$0xff]
  %v485 = vld [vmem:[%s12] sm:$0xff]
  %v486 = vld [vmem:[%s12 + $0x8] sm:$0xff]
  %v487 = vld [vmem:[%s12 + $0x10] sm:$0xff]
  %v488 = vld [vmem:[%s12 + $0x18] sm:$0xff]
  %v489 = vld [vmem:[%s12 + $0x20] sm:$0xff]
  %v490 = vld [vmem:[%s12 + $0x28] sm:$0xff]
  %v491 = vld [vmem:[%s12 + $0x30] sm:$0xff]
  %v492 = vld [vmem:[%s12 + $0x38] sm:$0xff]
  %v493 = vld [vmem:[%s12 + $0x40] sm:$0xff]
  %v494 = vld [vmem:[%s12 + $0x48] sm:$0xff]
  %v495 = vld [vmem:[%s12 + $0x50] sm:$0xff]
  %v496 = vld [vmem:[%s12 + $0x58] sm:$0xff]
  %v497 = vld [vmem:[%s12 + $0x60] sm:$0xff]
  %v498 = vld [vmem:[%s12 + $0x68] sm:$0xff]
  %v499 = vld [vmem:[%s12 + $0x70] sm:$0xff]
  %v500 = vld [vmem:[%s12 + $0x78] sm:$0xff]
  %v501 = vmax.f32 %v469, 0.0
  %v502 = vmax.f32 %v470, 0.0
  %v503 = vmax.f32 %v471, 0.0
  %v504 = vmax.f32 %v472, 0.0
  %v505 = vmax.f32 %v473, 0.0
  %v506 = vmax.f32 %v474, 0.0
  %v507 = vmax.f32 %v475, 0.0
  %v508 = vmax.f32 %v476, 0.0
  %v509 = vmax.f32 %v477, 0.0
  %v510 = vmax.f32 %v478, 0.0
  %v511 = vmax.f32 %v479, 0.0
  %v512 = vmax.f32 %v480, 0.0
  %v513 = vmax.f32 %v481, 0.0
  %v514 = vmax.f32 %v482, 0.0
  %v515 = vmax.f32 %v483, 0.0
  %v516 = vmax.f32 %v484, 0.0
  %v517 = vmul.f32 %v469, %v485
  %v518 = vmul.f32 %v470, %v486
  %v519 = vmul.f32 %v471, %v487
  %v520 = vmul.f32 %v472, %v488
  %v521 = vmul.f32 %v473, %v489
  %v522 = vmul.f32 %v474, %v490
  %v523 = vmul.f32 %v475, %v491
  %v524 = vmul.f32 %v476, %v492
  %v525 = vmul.f32 %v477, %v493
  %v526 = vmul.f32 %v478, %v494
  %v527 = vmul.f32 %v479, %v495
  %v528 = vmul.f32 %v480, %v496
  %v529 = vmul.f32 %v481, %v497
  %v530 = vmul.f32 %v482, %v498
  %v531 = vmul.f32 %v483, %v499
  %v532 = vmul.f32 %v484, %v500
  %v533 = vsub.f32 %v501, %v517
  %v534 = vsub.f32 %v502, %v518
  %v535 = vsub.f32 %v503, %v519
  %v536 = vsub.f32 %v504, %v520
  %v537 = vsub.f32 %v505, %v521
  %v538 = vsub.f32 %v506, %v522
  %v539 = vsub.f32 %v507, %v523
  %v540 = vsub.f32 %v508, %v524
  %v541 = vsub.f32 %v509, %v525
  %v542 = vsub.f32 %v510, %v526
  %v543 = vsub.f32 %v511, %v527
  %v544 = vsub.f32 %v512, %v528
  %v545 = vsub.f32 %v513, %v529
  %v546 = vsub.f32 %v514, %v530
  %v547 = vsub.f32 %v515, %v531
  %v548 = vsub.f32 %v516, %v532
  %v549 = vand.u32 2147483647, %v469
  %v550 = vand.u32 2147483647, %v470
  %v551 = vand.u32 2147483647, %v471
  %v552 = vand.u32 2147483647, %v472
  %v553 = vand.u32 2147483647, %v473
  %v554 = vand.u32 2147483647, %v474
  %v555 = vand.u32 2147483647, %v475
  %v556 = vand.u32 2147483647, %v476
  %v557 = vand.u32 2147483647, %v477
  %v558 = vand.u32 2147483647, %v478
  %v559 = vand.u32 2147483647, %v479
  %v560 = vand.u32 2147483647, %v480
  %v561 = vand.u32 2147483647, %v481
  %v562 = vand.u32 2147483647, %v482
  %v563 = vand.u32 2147483647, %v483
  %v564 = vand.u32 2147483647, %v484
  %v565 = vsub.f32 0.0, %v549
  %v566 = vsub.f32 0.0, %v550
  %v567 = vsub.f32 0.0, %v551
  %v568 = vsub.f32 0.0, %v552
  %v569 = vsub.f32 0.0, %v553
  %v570 = vsub.f32 0.0, %v554
  %v571 = vsub.f32 0.0, %v555
  %v572 = vsub.f32 0.0, %v556
  %v573 = vsub.f32 0.0, %v557
  %v574 = vsub.f32 0.0, %v558
  %v575 = vsub.f32 0.0, %v559
  %v576 = vsub.f32 0.0, %v560
  %v577 = vsub.f32 0.0, %v561
  %v578 = vsub.f32 0.0, %v562
  %v579 = vsub.f32 0.0, %v563
  %v580 = vsub.f32 0.0, %v564
  %v581 = vmul.f32 %v565, 1.442695
  %v582 = vpow.pop %v581
  %v583 = vmul.f32 %v566, 1.442695
  %v584 = vpow.pop %v583
  %v585 = vmul.f32 %v567, 1.442695
  %v586 = vpow.pop %v585
  %v587 = vmul.f32 %v568, 1.442695
  %v588 = vpow.pop %v587
  %v589 = vmul.f32 %v569, 1.442695
  %v590 = vpow.pop %v589
  %v591 = vmul.f32 %v570, 1.442695
  %v592 = vpow.pop %v591
  %v593 = vmul.f32 %v571, 1.442695
  %v594 = vpow.pop %v593
  %v595 = vmul.f32 %v572, 1.442695
  %v596 = vpow.pop %v595
  %v597 = vmul.f32 %v573, 1.442695
  %v598 = vpow.pop %v597
  %v599 = vmul.f32 %v574, 1.442695
  %v600 = vpow.pop %v599
  %v601 = vmul.f32 %v575, 1.442695
  %v602 = vpow.pop %v601
  %v603 = vmul.f32 %v576, 1.442695
  %v604 = vpow.pop %v603
  %v605 = vmul.f32 %v577, 1.442695
  %v606 = vpow.pop %v605
  %v607 = vmul.f32 %v578, 1.442695
  %v608 = vpow.pop %v607
  %v609 = vmul.f32 %v579, 1.442695
  %v610 = vpow.pop %v609
  %v611 = vmul.f32 %v580, 1.442695
  %v612 = vpow.pop %v611
  %v613 = vadd.f32 %v582, 1.0
  %v614 = vlog2.pop %v613
  %v615 = vmul.f32 %v614, 0.6931472
  %v616 = vmul.f32 -0.5, %v582
  %v617 = vadd.f32 %v616, 1.0
  %v618 = vmul.f32 %v617, %v582
  %v619 = vand.u32 2147483647, %v582
  %vm620 = vcmp.lt.f32.partialorder %v619, 0.0004427343
  %v621 = vsel %vm620, %v618, %v615
  %v622 = vadd.f32 %v584, 1.0
  %v623 = vlog2.pop %v622
  %v624 = vmul.f32 %v623, 0.6931472
  %v625 = vmul.f32 -0.5, %v584
  %v626 = vadd.f32 %v625, 1.0
  %v627 = vmul.f32 %v626, %v584
  %v628 = vand.u32 2147483647, %v584
  %vm629 = vcmp.lt.f32.partialorder %v628, 0.0004427343
  %v630 = vsel %vm629, %v627, %v624
  %v631 = vadd.f32 %v586, 1.0
  %v632 = vlog2.pop %v631
  %v633 = vmul.f32 %v632, 0.6931472
  %v634 = vmul.f32 -0.5, %v586
  %v635 = vadd.f32 %v634, 1.0
  %v636 = vmul.f32 %v635, %v586
  %v637 = vand.u32 2147483647, %v586
  %vm638 = vcmp.lt.f32.partialorder %v637, 0.0004427343
  %v639 = vsel %vm638, %v636, %v633
  %v640 = vadd.f32 %v588, 1.0
  %v641 = vlog2.pop %v640
  %v642 = vmul.f32 %v641, 0.6931472
  %v643 = vmul.f32 -0.5, %v588
  %v644 = vadd.f32 %v643, 1.0
  %v645 = vmul.f32 %v644, %v588
  %v646 = vand.u32 2147483647, %v588
  %vm647 = vcmp.lt.f32.partialorder %v646, 0.0004427343
  %v648 = vsel %vm647, %v645, %v642
  %v649 = vadd.f32 %v590, 1.0
  %v650 = vlog2.pop %v649
  %v651 = vmul.f32 %v650, 0.6931472
  %v652 = vmul.f32 -0.5, %v590
  %v653 = vadd.f32 %v652, 1.0
  %v654 = vmul.f32 %v653, %v590
  %v655 = vand.u32 2147483647, %v590
  %vm656 = vcmp.lt.f32.partialorder %v655, 0.0004427343
  %v657 = vsel %vm656, %v654, %v651
  %v658 = vadd.f32 %v592, 1.0
  %v659 = vlog2.pop %v658
  %v660 = vmul.f32 %v659, 0.6931472
  %v661 = vmul.f32 -0.5, %v592
  %v662 = vadd.f32 %v661, 1.0
  %v663 = vmul.f32 %v662, %v592
  %v664 = vand.u32 2147483647, %v592
  %vm665 = vcmp.lt.f32.partialorder %v664, 0.0004427343
  %v666 = vsel %vm665, %v663, %v660
  %v667 = vadd.f32 %v594, 1.0
  %v668 = vlog2.pop %v667
  %v669 = vmul.f32 %v668, 0.6931472
  %v670 = vmul.f32 -0.5, %v594
  %v671 = vadd.f32 %v670, 1.0
  %v672 = vmul.f32 %v671, %v594
  %v673 = vand.u32 2147483647, %v594
  %vm674 = vcmp.lt.f32.partialorder %v673, 0.0004427343
  %v675 = vsel %vm674, %v672, %v669
  %v676 = vadd.f32 %v596, 1.0
  %v677 = vlog2.pop %v676
  %v678 = vmul.f32 %v677, 0.6931472
  %v679 = vmul.f32 -0.5, %v596
  %v680 = vadd.f32 %v679, 1.0
  %v681 = vmul.f32 %v680, %v596
  %v682 = vand.u32 2147483647, %v596
  %vm683 = vcmp.lt.f32.partialorder %v682, 0.0004427343
  %v684 = vsel %vm683, %v681, %v678
  %v685 = vadd.f32 %v598, 1.0
  %v686 = vlog2.pop %v685
  %v687 = vmul.f32 %v686, 0.6931472
  %v688 = vmul.f32 -0.5, %v598
  %v689 = vadd.f32 %v688, 1.0
  %v690 = vmul.f32 %v689, %v598
  %v691 = vand.u32 2147483647, %v598
  %vm692 = vcmp.lt.f32.partialorder %v691, 0.0004427343
  %v693 = vsel %vm692, %v690, %v687
  %v694 = vadd.f32 %v600, 1.0
  %v695 = vlog2.pop %v694
  %v696 = vmul.f32 %v695, 0.6931472
  %v697 = vmul.f32 -0.5, %v600
  %v698 = vadd.f32 %v697, 1.0
  %v699 = vmul.f32 %v698, %v600
  %v700 = vand.u32 2147483647, %v600
  %vm701 = vcmp.lt.f32.partialorder %v700, 0.0004427343
  %v702 = vsel %vm701, %v699, %v696
  %v703 = vadd.f32 %v602, 1.0
  %v704 = vlog2.pop %v703
  %v705 = vmul.f32 %v704, 0.6931472
  %v706 = vmul.f32 -0.5, %v602
  %v707 = vadd.f32 %v706, 1.0
  %v708 = vmul.f32 %v707, %v602
  %v709 = vand.u32 2147483647, %v602
  %vm710 = vcmp.lt.f32.partialorder %v709, 0.0004427343
  %v711 = vsel %vm710, %v708, %v705
  %v712 = vadd.f32 %v604, 1.0
  %v713 = vlog2.pop %v712
  %v714 = vmul.f32 %v713, 0.6931472
  %v715 = vmul.f32 -0.5, %v604
  %v716 = vadd.f32 %v715, 1.0
  %v717 = vmul.f32 %v716, %v604
  %v718 = vand.u32 2147483647, %v604
  %vm719 = vcmp.lt.f32.partialorder %v718, 0.0004427343
  %v720 = vsel %vm719, %v717, %v714
  %v721 = vadd.f32 %v606, 1.0
  %v722 = vlog2.pop %v721
  %v723 = vmul.f32 %v722, 0.6931472
  %v724 = vmul.f32 -0.5, %v606
  %v725 = vadd.f32 %v724, 1.0
  %v726 = vmul.f32 %v725, %v606
  %v727 = vand.u32 2147483647, %v606
  %vm728 = vcmp.lt.f32.partialorder %v727, 0.0004427343
  %v729 = vsel %vm728, %v726, %v723
  %v730 = vadd.f32 %v608, 1.0
  %v731 = vlog2.pop %v730
  %v732 = vmul.f32 %v731, 0.6931472
  %v733 = vmul.f32 -0.5, %v608
  %v734 = vadd.f32 %v733, 1.0
  %v735 = vmul.f32 %v734, %v608
  %v736 = vand.u32 2147483647, %v608
  %vm737 = vcmp.lt.f32.partialorder %v736, 0.0004427343
  %v738 = vsel %vm737, %v735, %v732
  %v739 = vadd.f32 %v610, 1.0
  %v740 = vlog2.pop %v739
  %v741 = vmul.f32 %v740, 0.6931472
  %v742 = vmul.f32 -0.5, %v610
  %v743 = vadd.f32 %v742, 1.0
  %v744 = vmul.f32 %v743, %v610
  %v745 = vand.u32 2147483647, %v610
  %vm746 = vcmp.lt.f32.partialorder %v745, 0.0004427343
  %v747 = vsel %vm746, %v744, %v741
  %v748 = vadd.f32 %v612, 1.0
  %v749 = vlog2.pop %v748
  %v750 = vmul.f32 %v749, 0.6931472
  %v751 = vmul.f32 -0.5, %v612
  %v752 = vadd.f32 %v751, 1.0
  %v753 = vmul.f32 %v752, %v612
  %v754 = vand.u32 2147483647, %v612
  %vm755 = vcmp.lt.f32.partialorder %v754, 0.0004427343
  %v756 = vsel %vm755, %v753, %v750
  %v757 = vadd.f32 %v533, %v621
  %v758 = vadd.f32 %v534, %v630
  %v759 = vadd.f32 %v535, %v639
  %v760 = vadd.f32 %v536, %v648
  %v761 = vadd.f32 %v537, %v657
  %v762 = vadd.f32 %v538, %v666
  %v763 = vadd.f32 %v539, %v675
  %v764 = vadd.f32 %v540, %v684
  %v765 = vadd.f32 %v541, %v693
  %v766 = vadd.f32 %v542, %v702
  %v767 = vadd.f32 %v543, %v711
  %v768 = vadd.f32 %v544, %v720
  %v769 = vadd.f32 %v545, %v729
  %v770 = vadd.f32 %v546, %v738
  %v771 = vadd.f32 %v547, %v747
  %v772 = vadd.f32 %v548, %v756
  %v773 = vsel %vm420, %v757, 0.0
  %v774 = vsel %vm421, %v758, 0.0
  %v775 = vsel %vm422, %v759, 0.0
  %v776 = vsel %vm423, %v760, 0.0
  %v777 = vsel %vm424, %v761, 0.0
  %v778 = vsel %vm425, %v762, 0.0
  %v779 = vsel %vm426, %v763, 0.0
  %v780 = vsel %vm427, %v764, 0.0
  %v781 = vsel %vm428, %v765, 0.0
  %v782 = vsel %vm429, %v766, 0.0
  %v783 = vsel %vm430, %v767, 0.0
  %v784 = vsel %vm431, %v768, 0.0
  %v785 = vsel %vm432, %v769, 0.0
  %v786 = vsel %vm433, %v770, 0.0
  %v787 = vsel %vm434, %v771, 0.0
  %v788 = vsel %vm435, %v772, 0.0
  %v789 = vadd.f32 %v773, %v774
  %v790 = vadd.f32 %v789, %v775
  %v791 = vadd.f32 %v790, %v776
  %v792 = vadd.f32 %v791, %v777
  %v793 = vadd.f32 %v792, %v778
  %v794 = vadd.f32 %v793, %v779
  %v795 = vadd.f32 %v794, %v780
  %v796 = vadd.f32 %v795, %v781
  %v797 = vadd.f32 %v796, %v782
  %v798 = vadd.f32 %v797, %v783
  %v799 = vadd.f32 %v798, %v784
  %v800 = vadd.f32 %v799, %v785
  %v801 = vadd.f32 %v800, %v786
  %v802 = vadd.f32 %v801, %v787
  %v803 = vadd.f32 %v802, %v788
  %v804 = vadd.f32 %v803, 0.0
  %s805 = scalar_lea.vmem %s14, 8
  %806 = vst [vmem:[%s805] sm:$0xff] %v804
  %v807 = vld [vmem:[%s2] sm:$0xff]
  %v808 = vld [vmem:[%s2 + $0x8] sm:$0xff]
  %v809 = vld [vmem:[%s2 + $0x10] sm:$0xff]
  %v810 = vld [vmem:[%s2 + $0x18] sm:$0xff]
  %v811 = vld [vmem:[%s2 + $0x20] sm:$0xff]
  %v812 = vld [vmem:[%s2 + $0x28] sm:$0xff]
  %v813 = vld [vmem:[%s2 + $0x30] sm:$0xff]
  %v814 = vld [vmem:[%s2 + $0x38] sm:$0xff]
  %v815 = vld [vmem:[%s2 + $0x40] sm:$0xff]
  %v816 = vld [vmem:[%s2 + $0x48] sm:$0xff]
  %v817 = vld [vmem:[%s2 + $0x50] sm:$0xff]
  %v818 = vld [vmem:[%s2 + $0x58] sm:$0xff]
  %v819 = vld [vmem:[%s2 + $0x60] sm:$0xff]
  %v820 = vld [vmem:[%s2 + $0x68] sm:$0xff]
  %v821 = vld [vmem:[%s2 + $0x70] sm:$0xff]
  %v822 = vld [vmem:[%s2 + $0x78] sm:$0xff]
  %v823 = vld [vmem:[%s13] sm:$0xff]
  %v824 = vld [vmem:[%s13 + $0x8] sm:$0xff]
  %v825 = vld [vmem:[%s13 + $0x10] sm:$0xff]
  %v826 = vld [vmem:[%s13 + $0x18] sm:$0xff]
  %v827 = vld [vmem:[%s13 + $0x20] sm:$0xff]
  %v828 = vld [vmem:[%s13 + $0x28] sm:$0xff]
  %v829 = vld [vmem:[%s13 + $0x30] sm:$0xff]
  %v830 = vld [vmem:[%s13 + $0x38] sm:$0xff]
  %v831 = vld [vmem:[%s13 + $0x40] sm:$0xff]
  %v832 = vld [vmem:[%s13 + $0x48] sm:$0xff]
  %v833 = vld [vmem:[%s13 + $0x50] sm:$0xff]
  %v834 = vld [vmem:[%s13 + $0x58] sm:$0xff]
  %v835 = vld [vmem:[%s13 + $0x60] sm:$0xff]
  %v836 = vld [vmem:[%s13 + $0x68] sm:$0xff]
  %v837 = vld [vmem:[%s13 + $0x70] sm:$0xff]
  %v838 = vld [vmem:[%s13 + $0x78] sm:$0xff]
  %v839 = vlog2.pop %v807
  %v840 = vmul.f32 %v839, 0.6931472
  %v841 = vlog2.pop %v808
  %v842 = vmul.f32 %v841, 0.6931472
  %v843 = vlog2.pop %v809
  %v844 = vmul.f32 %v843, 0.6931472
  %v845 = vlog2.pop %v810
  %v846 = vmul.f32 %v845, 0.6931472
  %v847 = vlog2.pop %v811
  %v848 = vmul.f32 %v847, 0.6931472
  %v849 = vlog2.pop %v812
  %v850 = vmul.f32 %v849, 0.6931472
  %v851 = vlog2.pop %v813
  %v852 = vmul.f32 %v851, 0.6931472
  %v853 = vlog2.pop %v814
  %v854 = vmul.f32 %v853, 0.6931472
  %v855 = vlog2.pop %v815
  %v856 = vmul.f32 %v855, 0.6931472
  %v857 = vlog2.pop %v816
  %v858 = vmul.f32 %v857, 0.6931472
  %v859 = vlog2.pop %v817
  %v860 = vmul.f32 %v859, 0.6931472
  %v861 = vlog2.pop %v818
  %v862 = vmul.f32 %v861, 0.6931472
  %v863 = vlog2.pop %v819
  %v864 = vmul.f32 %v863, 0.6931472
  %v865 = vlog2.pop %v820
  %v866 = vmul.f32 %v865, 0.6931472
  %v867 = vlog2.pop %v821
  %v868 = vmul.f32 %v867, 0.6931472
  %v869 = vlog2.pop %v822
  %v870 = vmul.f32 %v869, 0.6931472
  %v871 = vmax.f32 %v840, -100.0
  %v872 = vmax.f32 %v842, -100.0
  %v873 = vmax.f32 %v844, -100.0
  %v874 = vmax.f32 %v846, -100.0
  %v875 = vmax.f32 %v848, -100.0
  %v876 = vmax.f32 %v850, -100.0
  %v877 = vmax.f32 %v852, -100.0
  %v878 = vmax.f32 %v854, -100.0
  %v879 = vmax.f32 %v856, -100.0
  %v880 = vmax.f32 %v858, -100.0
  %v881 = vmax.f32 %v860, -100.0
  %v882 = vmax.f32 %v862, -100.0
  %v883 = vmax.f32 %v864, -100.0
  %v884 = vmax.f32 %v866, -100.0
  %v885 = vmax.f32 %v868, -100.0
  %v886 = vmax.f32 %v870, -100.0
  %v887 = vsub.f32 1.0, %v807
  %v888 = vsub.f32 1.0, %v808
  %v889 = vsub.f32 1.0, %v809
  %v890 = vsub.f32 1.0, %v810
  %v891 = vsub.f32 1.0, %v811
  %v892 = vsub.f32 1.0, %v812
  %v893 = vsub.f32 1.0, %v813
  %v894 = vsub.f32 1.0, %v814
  %v895 = vsub.f32 1.0, %v815
  %v896 = vsub.f32 1.0, %v816
  %v897 = vsub.f32 1.0, %v817
  %v898 = vsub.f32 1.0, %v818
  %v899 = vsub.f32 1.0, %v819
  %v900 = vsub.f32 1.0, %v820
  %v901 = vsub.f32 1.0, %v821
  %v902 = vsub.f32 1.0, %v822
  %v903 = vlog2.pop %v887
  %v904 = vmul.f32 %v903, 0.6931472
  %v905 = vlog2.pop %v888
  %v906 = vmul.f32 %v905, 0.6931472
  %v907 = vlog2.pop %v889
  %v908 = vmul.f32 %v907, 0.6931472
  %v909 = vlog2.pop %v890
  %v910 = vmul.f32 %v909, 0.6931472
  %v911 = vlog2.pop %v891
  %v912 = vmul.f32 %v911, 0.6931472
  %v913 = vlog2.pop %v892
  %v914 = vmul.f32 %v913, 0.6931472
  %v915 = vlog2.pop %v893
  %v916 = vmul.f32 %v915, 0.6931472
  %v917 = vlog2.pop %v894
  %v918 = vmul.f32 %v917, 0.6931472
  %v919 = vlog2.pop %v895
  %v920 = vmul.f32 %v919, 0.6931472
  %v921 = vlog2.pop %v896
  %v922 = vmul.f32 %v921, 0.6931472
  %v923 = vlog2.pop %v897
  %v924 = vmul.f32 %v923, 0.6931472
  %v925 = vlog2.pop %v898
  %v926 = vmul.f32 %v925, 0.6931472
  %v927 = vlog2.pop %v899
  %v928 = vmul.f32 %v927, 0.6931472
  %v929 = vlog2.pop %v900
  %v930 = vmul.f32 %v929, 0.6931472
  %v931 = vlog2.pop %v901
  %v932 = vmul.f32 %v931, 0.6931472
  %v933 = vlog2.pop %v902
  %v934 = vmul.f32 %v933, 0.6931472
  %v935 = vmax.f32 %v904, -100.0
  %v936 = vmax.f32 %v906, -100.0
  %v937 = vmax.f32 %v908, -100.0
  %v938 = vmax.f32 %v910, -100.0
  %v939 = vmax.f32 %v912, -100.0
  %v940 = vmax.f32 %v914, -100.0
  %v941 = vmax.f32 %v916, -100.0
  %v942 = vmax.f32 %v918, -100.0
  %v943 = vmax.f32 %v920, -100.0
  %v944 = vmax.f32 %v922, -100.0
  %v945 = vmax.f32 %v924, -100.0
  %v946 = vmax.f32 %v926, -100.0
  %v947 = vmax.f32 %v928, -100.0
  %v948 = vmax.f32 %v930, -100.0
  %v949 = vmax.f32 %v932, -100.0
  %v950 = vmax.f32 %v934, -100.0
  %v951 = vmul.f32 %v823, %v871
  %v952 = vmul.f32 %v824, %v872
  %v953 = vmul.f32 %v825, %v873
  %v954 = vmul.f32 %v826, %v874
  %v955 = vmul.f32 %v827, %v875
  %v956 = vmul.f32 %v828, %v876
  %v957 = vmul.f32 %v829, %v877
  %v958 = vmul.f32 %v830, %v878
  %v959 = vmul.f32 %v831, %v879
  %v960 = vmul.f32 %v832, %v880
  %v961 = vmul.f32 %v833, %v881
  %v962 = vmul.f32 %v834, %v882
  %v963 = vmul.f32 %v835, %v883
  %v964 = vmul.f32 %v836, %v884
  %v965 = vmul.f32 %v837, %v885
  %v966 = vmul.f32 %v838, %v886
  %v967 = vsub.f32 1.0, %v823
  %v968 = vsub.f32 1.0, %v824
  %v969 = vsub.f32 1.0, %v825
  %v970 = vsub.f32 1.0, %v826
  %v971 = vsub.f32 1.0, %v827
  %v972 = vsub.f32 1.0, %v828
  %v973 = vsub.f32 1.0, %v829
  %v974 = vsub.f32 1.0, %v830
  %v975 = vsub.f32 1.0, %v831
  %v976 = vsub.f32 1.0, %v832
  %v977 = vsub.f32 1.0, %v833
  %v978 = vsub.f32 1.0, %v834
  %v979 = vsub.f32 1.0, %v835
  %v980 = vsub.f32 1.0, %v836
  %v981 = vsub.f32 1.0, %v837
  %v982 = vsub.f32 1.0, %v838
  %v983 = vmul.f32 %v967, %v935
  %v984 = vmul.f32 %v968, %v936
  %v985 = vmul.f32 %v969, %v937
  %v986 = vmul.f32 %v970, %v938
  %v987 = vmul.f32 %v971, %v939
  %v988 = vmul.f32 %v972, %v940
  %v989 = vmul.f32 %v973, %v941
  %v990 = vmul.f32 %v974, %v942
  %v991 = vmul.f32 %v975, %v943
  %v992 = vmul.f32 %v976, %v944
  %v993 = vmul.f32 %v977, %v945
  %v994 = vmul.f32 %v978, %v946
  %v995 = vmul.f32 %v979, %v947
  %v996 = vmul.f32 %v980, %v948
  %v997 = vmul.f32 %v981, %v949
  %v998 = vmul.f32 %v982, %v950
  %v999 = vadd.f32 %v951, %v983
  %v1000 = vadd.f32 %v952, %v984
  %v1001 = vadd.f32 %v953, %v985
  %v1002 = vadd.f32 %v954, %v986
  %v1003 = vadd.f32 %v955, %v987
  %v1004 = vadd.f32 %v956, %v988
  %v1005 = vadd.f32 %v957, %v989
  %v1006 = vadd.f32 %v958, %v990
  %v1007 = vadd.f32 %v959, %v991
  %v1008 = vadd.f32 %v960, %v992
  %v1009 = vadd.f32 %v961, %v993
  %v1010 = vadd.f32 %v962, %v994
  %v1011 = vadd.f32 %v963, %v995
  %v1012 = vadd.f32 %v964, %v996
  %v1013 = vadd.f32 %v965, %v997
  %v1014 = vadd.f32 %v966, %v998
  %v1015 = vsub.f32 0.0, %v999
  %v1016 = vsub.f32 0.0, %v1000
  %v1017 = vsub.f32 0.0, %v1001
  %v1018 = vsub.f32 0.0, %v1002
  %v1019 = vsub.f32 0.0, %v1003
  %v1020 = vsub.f32 0.0, %v1004
  %v1021 = vsub.f32 0.0, %v1005
  %v1022 = vsub.f32 0.0, %v1006
  %v1023 = vsub.f32 0.0, %v1007
  %v1024 = vsub.f32 0.0, %v1008
  %v1025 = vsub.f32 0.0, %v1009
  %v1026 = vsub.f32 0.0, %v1010
  %v1027 = vsub.f32 0.0, %v1011
  %v1028 = vsub.f32 0.0, %v1012
  %v1029 = vsub.f32 0.0, %v1013
  %v1030 = vsub.f32 0.0, %v1014
  %v1031 = vsel %vm420, %v1015, 0.0
  %v1032 = vsel %vm421, %v1016, 0.0
  %v1033 = vsel %vm422, %v1017, 0.0
  %v1034 = vsel %vm423, %v1018, 0.0
  %v1035 = vsel %vm424, %v1019, 0.0
  %v1036 = vsel %vm425, %v1020, 0.0
  %v1037 = vsel %vm426, %v1021, 0.0
  %v1038 = vsel %vm427, %v1022, 0.0
  %v1039 = vsel %vm428, %v1023, 0.0
  %v1040 = vsel %vm429, %v1024, 0.0
  %v1041 = vsel %vm430, %v1025, 0.0
  %v1042 = vsel %vm431, %v1026, 0.0
  %v1043 = vsel %vm432, %v1027, 0.0
  %v1044 = vsel %vm433, %v1028, 0.0
  %v1045 = vsel %vm434, %v1029, 0.0
  %v1046 = vsel %vm435, %v1030, 0.0
  %v1047 = vadd.f32 %v1031, %v1032
  %v1048 = vadd.f32 %v1047, %v1033
  %v1049 = vadd.f32 %v1048, %v1034
  %v1050 = vadd.f32 %v1049, %v1035
  %v1051 = vadd.f32 %v1050, %v1036
  %v1052 = vadd.f32 %v1051, %v1037
  %v1053 = vadd.f32 %v1052, %v1038
  %v1054 = vadd.f32 %v1053, %v1039
  %v1055 = vadd.f32 %v1054, %v1040
  %v1056 = vadd.f32 %v1055, %v1041
  %v1057 = vadd.f32 %v1056, %v1042
  %v1058 = vadd.f32 %v1057, %v1043
  %v1059 = vadd.f32 %v1058, %v1044
  %v1060 = vadd.f32 %v1059, %v1045
  %v1061 = vadd.f32 %v1060, %v1046
  %v1062 = vadd.f32 %v1061, 0.0
  %s1063 = scalar_lea.vmem %s14, 16
  %1064 = vst [vmem:[%s1063] sm:$0xff] %v1062
  %v1065 = vld [vmem:[%s3] sm:$0xff]
  %v1066 = vld [vmem:[%s3 + $0x8] sm:$0xff]
  %v1067 = vld [vmem:[%s3 + $0x10] sm:$0xff]
  %v1068 = vld [vmem:[%s3 + $0x18] sm:$0xff]
  %v1069 = vld [vmem:[%s3 + $0x20] sm:$0xff]
  %v1070 = vld [vmem:[%s3 + $0x28] sm:$0xff]
  %v1071 = vld [vmem:[%s3 + $0x30] sm:$0xff]
  %v1072 = vld [vmem:[%s3 + $0x38] sm:$0xff]
  %v1073 = vld [vmem:[%s3 + $0x40] sm:$0xff]
  %v1074 = vld [vmem:[%s3 + $0x48] sm:$0xff]
  %v1075 = vld [vmem:[%s3 + $0x50] sm:$0xff]
  %v1076 = vld [vmem:[%s3 + $0x58] sm:$0xff]
  %v1077 = vld [vmem:[%s3 + $0x60] sm:$0xff]
  %v1078 = vld [vmem:[%s3 + $0x68] sm:$0xff]
  %v1079 = vld [vmem:[%s3 + $0x70] sm:$0xff]
  %v1080 = vld [vmem:[%s3 + $0x78] sm:$0xff]
  %v1081 = vld [vmem:[%s12] sm:$0xff]
  %v1082 = vld [vmem:[%s12 + $0x8] sm:$0xff]
  %v1083 = vld [vmem:[%s12 + $0x10] sm:$0xff]
  %v1084 = vld [vmem:[%s12 + $0x18] sm:$0xff]
  %v1085 = vld [vmem:[%s12 + $0x20] sm:$0xff]
  %v1086 = vld [vmem:[%s12 + $0x28] sm:$0xff]
  %v1087 = vld [vmem:[%s12 + $0x30] sm:$0xff]
  %v1088 = vld [vmem:[%s12 + $0x38] sm:$0xff]
  %v1089 = vld [vmem:[%s12 + $0x40] sm:$0xff]
  %v1090 = vld [vmem:[%s12 + $0x48] sm:$0xff]
  %v1091 = vld [vmem:[%s12 + $0x50] sm:$0xff]
  %v1092 = vld [vmem:[%s12 + $0x58] sm:$0xff]
  %v1093 = vld [vmem:[%s12 + $0x60] sm:$0xff]
  %v1094 = vld [vmem:[%s12 + $0x68] sm:$0xff]
  %v1095 = vld [vmem:[%s12 + $0x70] sm:$0xff]
  %v1096 = vld [vmem:[%s12 + $0x78] sm:$0xff]
  %v1097 = vmax.f32 %v1065, 0.0
  %v1098 = vmax.f32 %v1066, 0.0
  %v1099 = vmax.f32 %v1067, 0.0
  %v1100 = vmax.f32 %v1068, 0.0
  %v1101 = vmax.f32 %v1069, 0.0
  %v1102 = vmax.f32 %v1070, 0.0
  %v1103 = vmax.f32 %v1071, 0.0
  %v1104 = vmax.f32 %v1072, 0.0
  %v1105 = vmax.f32 %v1073, 0.0
  %v1106 = vmax.f32 %v1074, 0.0
  %v1107 = vmax.f32 %v1075, 0.0
  %v1108 = vmax.f32 %v1076, 0.0
  %v1109 = vmax.f32 %v1077, 0.0
  %v1110 = vmax.f32 %v1078, 0.0
  %v1111 = vmax.f32 %v1079, 0.0
  %v1112 = vmax.f32 %v1080, 0.0
  %v1113 = vmul.f32 %v1065, %v1081
  %v1114 = vmul.f32 %v1066, %v1082
  %v1115 = vmul.f32 %v1067, %v1083
  %v1116 = vmul.f32 %v1068, %v1084
  %v1117 = vmul.f32 %v1069, %v1085
  %v1118 = vmul.f32 %v1070, %v1086
  %v1119 = vmul.f32 %v1071, %v1087
  %v1120 = vmul.f32 %v1072, %v1088
  %v1121 = vmul.f32 %v1073, %v1089
  %v1122 = vmul.f32 %v1074, %v1090
  %v1123 = vmul.f32 %v1075, %v1091
  %v1124 = vmul.f32 %v1076, %v1092
  %v1125 = vmul.f32 %v1077, %v1093
  %v1126 = vmul.f32 %v1078, %v1094
  %v1127 = vmul.f32 %v1079, %v1095
  %v1128 = vmul.f32 %v1080, %v1096
  %v1129 = vsub.f32 %v1097, %v1113
  %v1130 = vsub.f32 %v1098, %v1114
  %v1131 = vsub.f32 %v1099, %v1115
  %v1132 = vsub.f32 %v1100, %v1116
  %v1133 = vsub.f32 %v1101, %v1117
  %v1134 = vsub.f32 %v1102, %v1118
  %v1135 = vsub.f32 %v1103, %v1119
  %v1136 = vsub.f32 %v1104, %v1120
  %v1137 = vsub.f32 %v1105, %v1121
  %v1138 = vsub.f32 %v1106, %v1122
  %v1139 = vsub.f32 %v1107, %v1123
  %v1140 = vsub.f32 %v1108, %v1124
  %v1141 = vsub.f32 %v1109, %v1125
  %v1142 = vsub.f32 %v1110, %v1126
  %v1143 = vsub.f32 %v1111, %v1127
  %v1144 = vsub.f32 %v1112, %v1128
  %v1145 = vand.u32 2147483647, %v1065
  %v1146 = vand.u32 2147483647, %v1066
  %v1147 = vand.u32 2147483647, %v1067
  %v1148 = vand.u32 2147483647, %v1068
  %v1149 = vand.u32 2147483647, %v1069
  %v1150 = vand.u32 2147483647, %v1070
  %v1151 = vand.u32 2147483647, %v1071
  %v1152 = vand.u32 2147483647, %v1072
  %v1153 = vand.u32 2147483647, %v1073
  %v1154 = vand.u32 2147483647, %v1074
  %v1155 = vand.u32 2147483647, %v1075
  %v1156 = vand.u32 2147483647, %v1076
  %v1157 = vand.u32 2147483647, %v1077
  %v1158 = vand.u32 2147483647, %v1078
  %v1159 = vand.u32 2147483647, %v1079
  %v1160 = vand.u32 2147483647, %v1080
  %v1161 = vsub.f32 0.0, %v1145
  %v1162 = vsub.f32 0.0, %v1146
  %v1163 = vsub.f32 0.0, %v1147
  %v1164 = vsub.f32 0.0, %v1148
  %v1165 = vsub.f32 0.0, %v1149
  %v1166 = vsub.f32 0.0, %v1150
  %v1167 = vsub.f32 0.0, %v1151
  %v1168 = vsub.f32 0.0, %v1152
  %v1169 = vsub.f32 0.0, %v1153
  %v1170 = vsub.f32 0.0, %v1154
  %v1171 = vsub.f32 0.0, %v1155
  %v1172 = vsub.f32 0.0, %v1156
  %v1173 = vsub.f32 0.0, %v1157
  %v1174 = vsub.f32 0.0, %v1158
  %v1175 = vsub.f32 0.0, %v1159
  %v1176 = vsub.f32 0.0, %v1160
  %v1177 = vmul.f32 %v1161, 1.442695
  %v1178 = vpow.pop %v1177
  %v1179 = vmul.f32 %v1162, 1.442695
  %v1180 = vpow.pop %v1179
  %v1181 = vmul.f32 %v1163, 1.442695
  %v1182 = vpow.pop %v1181
  %v1183 = vmul.f32 %v1164, 1.442695
  %v1184 = vpow.pop %v1183
  %v1185 = vmul.f32 %v1165, 1.442695
  %v1186 = vpow.pop %v1185
  %v1187 = vmul.f32 %v1166, 1.442695
  %v1188 = vpow.pop %v1187
  %v1189 = vmul.f32 %v1167, 1.442695
  %v1190 = vpow.pop %v1189
  %v1191 = vmul.f32 %v1168, 1.442695
  %v1192 = vpow.pop %v1191
  %v1193 = vmul.f32 %v1169, 1.442695
  %v1194 = vpow.pop %v1193
  %v1195 = vmul.f32 %v1170, 1.442695
  %v1196 = vpow.pop %v1195
  %v1197 = vmul.f32 %v1171, 1.442695
  %v1198 = vpow.pop %v1197
  %v1199 = vmul.f32 %v1172, 1.442695
  %v1200 = vpow.pop %v1199
  %v1201 = vmul.f32 %v1173, 1.442695
  %v1202 = vpow.pop %v1201
  %v1203 = vmul.f32 %v1174, 1.442695
  %v1204 = vpow.pop %v1203
  %v1205 = vmul.f32 %v1175, 1.442695
  %v1206 = vpow.pop %v1205
  %v1207 = vmul.f32 %v1176, 1.442695
  %v1208 = vpow.pop %v1207
  %v1209 = vadd.f32 %v1178, 1.0
  %v1210 = vlog2.pop %v1209
  %v1211 = vmul.f32 %v1210, 0.6931472
  %v1212 = vmul.f32 -0.5, %v1178
  %v1213 = vadd.f32 %v1212, 1.0
  %v1214 = vmul.f32 %v1213, %v1178
  %v1215 = vand.u32 2147483647, %v1178
  %vm1216 = vcmp.lt.f32.partialorder %v1215, 0.0004427343
  %v1217 = vsel %vm1216, %v1214, %v1211
  %v1218 = vadd.f32 %v1180, 1.0
  %v1219 = vlog2.pop %v1218
  %v1220 = vmul.f32 %v1219, 0.6931472
  %v1221 = vmul.f32 -0.5, %v1180
  %v1222 = vadd.f32 %v1221, 1.0
  %v1223 = vmul.f32 %v1222, %v1180
  %v1224 = vand.u32 2147483647, %v1180
  %vm1225 = vcmp.lt.f32.partialorder %v1224, 0.0004427343
  %v1226 = vsel %vm1225, %v1223, %v1220
  %v1227 = vadd.f32 %v1182, 1.0
  %v1228 = vlog2.pop %v1227
  %v1229 = vmul.f32 %v1228, 0.6931472
  %v1230 = vmul.f32 -0.5, %v1182
  %v1231 = vadd.f32 %v1230, 1.0
  %v1232 = vmul.f32 %v1231, %v1182
  %v1233 = vand.u32 2147483647, %v1182
  %vm1234 = vcmp.lt.f32.partialorder %v1233, 0.0004427343
  %v1235 = vsel %vm1234, %v1232, %v1229
  %v1236 = vadd.f32 %v1184, 1.0
  %v1237 = vlog2.pop %v1236
  %v1238 = vmul.f32 %v1237, 0.6931472
  %v1239 = vmul.f32 -0.5, %v1184
  %v1240 = vadd.f32 %v1239, 1.0
  %v1241 = vmul.f32 %v1240, %v1184
  %v1242 = vand.u32 2147483647, %v1184
  %vm1243 = vcmp.lt.f32.partialorder %v1242, 0.0004427343
  %v1244 = vsel %vm1243, %v1241, %v1238
  %v1245 = vadd.f32 %v1186, 1.0
  %v1246 = vlog2.pop %v1245
  %v1247 = vmul.f32 %v1246, 0.6931472
  %v1248 = vmul.f32 -0.5, %v1186
  %v1249 = vadd.f32 %v1248, 1.0
  %v1250 = vmul.f32 %v1249, %v1186
  %v1251 = vand.u32 2147483647, %v1186
  %vm1252 = vcmp.lt.f32.partialorder %v1251, 0.0004427343
  %v1253 = vsel %vm1252, %v1250, %v1247
  %v1254 = vadd.f32 %v1188, 1.0
  %v1255 = vlog2.pop %v1254
  %v1256 = vmul.f32 %v1255, 0.6931472
  %v1257 = vmul.f32 -0.5, %v1188
  %v1258 = vadd.f32 %v1257, 1.0
  %v1259 = vmul.f32 %v1258, %v1188
  %v1260 = vand.u32 2147483647, %v1188
  %vm1261 = vcmp.lt.f32.partialorder %v1260, 0.0004427343
  %v1262 = vsel %vm1261, %v1259, %v1256
  %v1263 = vadd.f32 %v1190, 1.0
  %v1264 = vlog2.pop %v1263
  %v1265 = vmul.f32 %v1264, 0.6931472
  %v1266 = vmul.f32 -0.5, %v1190
  %v1267 = vadd.f32 %v1266, 1.0
  %v1268 = vmul.f32 %v1267, %v1190
  %v1269 = vand.u32 2147483647, %v1190
  %vm1270 = vcmp.lt.f32.partialorder %v1269, 0.0004427343
  %v1271 = vsel %vm1270, %v1268, %v1265
  %v1272 = vadd.f32 %v1192, 1.0
  %v1273 = vlog2.pop %v1272
  %v1274 = vmul.f32 %v1273, 0.6931472
  %v1275 = vmul.f32 -0.5, %v1192
  %v1276 = vadd.f32 %v1275, 1.0
  %v1277 = vmul.f32 %v1276, %v1192
  %v1278 = vand.u32 2147483647, %v1192
  %vm1279 = vcmp.lt.f32.partialorder %v1278, 0.0004427343
  %v1280 = vsel %vm1279, %v1277, %v1274
  %v1281 = vadd.f32 %v1194, 1.0
  %v1282 = vlog2.pop %v1281
  %v1283 = vmul.f32 %v1282, 0.6931472
  %v1284 = vmul.f32 -0.5, %v1194
  %v1285 = vadd.f32 %v1284, 1.0
  %v1286 = vmul.f32 %v1285, %v1194
  %v1287 = vand.u32 2147483647, %v1194
  %vm1288 = vcmp.lt.f32.partialorder %v1287, 0.0004427343
  %v1289 = vsel %vm1288, %v1286, %v1283
  %v1290 = vadd.f32 %v1196, 1.0
  %v1291 = vlog2.pop %v1290
  %v1292 = vmul.f32 %v1291, 0.6931472
  %v1293 = vmul.f32 -0.5, %v1196
  %v1294 = vadd.f32 %v1293, 1.0
  %v1295 = vmul.f32 %v1294, %v1196
  %v1296 = vand.u32 2147483647, %v1196
  %vm1297 = vcmp.lt.f32.partialorder %v1296, 0.0004427343
  %v1298 = vsel %vm1297, %v1295, %v1292
  %v1299 = vadd.f32 %v1198, 1.0
  %v1300 = vlog2.pop %v1299
  %v1301 = vmul.f32 %v1300, 0.6931472
  %v1302 = vmul.f32 -0.5, %v1198
  %v1303 = vadd.f32 %v1302, 1.0
  %v1304 = vmul.f32 %v1303, %v1198
  %v1305 = vand.u32 2147483647, %v1198
  %vm1306 = vcmp.lt.f32.partialorder %v1305, 0.0004427343
  %v1307 = vsel %vm1306, %v1304, %v1301
  %v1308 = vadd.f32 %v1200, 1.0
  %v1309 = vlog2.pop %v1308
  %v1310 = vmul.f32 %v1309, 0.6931472
  %v1311 = vmul.f32 -0.5, %v1200
  %v1312 = vadd.f32 %v1311, 1.0
  %v1313 = vmul.f32 %v1312, %v1200
  %v1314 = vand.u32 2147483647, %v1200
  %vm1315 = vcmp.lt.f32.partialorder %v1314, 0.0004427343
  %v1316 = vsel %vm1315, %v1313, %v1310
  %v1317 = vadd.f32 %v1202, 1.0
  %v1318 = vlog2.pop %v1317
  %v1319 = vmul.f32 %v1318, 0.6931472
  %v1320 = vmul.f32 -0.5, %v1202
  %v1321 = vadd.f32 %v1320, 1.0
  %v1322 = vmul.f32 %v1321, %v1202
  %v1323 = vand.u32 2147483647, %v1202
  %vm1324 = vcmp.lt.f32.partialorder %v1323, 0.0004427343
  %v1325 = vsel %vm1324, %v1322, %v1319
  %v1326 = vadd.f32 %v1204, 1.0
  %v1327 = vlog2.pop %v1326
  %v1328 = vmul.f32 %v1327, 0.6931472
  %v1329 = vmul.f32 -0.5, %v1204
  %v1330 = vadd.f32 %v1329, 1.0
  %v1331 = vmul.f32 %v1330, %v1204
  %v1332 = vand.u32 2147483647, %v1204
  %vm1333 = vcmp.lt.f32.partialorder %v1332, 0.0004427343
  %v1334 = vsel %vm1333, %v1331, %v1328
  %v1335 = vadd.f32 %v1206, 1.0
  %v1336 = vlog2.pop %v1335
  %v1337 = vmul.f32 %v1336, 0.6931472
  %v1338 = vmul.f32 -0.5, %v1206
  %v1339 = vadd.f32 %v1338, 1.0
  %v1340 = vmul.f32 %v1339, %v1206
  %v1341 = vand.u32 2147483647, %v1206
  %vm1342 = vcmp.lt.f32.partialorder %v1341, 0.0004427343
  %v1343 = vsel %vm1342, %v1340, %v1337
  %v1344 = vadd.f32 %v1208, 1.0
  %v1345 = vlog2.pop %v1344
  %v1346 = vmul.f32 %v1345, 0.6931472
  %v1347 = vmul.f32 -0.5, %v1208
  %v1348 = vadd.f32 %v1347, 1.0
  %v1349 = vmul.f32 %v1348, %v1208
  %v1350 = vand.u32 2147483647, %v1208
  %vm1351 = vcmp.lt.f32.partialorder %v1350, 0.0004427343
  %v1352 = vsel %vm1351, %v1349, %v1346
  %v1353 = vadd.f32 %v1129, %v1217
  %v1354 = vadd.f32 %v1130, %v1226
  %v1355 = vadd.f32 %v1131, %v1235
  %v1356 = vadd.f32 %v1132, %v1244
  %v1357 = vadd.f32 %v1133, %v1253
  %v1358 = vadd.f32 %v1134, %v1262
  %v1359 = vadd.f32 %v1135, %v1271
  %v1360 = vadd.f32 %v1136, %v1280
  %v1361 = vadd.f32 %v1137, %v1289
  %v1362 = vadd.f32 %v1138, %v1298
  %v1363 = vadd.f32 %v1139, %v1307
  %v1364 = vadd.f32 %v1140, %v1316
  %v1365 = vadd.f32 %v1141, %v1325
  %v1366 = vadd.f32 %v1142, %v1334
  %v1367 = vadd.f32 %v1143, %v1343
  %v1368 = vadd.f32 %v1144, %v1352
  %v1369 = vsel %vm420, %v1353, 0.0
  %v1370 = vsel %vm421, %v1354, 0.0
  %v1371 = vsel %vm422, %v1355, 0.0
  %v1372 = vsel %vm423, %v1356, 0.0
  %v1373 = vsel %vm424, %v1357, 0.0
  %v1374 = vsel %vm425, %v1358, 0.0
  %v1375 = vsel %vm426, %v1359, 0.0
  %v1376 = vsel %vm427, %v1360, 0.0
  %v1377 = vsel %vm428, %v1361, 0.0
  %v1378 = vsel %vm429, %v1362, 0.0
  %v1379 = vsel %vm430, %v1363, 0.0
  %v1380 = vsel %vm431, %v1364, 0.0
  %v1381 = vsel %vm432, %v1365, 0.0
  %v1382 = vsel %vm433, %v1366, 0.0
  %v1383 = vsel %vm434, %v1367, 0.0
  %v1384 = vsel %vm435, %v1368, 0.0
  %v1385 = vadd.f32 %v1369, %v1370
  %v1386 = vadd.f32 %v1385, %v1371
  %v1387 = vadd.f32 %v1386, %v1372
  %v1388 = vadd.f32 %v1387, %v1373
  %v1389 = vadd.f32 %v1388, %v1374
  %v1390 = vadd.f32 %v1389, %v1375
  %v1391 = vadd.f32 %v1390, %v1376
  %v1392 = vadd.f32 %v1391, %v1377
  %v1393 = vadd.f32 %v1392, %v1378
  %v1394 = vadd.f32 %v1393, %v1379
  %v1395 = vadd.f32 %v1394, %v1380
  %v1396 = vadd.f32 %v1395, %v1381
  %v1397 = vadd.f32 %v1396, %v1382
  %v1398 = vadd.f32 %v1397, %v1383
  %v1399 = vadd.f32 %v1398, %v1384
  %v1400 = vadd.f32 %v1399, 0.0
  %s1401 = scalar_lea.vmem %s14, 24
  %1402 = vst [vmem:[%s1401] sm:$0xff] %v1400
  %v1403 = vld [vmem:[%s4] sm:$0xff]
  %v1404 = vld [vmem:[%s4 + $0x8] sm:$0xff]
  %v1405 = vld [vmem:[%s4 + $0x10] sm:$0xff]
  %v1406 = vld [vmem:[%s4 + $0x18] sm:$0xff]
  %v1407 = vld [vmem:[%s4 + $0x20] sm:$0xff]
  %v1408 = vld [vmem:[%s4 + $0x28] sm:$0xff]
  %v1409 = vld [vmem:[%s4 + $0x30] sm:$0xff]
  %v1410 = vld [vmem:[%s4 + $0x38] sm:$0xff]
  %v1411 = vld [vmem:[%s4 + $0x40] sm:$0xff]
  %v1412 = vld [vmem:[%s4 + $0x48] sm:$0xff]
  %v1413 = vld [vmem:[%s4 + $0x50] sm:$0xff]
  %v1414 = vld [vmem:[%s4 + $0x58] sm:$0xff]
  %v1415 = vld [vmem:[%s4 + $0x60] sm:$0xff]
  %v1416 = vld [vmem:[%s4 + $0x68] sm:$0xff]
  %v1417 = vld [vmem:[%s4 + $0x70] sm:$0xff]
  %v1418 = vld [vmem:[%s4 + $0x78] sm:$0xff]
  %v1419 = vld [vmem:[%s12] sm:$0xff]
  %v1420 = vld [vmem:[%s12 + $0x8] sm:$0xff]
  %v1421 = vld [vmem:[%s12 + $0x10] sm:$0xff]
  %v1422 = vld [vmem:[%s12 + $0x18] sm:$0xff]
  %v1423 = vld [vmem:[%s12 + $0x20] sm:$0xff]
  %v1424 = vld [vmem:[%s12 + $0x28] sm:$0xff]
  %v1425 = vld [vmem:[%s12 + $0x30] sm:$0xff]
  %v1426 = vld [vmem:[%s12 + $0x38] sm:$0xff]
  %v1427 = vld [vmem:[%s12 + $0x40] sm:$0xff]
  %v1428 = vld [vmem:[%s12 + $0x48] sm:$0xff]
  %v1429 = vld [vmem:[%s12 + $0x50] sm:$0xff]
  %v1430 = vld [vmem:[%s12 + $0x58] sm:$0xff]
  %v1431 = vld [vmem:[%s12 + $0x60] sm:$0xff]
  %v1432 = vld [vmem:[%s12 + $0x68] sm:$0xff]
  %v1433 = vld [vmem:[%s12 + $0x70] sm:$0xff]
  %v1434 = vld [vmem:[%s12 + $0x78] sm:$0xff]
  %v1435 = vmax.f32 %v1403, 0.0
  %v1436 = vmax.f32 %v1404, 0.0
  %v1437 = vmax.f32 %v1405, 0.0
  %v1438 = vmax.f32 %v1406, 0.0
  %v1439 = vmax.f32 %v1407, 0.0
  %v1440 = vmax.f32 %v1408, 0.0
  %v1441 = vmax.f32 %v1409, 0.0
  %v1442 = vmax.f32 %v1410, 0.0
  %v1443 = vmax.f32 %v1411, 0.0
  %v1444 = vmax.f32 %v1412, 0.0
  %v1445 = vmax.f32 %v1413, 0.0
  %v1446 = vmax.f32 %v1414, 0.0
  %v1447 = vmax.f32 %v1415, 0.0
  %v1448 = vmax.f32 %v1416, 0.0
  %v1449 = vmax.f32 %v1417, 0.0
  %v1450 = vmax.f32 %v1418, 0.0
  %v1451 = vmul.f32 %v1403, %v1419
  %v1452 = vmul.f32 %v1404, %v1420
  %v1453 = vmul.f32 %v1405, %v1421
  %v1454 = vmul.f32 %v1406, %v1422
  %v1455 = vmul.f32 %v1407, %v1423
  %v1456 = vmul.f32 %v1408, %v1424
  %v1457 = vmul.f32 %v1409, %v1425
  %v1458 = vmul.f32 %v1410, %v1426
  %v1459 = vmul.f32 %v1411, %v1427
  %v1460 = vmul.f32 %v1412, %v1428
  %v1461 = vmul.f32 %v1413, %v1429
  %v1462 = vmul.f32 %v1414, %v1430
  %v1463 = vmul.f32 %v1415, %v1431
  %v1464 = vmul.f32 %v1416, %v1432
  %v1465 = vmul.f32 %v1417, %v1433
  %v1466 = vmul.f32 %v1418, %v1434
  %v1467 = vsub.f32 %v1435, %v1451
  %v1468 = vsub.f32 %v1436, %v1452
  %v1469 = vsub.f32 %v1437, %v1453
  %v1470 = vsub.f32 %v1438, %v1454
  %v1471 = vsub.f32 %v1439, %v1455
  %v1472 = vsub.f32 %v1440, %v1456
  %v1473 = vsub.f32 %v1441, %v1457
  %v1474 = vsub.f32 %v1442, %v1458
  %v1475 = vsub.f32 %v1443, %v1459
  %v1476 = vsub.f32 %v1444, %v1460
  %v1477 = vsub.f32 %v1445, %v1461
  %v1478 = vsub.f32 %v1446, %v1462
  %v1479 = vsub.f32 %v1447, %v1463
  %v1480 = vsub.f32 %v1448, %v1464
  %v1481 = vsub.f32 %v1449, %v1465
  %v1482 = vsub.f32 %v1450, %v1466
  %v1483 = vand.u32 2147483647, %v1403
  %v1484 = vand.u32 2147483647, %v1404
  %v1485 = vand.u32 2147483647, %v1405
  %v1486 = vand.u32 2147483647, %v1406
  %v1487 = vand.u32 2147483647, %v1407
  %v1488 = vand.u32 2147483647, %v1408
  %v1489 = vand.u32 2147483647, %v1409
  %v1490 = vand.u32 2147483647, %v1410
  %v1491 = vand.u32 2147483647, %v1411
  %v1492 = vand.u32 2147483647, %v1412
  %v1493 = vand.u32 2147483647, %v1413
  %v1494 = vand.u32 2147483647, %v1414
  %v1495 = vand.u32 2147483647, %v1415
  %v1496 = vand.u32 2147483647, %v1416
  %v1497 = vand.u32 2147483647, %v1417
  %v1498 = vand.u32 2147483647, %v1418
  %v1499 = vsub.f32 0.0, %v1483
  %v1500 = vsub.f32 0.0, %v1484
  %v1501 = vsub.f32 0.0, %v1485
  %v1502 = vsub.f32 0.0, %v1486
  %v1503 = vsub.f32 0.0, %v1487
  %v1504 = vsub.f32 0.0, %v1488
  %v1505 = vsub.f32 0.0, %v1489
  %v1506 = vsub.f32 0.0, %v1490
  %v1507 = vsub.f32 0.0, %v1491
  %v1508 = vsub.f32 0.0, %v1492
  %v1509 = vsub.f32 0.0, %v1493
  %v1510 = vsub.f32 0.0, %v1494
  %v1511 = vsub.f32 0.0, %v1495
  %v1512 = vsub.f32 0.0, %v1496
  %v1513 = vsub.f32 0.0, %v1497
  %v1514 = vsub.f32 0.0, %v1498
  %v1515 = vmul.f32 %v1499, 1.442695
  %v1516 = vpow.pop %v1515
  %v1517 = vmul.f32 %v1500, 1.442695
  %v1518 = vpow.pop %v1517
  %v1519 = vmul.f32 %v1501, 1.442695
  %v1520 = vpow.pop %v1519
  %v1521 = vmul.f32 %v1502, 1.442695
  %v1522 = vpow.pop %v1521
  %v1523 = vmul.f32 %v1503, 1.442695
  %v1524 = vpow.pop %v1523
  %v1525 = vmul.f32 %v1504, 1.442695
  %v1526 = vpow.pop %v1525
  %v1527 = vmul.f32 %v1505, 1.442695
  %v1528 = vpow.pop %v1527
  %v1529 = vmul.f32 %v1506, 1.442695
  %v1530 = vpow.pop %v1529
  %v1531 = vmul.f32 %v1507, 1.442695
  %v1532 = vpow.pop %v1531
  %v1533 = vmul.f32 %v1508, 1.442695
  %v1534 = vpow.pop %v1533
  %v1535 = vmul.f32 %v1509, 1.442695
  %v1536 = vpow.pop %v1535
  %v1537 = vmul.f32 %v1510, 1.442695
  %v1538 = vpow.pop %v1537
  %v1539 = vmul.f32 %v1511, 1.442695
  %v1540 = vpow.pop %v1539
  %v1541 = vmul.f32 %v1512, 1.442695
  %v1542 = vpow.pop %v1541
  %v1543 = vmul.f32 %v1513, 1.442695
  %v1544 = vpow.pop %v1543
  %v1545 = vmul.f32 %v1514, 1.442695
  %v1546 = vpow.pop %v1545
  %v1547 = vadd.f32 %v1516, 1.0
  %v1548 = vlog2.pop %v1547
  %v1549 = vmul.f32 %v1548, 0.6931472
  %v1550 = vmul.f32 -0.5, %v1516
  %v1551 = vadd.f32 %v1550, 1.0
  %v1552 = vmul.f32 %v1551, %v1516
  %v1553 = vand.u32 2147483647, %v1516
  %vm1554 = vcmp.lt.f32.partialorder %v1553, 0.0004427343
  %v1555 = vsel %vm1554, %v1552, %v1549
  %v1556 = vadd.f32 %v1518, 1.0
  %v1557 = vlog2.pop %v1556
  %v1558 = vmul.f32 %v1557, 0.6931472
  %v1559 = vmul.f32 -0.5, %v1518
  %v1560 = vadd.f32 %v1559, 1.0
  %v1561 = vmul.f32 %v1560, %v1518
  %v1562 = vand.u32 2147483647, %v1518
  %vm1563 = vcmp.lt.f32.partialorder %v1562, 0.0004427343
  %v1564 = vsel %vm1563, %v1561, %v1558
  %v1565 = vadd.f32 %v1520, 1.0
  %v1566 = vlog2.pop %v1565
  %v1567 = vmul.f32 %v1566, 0.6931472
  %v1568 = vmul.f32 -0.5, %v1520
  %v1569 = vadd.f32 %v1568, 1.0
  %v1570 = vmul.f32 %v1569, %v1520
  %v1571 = vand.u32 2147483647, %v1520
  %vm1572 = vcmp.lt.f32.partialorder %v1571, 0.0004427343
  %v1573 = vsel %vm1572, %v1570, %v1567
  %v1574 = vadd.f32 %v1522, 1.0
  %v1575 = vlog2.pop %v1574
  %v1576 = vmul.f32 %v1575, 0.6931472
  %v1577 = vmul.f32 -0.5, %v1522
  %v1578 = vadd.f32 %v1577, 1.0
  %v1579 = vmul.f32 %v1578, %v1522
  %v1580 = vand.u32 2147483647, %v1522
  %vm1581 = vcmp.lt.f32.partialorder %v1580, 0.0004427343
  %v1582 = vsel %vm1581, %v1579, %v1576
  %v1583 = vadd.f32 %v1524, 1.0
  %v1584 = vlog2.pop %v1583
  %v1585 = vmul.f32 %v1584, 0.6931472
  %v1586 = vmul.f32 -0.5, %v1524
  %v1587 = vadd.f32 %v1586, 1.0
  %v1588 = vmul.f32 %v1587, %v1524
  %v1589 = vand.u32 2147483647, %v1524
  %vm1590 = vcmp.lt.f32.partialorder %v1589, 0.0004427343
  %v1591 = vsel %vm1590, %v1588, %v1585
  %v1592 = vadd.f32 %v1526, 1.0
  %v1593 = vlog2.pop %v1592
  %v1594 = vmul.f32 %v1593, 0.6931472
  %v1595 = vmul.f32 -0.5, %v1526
  %v1596 = vadd.f32 %v1595, 1.0
  %v1597 = vmul.f32 %v1596, %v1526
  %v1598 = vand.u32 2147483647, %v1526
  %vm1599 = vcmp.lt.f32.partialorder %v1598, 0.0004427343
  %v1600 = vsel %vm1599, %v1597, %v1594
  %v1601 = vadd.f32 %v1528, 1.0
  %v1602 = vlog2.pop %v1601
  %v1603 = vmul.f32 %v1602, 0.6931472
  %v1604 = vmul.f32 -0.5, %v1528
  %v1605 = vadd.f32 %v1604, 1.0
  %v1606 = vmul.f32 %v1605, %v1528
  %v1607 = vand.u32 2147483647, %v1528
  %vm1608 = vcmp.lt.f32.partialorder %v1607, 0.0004427343
  %v1609 = vsel %vm1608, %v1606, %v1603
  %v1610 = vadd.f32 %v1530, 1.0
  %v1611 = vlog2.pop %v1610
  %v1612 = vmul.f32 %v1611, 0.6931472
  %v1613 = vmul.f32 -0.5, %v1530
  %v1614 = vadd.f32 %v1613, 1.0
  %v1615 = vmul.f32 %v1614, %v1530
  %v1616 = vand.u32 2147483647, %v1530
  %vm1617 = vcmp.lt.f32.partialorder %v1616, 0.0004427343
  %v1618 = vsel %vm1617, %v1615, %v1612
  %v1619 = vadd.f32 %v1532, 1.0
  %v1620 = vlog2.pop %v1619
  %v1621 = vmul.f32 %v1620, 0.6931472
  %v1622 = vmul.f32 -0.5, %v1532
  %v1623 = vadd.f32 %v1622, 1.0
  %v1624 = vmul.f32 %v1623, %v1532
  %v1625 = vand.u32 2147483647, %v1532
  %vm1626 = vcmp.lt.f32.partialorder %v1625, 0.0004427343
  %v1627 = vsel %vm1626, %v1624, %v1621
  %v1628 = vadd.f32 %v1534, 1.0
  %v1629 = vlog2.pop %v1628
  %v1630 = vmul.f32 %v1629, 0.6931472
  %v1631 = vmul.f32 -0.5, %v1534
  %v1632 = vadd.f32 %v1631, 1.0
  %v1633 = vmul.f32 %v1632, %v1534
  %v1634 = vand.u32 2147483647, %v1534
  %vm1635 = vcmp.lt.f32.partialorder %v1634, 0.0004427343
  %v1636 = vsel %vm1635, %v1633, %v1630
  %v1637 = vadd.f32 %v1536, 1.0
  %v1638 = vlog2.pop %v1637
  %v1639 = vmul.f32 %v1638, 0.6931472
  %v1640 = vmul.f32 -0.5, %v1536
  %v1641 = vadd.f32 %v1640, 1.0
  %v1642 = vmul.f32 %v1641, %v1536
  %v1643 = vand.u32 2147483647, %v1536
  %vm1644 = vcmp.lt.f32.partialorder %v1643, 0.0004427343
  %v1645 = vsel %vm1644, %v1642, %v1639
  %v1646 = vadd.f32 %v1538, 1.0
  %v1647 = vlog2.pop %v1646
  %v1648 = vmul.f32 %v1647, 0.6931472
  %v1649 = vmul.f32 -0.5, %v1538
  %v1650 = vadd.f32 %v1649, 1.0
  %v1651 = vmul.f32 %v1650, %v1538
  %v1652 = vand.u32 2147483647, %v1538
  %vm1653 = vcmp.lt.f32.partialorder %v1652, 0.0004427343
  %v1654 = vsel %vm1653, %v1651, %v1648
  %v1655 = vadd.f32 %v1540, 1.0
  %v1656 = vlog2.pop %v1655
  %v1657 = vmul.f32 %v1656, 0.6931472
  %v1658 = vmul.f32 -0.5, %v1540
  %v1659 = vadd.f32 %v1658, 1.0
  %v1660 = vmul.f32 %v1659, %v1540
  %v1661 = vand.u32 2147483647, %v1540
  %vm1662 = vcmp.lt.f32.partialorder %v1661, 0.0004427343
  %v1663 = vsel %vm1662, %v1660, %v1657
  %v1664 = vadd.f32 %v1542, 1.0
  %v1665 = vlog2.pop %v1664
  %v1666 = vmul.f32 %v1665, 0.6931472
  %v1667 = vmul.f32 -0.5, %v1542
  %v1668 = vadd.f32 %v1667, 1.0
  %v1669 = vmul.f32 %v1668, %v1542
  %v1670 = vand.u32 2147483647, %v1542
  %vm1671 = vcmp.lt.f32.partialorder %v1670, 0.0004427343
  %v1672 = vsel %vm1671, %v1669, %v1666
  %v1673 = vadd.f32 %v1544, 1.0
  %v1674 = vlog2.pop %v1673
  %v1675 = vmul.f32 %v1674, 0.6931472
  %v1676 = vmul.f32 -0.5, %v1544
  %v1677 = vadd.f32 %v1676, 1.0
  %v1678 = vmul.f32 %v1677, %v1544
  %v1679 = vand.u32 2147483647, %v1544
  %vm1680 = vcmp.lt.f32.partialorder %v1679, 0.0004427343
  %v1681 = vsel %vm1680, %v1678, %v1675
  %v1682 = vadd.f32 %v1546, 1.0
  %v1683 = vlog2.pop %v1682
  %v1684 = vmul.f32 %v1683, 0.6931472
  %v1685 = vmul.f32 -0.5, %v1546
  %v1686 = vadd.f32 %v1685, 1.0
  %v1687 = vmul.f32 %v1686, %v1546
  %v1688 = vand.u32 2147483647, %v1546
  %vm1689 = vcmp.lt.f32.partialorder %v1688, 0.0004427343
  %v1690 = vsel %vm1689, %v1687, %v1684
  %v1691 = vadd.f32 %v1467, %v1555
  %v1692 = vadd.f32 %v1468, %v1564
  %v1693 = vadd.f32 %v1469, %v1573
  %v1694 = vadd.f32 %v1470, %v1582
  %v1695 = vadd.f32 %v1471, %v1591
  %v1696 = vadd.f32 %v1472, %v1600
  %v1697 = vadd.f32 %v1473, %v1609
  %v1698 = vadd.f32 %v1474, %v1618
  %v1699 = vadd.f32 %v1475, %v1627
  %v1700 = vadd.f32 %v1476, %v1636
  %v1701 = vadd.f32 %v1477, %v1645
  %v1702 = vadd.f32 %v1478, %v1654
  %v1703 = vadd.f32 %v1479, %v1663
  %v1704 = vadd.f32 %v1480, %v1672
  %v1705 = vadd.f32 %v1481, %v1681
  %v1706 = vadd.f32 %v1482, %v1690
  %v1707 = vsel %vm420, %v1691, 0.0
  %v1708 = vsel %vm421, %v1692, 0.0
  %v1709 = vsel %vm422, %v1693, 0.0
  %v1710 = vsel %vm423, %v1694, 0.0
  %v1711 = vsel %vm424, %v1695, 0.0
  %v1712 = vsel %vm425, %v1696, 0.0
  %v1713 = vsel %vm426, %v1697, 0.0
  %v1714 = vsel %vm427, %v1698, 0.0
  %v1715 = vsel %vm428, %v1699, 0.0
  %v1716 = vsel %vm429, %v1700, 0.0
  %v1717 = vsel %vm430, %v1701, 0.0
  %v1718 = vsel %vm431, %v1702, 0.0
  %v1719 = vsel %vm432, %v1703, 0.0
  %v1720 = vsel %vm433, %v1704, 0.0
  %v1721 = vsel %vm434, %v1705, 0.0
  %v1722 = vsel %vm435, %v1706, 0.0
  %v1723 = vadd.f32 %v1707, %v1708
  %v1724 = vadd.f32 %v1723, %v1709
  %v1725 = vadd.f32 %v1724, %v1710
  %v1726 = vadd.f32 %v1725, %v1711
  %v1727 = vadd.f32 %v1726, %v1712
  %v1728 = vadd.f32 %v1727, %v1713
  %v1729 = vadd.f32 %v1728, %v1714
  %v1730 = vadd.f32 %v1729, %v1715
  %v1731 = vadd.f32 %v1730, %v1716
  %v1732 = vadd.f32 %v1731, %v1717
  %v1733 = vadd.f32 %v1732, %v1718
  %v1734 = vadd.f32 %v1733, %v1719
  %v1735 = vadd.f32 %v1734, %v1720
  %v1736 = vadd.f32 %v1735, %v1721
  %v1737 = vadd.f32 %v1736, %v1722
  %v1738 = vadd.f32 %v1737, 0.0
  %s1739 = scalar_lea.vmem %s14, 32
  %1740 = vst [vmem:[%s1739] sm:$0xff] %v1738
  %v1741 = vld [vmem:[%s5] sm:$0xff]
  %v1742 = vld [vmem:[%s5 + $0x8] sm:$0xff]
  %v1743 = vld [vmem:[%s5 + $0x10] sm:$0xff]
  %v1744 = vld [vmem:[%s5 + $0x18] sm:$0xff]
  %v1745 = vld [vmem:[%s5 + $0x20] sm:$0xff]
  %v1746 = vld [vmem:[%s5 + $0x28] sm:$0xff]
  %v1747 = vld [vmem:[%s5 + $0x30] sm:$0xff]
  %v1748 = vld [vmem:[%s5 + $0x38] sm:$0xff]
  %v1749 = vld [vmem:[%s5 + $0x40] sm:$0xff]
  %v1750 = vld [vmem:[%s5 + $0x48] sm:$0xff]
  %v1751 = vld [vmem:[%s5 + $0x50] sm:$0xff]
  %v1752 = vld [vmem:[%s5 + $0x58] sm:$0xff]
  %v1753 = vld [vmem:[%s5 + $0x60] sm:$0xff]
  %v1754 = vld [vmem:[%s5 + $0x68] sm:$0xff]
  %v1755 = vld [vmem:[%s5 + $0x70] sm:$0xff]
  %v1756 = vld [vmem:[%s5 + $0x78] sm:$0xff]
  %v1757 = vld [vmem:[%s13] sm:$0xff]
  %v1758 = vld [vmem:[%s13 + $0x8] sm:$0xff]
  %v1759 = vld [vmem:[%s13 + $0x10] sm:$0xff]
  %v1760 = vld [vmem:[%s13 + $0x18] sm:$0xff]
  %v1761 = vld [vmem:[%s13 + $0x20] sm:$0xff]
  %v1762 = vld [vmem:[%s13 + $0x28] sm:$0xff]
  %v1763 = vld [vmem:[%s13 + $0x30] sm:$0xff]
  %v1764 = vld [vmem:[%s13 + $0x38] sm:$0xff]
  %v1765 = vld [vmem:[%s13 + $0x40] sm:$0xff]
  %v1766 = vld [vmem:[%s13 + $0x48] sm:$0xff]
  %v1767 = vld [vmem:[%s13 + $0x50] sm:$0xff]
  %v1768 = vld [vmem:[%s13 + $0x58] sm:$0xff]
  %v1769 = vld [vmem:[%s13 + $0x60] sm:$0xff]
  %v1770 = vld [vmem:[%s13 + $0x68] sm:$0xff]
  %v1771 = vld [vmem:[%s13 + $0x70] sm:$0xff]
  %v1772 = vld [vmem:[%s13 + $0x78] sm:$0xff]
  %v1773 = vlog2.pop %v1741
  %v1774 = vmul.f32 %v1773, 0.6931472
  %v1775 = vlog2.pop %v1742
  %v1776 = vmul.f32 %v1775, 0.6931472
  %v1777 = vlog2.pop %v1743
  %v1778 = vmul.f32 %v1777, 0.6931472
  %v1779 = vlog2.pop %v1744
  %v1780 = vmul.f32 %v1779, 0.6931472
  %v1781 = vlog2.pop %v1745
  %v1782 = vmul.f32 %v1781, 0.6931472
  %v1783 = vlog2.pop %v1746
  %v1784 = vmul.f32 %v1783, 0.6931472
  %v1785 = vlog2.pop %v1747
  %v1786 = vmul.f32 %v1785, 0.6931472
  %v1787 = vlog2.pop %v1748
  %v1788 = vmul.f32 %v1787, 0.6931472
  %v1789 = vlog2.pop %v1749
  %v1790 = vmul.f32 %v1789, 0.6931472
  %v1791 = vlog2.pop %v1750
  %v1792 = vmul.f32 %v1791, 0.6931472
  %v1793 = vlog2.pop %v1751
  %v1794 = vmul.f32 %v1793, 0.6931472
  %v1795 = vlog2.pop %v1752
  %v1796 = vmul.f32 %v1795, 0.6931472
  %v1797 = vlog2.pop %v1753
  %v1798 = vmul.f32 %v1797, 0.6931472
  %v1799 = vlog2.pop %v1754
  %v1800 = vmul.f32 %v1799, 0.6931472
  %v1801 = vlog2.pop %v1755
  %v1802 = vmul.f32 %v1801, 0.6931472
  %v1803 = vlog2.pop %v1756
  %v1804 = vmul.f32 %v1803, 0.6931472
  %v1805 = vmax.f32 %v1774, -100.0
  %v1806 = vmax.f32 %v1776, -100.0
  %v1807 = vmax.f32 %v1778, -100.0
  %v1808 = vmax.f32 %v1780, -100.0
  %v1809 = vmax.f32 %v1782, -100.0
  %v1810 = vmax.f32 %v1784, -100.0
  %v1811 = vmax.f32 %v1786, -100.0
  %v1812 = vmax.f32 %v1788, -100.0
  %v1813 = vmax.f32 %v1790, -100.0
  %v1814 = vmax.f32 %v1792, -100.0
  %v1815 = vmax.f32 %v1794, -100.0
  %v1816 = vmax.f32 %v1796, -100.0
  %v1817 = vmax.f32 %v1798, -100.0
  %v1818 = vmax.f32 %v1800, -100.0
  %v1819 = vmax.f32 %v1802, -100.0
  %v1820 = vmax.f32 %v1804, -100.0
  %v1821 = vsub.f32 1.0, %v1741
  %v1822 = vsub.f32 1.0, %v1742
  %v1823 = vsub.f32 1.0, %v1743
  %v1824 = vsub.f32 1.0, %v1744
  %v1825 = vsub.f32 1.0, %v1745
  %v1826 = vsub.f32 1.0, %v1746
  %v1827 = vsub.f32 1.0, %v1747
  %v1828 = vsub.f32 1.0, %v1748
  %v1829 = vsub.f32 1.0, %v1749
  %v1830 = vsub.f32 1.0, %v1750
  %v1831 = vsub.f32 1.0, %v1751
  %v1832 = vsub.f32 1.0, %v1752
  %v1833 = vsub.f32 1.0, %v1753
  %v1834 = vsub.f32 1.0, %v1754
  %v1835 = vsub.f32 1.0, %v1755
  %v1836 = vsub.f32 1.0, %v1756
  %v1837 = vlog2.pop %v1821
  %v1838 = vmul.f32 %v1837, 0.6931472
  %v1839 = vlog2.pop %v1822
  %v1840 = vmul.f32 %v1839, 0.6931472
  %v1841 = vlog2.pop %v1823
  %v1842 = vmul.f32 %v1841, 0.6931472
  %v1843 = vlog2.pop %v1824
  %v1844 = vmul.f32 %v1843, 0.6931472
  %v1845 = vlog2.pop %v1825
  %v1846 = vmul.f32 %v1845, 0.6931472
  %v1847 = vlog2.pop %v1826
  %v1848 = vmul.f32 %v1847, 0.6931472
  %v1849 = vlog2.pop %v1827
  %v1850 = vmul.f32 %v1849, 0.6931472
  %v1851 = vlog2.pop %v1828
  %v1852 = vmul.f32 %v1851, 0.6931472
  %v1853 = vlog2.pop %v1829
  %v1854 = vmul.f32 %v1853, 0.6931472
  %v1855 = vlog2.pop %v1830
  %v1856 = vmul.f32 %v1855, 0.6931472
  %v1857 = vlog2.pop %v1831
  %v1858 = vmul.f32 %v1857, 0.6931472
  %v1859 = vlog2.pop %v1832
  %v1860 = vmul.f32 %v1859, 0.6931472
  %v1861 = vlog2.pop %v1833
  %v1862 = vmul.f32 %v1861, 0.6931472
  %v1863 = vlog2.pop %v1834
  %v1864 = vmul.f32 %v1863, 0.6931472
  %v1865 = vlog2.pop %v1835
  %v1866 = vmul.f32 %v1865, 0.6931472
  %v1867 = vlog2.pop %v1836
  %v1868 = vmul.f32 %v1867, 0.6931472
  %v1869 = vmax.f32 %v1838, -100.0
  %v1870 = vmax.f32 %v1840, -100.0
  %v1871 = vmax.f32 %v1842, -100.0
  %v1872 = vmax.f32 %v1844, -100.0
  %v1873 = vmax.f32 %v1846, -100.0
  %v1874 = vmax.f32 %v1848, -100.0
  %v1875 = vmax.f32 %v1850, -100.0
  %v1876 = vmax.f32 %v1852, -100.0
  %v1877 = vmax.f32 %v1854, -100.0
  %v1878 = vmax.f32 %v1856, -100.0
  %v1879 = vmax.f32 %v1858, -100.0
  %v1880 = vmax.f32 %v1860, -100.0
  %v1881 = vmax.f32 %v1862, -100.0
  %v1882 = vmax.f32 %v1864, -100.0
  %v1883 = vmax.f32 %v1866, -100.0
  %v1884 = vmax.f32 %v1868, -100.0
  %v1885 = vmul.f32 %v1757, %v1805
  %v1886 = vmul.f32 %v1758, %v1806
  %v1887 = vmul.f32 %v1759, %v1807
  %v1888 = vmul.f32 %v1760, %v1808
  %v1889 = vmul.f32 %v1761, %v1809
  %v1890 = vmul.f32 %v1762, %v1810
  %v1891 = vmul.f32 %v1763, %v1811
  %v1892 = vmul.f32 %v1764, %v1812
  %v1893 = vmul.f32 %v1765, %v1813
  %v1894 = vmul.f32 %v1766, %v1814
  %v1895 = vmul.f32 %v1767, %v1815
  %v1896 = vmul.f32 %v1768, %v1816
  %v1897 = vmul.f32 %v1769, %v1817
  %v1898 = vmul.f32 %v1770, %v1818
  %v1899 = vmul.f32 %v1771, %v1819
  %v1900 = vmul.f32 %v1772, %v1820
  %v1901 = vsub.f32 1.0, %v1757
  %v1902 = vsub.f32 1.0, %v1758
  %v1903 = vsub.f32 1.0, %v1759
  %v1904 = vsub.f32 1.0, %v1760
  %v1905 = vsub.f32 1.0, %v1761
  %v1906 = vsub.f32 1.0, %v1762
  %v1907 = vsub.f32 1.0, %v1763
  %v1908 = vsub.f32 1.0, %v1764
  %v1909 = vsub.f32 1.0, %v1765
  %v1910 = vsub.f32 1.0, %v1766
  %v1911 = vsub.f32 1.0, %v1767
  %v1912 = vsub.f32 1.0, %v1768
  %v1913 = vsub.f32 1.0, %v1769
  %v1914 = vsub.f32 1.0, %v1770
  %v1915 = vsub.f32 1.0, %v1771
  %v1916 = vsub.f32 1.0, %v1772
  %v1917 = vmul.f32 %v1901, %v1869
  %v1918 = vmul.f32 %v1902, %v1870
  %v1919 = vmul.f32 %v1903, %v1871
  %v1920 = vmul.f32 %v1904, %v1872
  %v1921 = vmul.f32 %v1905, %v1873
  %v1922 = vmul.f32 %v1906, %v1874
  %v1923 = vmul.f32 %v1907, %v1875
  %v1924 = vmul.f32 %v1908, %v1876
  %v1925 = vmul.f32 %v1909, %v1877
  %v1926 = vmul.f32 %v1910, %v1878
  %v1927 = vmul.f32 %v1911, %v1879
  %v1928 = vmul.f32 %v1912, %v1880
  %v1929 = vmul.f32 %v1913, %v1881
  %v1930 = vmul.f32 %v1914, %v1882
  %v1931 = vmul.f32 %v1915, %v1883
  %v1932 = vmul.f32 %v1916, %v1884
  %v1933 = vadd.f32 %v1885, %v1917
  %v1934 = vadd.f32 %v1886, %v1918
  %v1935 = vadd.f32 %v1887, %v1919
  %v1936 = vadd.f32 %v1888, %v1920
  %v1937 = vadd.f32 %v1889, %v1921
  %v1938 = vadd.f32 %v1890, %v1922
  %v1939 = vadd.f32 %v1891, %v1923
  %v1940 = vadd.f32 %v1892, %v1924
  %v1941 = vadd.f32 %v1893, %v1925
  %v1942 = vadd.f32 %v1894, %v1926
  %v1943 = vadd.f32 %v1895, %v1927
  %v1944 = vadd.f32 %v1896, %v1928
  %v1945 = vadd.f32 %v1897, %v1929
  %v1946 = vadd.f32 %v1898, %v1930
  %v1947 = vadd.f32 %v1899, %v1931
  %v1948 = vadd.f32 %v1900, %v1932
  %v1949 = vsub.f32 0.0, %v1933
  %v1950 = vsub.f32 0.0, %v1934
  %v1951 = vsub.f32 0.0, %v1935
  %v1952 = vsub.f32 0.0, %v1936
  %v1953 = vsub.f32 0.0, %v1937
  %v1954 = vsub.f32 0.0, %v1938
  %v1955 = vsub.f32 0.0, %v1939
  %v1956 = vsub.f32 0.0, %v1940
  %v1957 = vsub.f32 0.0, %v1941
  %v1958 = vsub.f32 0.0, %v1942
  %v1959 = vsub.f32 0.0, %v1943
  %v1960 = vsub.f32 0.0, %v1944
  %v1961 = vsub.f32 0.0, %v1945
  %v1962 = vsub.f32 0.0, %v1946
  %v1963 = vsub.f32 0.0, %v1947
  %v1964 = vsub.f32 0.0, %v1948
  %v1965 = vsel %vm420, %v1949, 0.0
  %v1966 = vsel %vm421, %v1950, 0.0
  %v1967 = vsel %vm422, %v1951, 0.0
  %v1968 = vsel %vm423, %v1952, 0.0
  %v1969 = vsel %vm424, %v1953, 0.0
  %v1970 = vsel %vm425, %v1954, 0.0
  %v1971 = vsel %vm426, %v1955, 0.0
  %v1972 = vsel %vm427, %v1956, 0.0
  %v1973 = vsel %vm428, %v1957, 0.0
  %v1974 = vsel %vm429, %v1958, 0.0
  %v1975 = vsel %vm430, %v1959, 0.0
  %v1976 = vsel %vm431, %v1960, 0.0
  %v1977 = vsel %vm432, %v1961, 0.0
  %v1978 = vsel %vm433, %v1962, 0.0
  %v1979 = vsel %vm434, %v1963, 0.0
  %v1980 = vsel %vm435, %v1964, 0.0
  %v1981 = vadd.f32 %v1965, %v1966
  %v1982 = vadd.f32 %v1981, %v1967
  %v1983 = vadd.f32 %v1982, %v1968
  %v1984 = vadd.f32 %v1983, %v1969
  %v1985 = vadd.f32 %v1984, %v1970
  %v1986 = vadd.f32 %v1985, %v1971
  %v1987 = vadd.f32 %v1986, %v1972
  %v1988 = vadd.f32 %v1987, %v1973
  %v1989 = vadd.f32 %v1988, %v1974
  %v1990 = vadd.f32 %v1989, %v1975
  %v1991 = vadd.f32 %v1990, %v1976
  %v1992 = vadd.f32 %v1991, %v1977
  %v1993 = vadd.f32 %v1992, %v1978
  %v1994 = vadd.f32 %v1993, %v1979
  %v1995 = vadd.f32 %v1994, %v1980
  %v1996 = vadd.f32 %v1995, 0.0
  %s1997 = scalar_lea.vmem %s14, 40
  %1998 = vst [vmem:[%s1997] sm:$0xff] %v1996
  %v1999 = vld [vmem:[%s6] sm:$0xff]
  %v2000 = vld [vmem:[%s6 + $0x8] sm:$0xff]
  %v2001 = vld [vmem:[%s6 + $0x10] sm:$0xff]
  %v2002 = vld [vmem:[%s6 + $0x18] sm:$0xff]
  %v2003 = vld [vmem:[%s6 + $0x20] sm:$0xff]
  %v2004 = vld [vmem:[%s6 + $0x28] sm:$0xff]
  %v2005 = vld [vmem:[%s6 + $0x30] sm:$0xff]
  %v2006 = vld [vmem:[%s6 + $0x38] sm:$0xff]
  %v2007 = vld [vmem:[%s6 + $0x40] sm:$0xff]
  %v2008 = vld [vmem:[%s6 + $0x48] sm:$0xff]
  %v2009 = vld [vmem:[%s6 + $0x50] sm:$0xff]
  %v2010 = vld [vmem:[%s6 + $0x58] sm:$0xff]
  %v2011 = vld [vmem:[%s6 + $0x60] sm:$0xff]
  %v2012 = vld [vmem:[%s6 + $0x68] sm:$0xff]
  %v2013 = vld [vmem:[%s6 + $0x70] sm:$0xff]
  %v2014 = vld [vmem:[%s6 + $0x78] sm:$0xff]
  %v2015 = vld [vmem:[%s12] sm:$0xff]
  %v2016 = vld [vmem:[%s12 + $0x8] sm:$0xff]
  %v2017 = vld [vmem:[%s12 + $0x10] sm:$0xff]
  %v2018 = vld [vmem:[%s12 + $0x18] sm:$0xff]
  %v2019 = vld [vmem:[%s12 + $0x20] sm:$0xff]
  %v2020 = vld [vmem:[%s12 + $0x28] sm:$0xff]
  %v2021 = vld [vmem:[%s12 + $0x30] sm:$0xff]
  %v2022 = vld [vmem:[%s12 + $0x38] sm:$0xff]
  %v2023 = vld [vmem:[%s12 + $0x40] sm:$0xff]
  %v2024 = vld [vmem:[%s12 + $0x48] sm:$0xff]
  %v2025 = vld [vmem:[%s12 + $0x50] sm:$0xff]
  %v2026 = vld [vmem:[%s12 + $0x58] sm:$0xff]
  %v2027 = vld [vmem:[%s12 + $0x60] sm:$0xff]
  %v2028 = vld [vmem:[%s12 + $0x68] sm:$0xff]
  %v2029 = vld [vmem:[%s12 + $0x70] sm:$0xff]
  %v2030 = vld [vmem:[%s12 + $0x78] sm:$0xff]
  %v2031 = vmax.f32 %v1999, 0.0
  %v2032 = vmax.f32 %v2000, 0.0
  %v2033 = vmax.f32 %v2001, 0.0
  %v2034 = vmax.f32 %v2002, 0.0
  %v2035 = vmax.f32 %v2003, 0.0
  %v2036 = vmax.f32 %v2004, 0.0
  %v2037 = vmax.f32 %v2005, 0.0
  %v2038 = vmax.f32 %v2006, 0.0
  %v2039 = vmax.f32 %v2007, 0.0
  %v2040 = vmax.f32 %v2008, 0.0
  %v2041 = vmax.f32 %v2009, 0.0
  %v2042 = vmax.f32 %v2010, 0.0
  %v2043 = vmax.f32 %v2011, 0.0
  %v2044 = vmax.f32 %v2012, 0.0
  %v2045 = vmax.f32 %v2013, 0.0
  %v2046 = vmax.f32 %v2014, 0.0
  %v2047 = vmul.f32 %v1999, %v2015
  %v2048 = vmul.f32 %v2000, %v2016
  %v2049 = vmul.f32 %v2001, %v2017
  %v2050 = vmul.f32 %v2002, %v2018
  %v2051 = vmul.f32 %v2003, %v2019
  %v2052 = vmul.f32 %v2004, %v2020
  %v2053 = vmul.f32 %v2005, %v2021
  %v2054 = vmul.f32 %v2006, %v2022
  %v2055 = vmul.f32 %v2007, %v2023
  %v2056 = vmul.f32 %v2008, %v2024
  %v2057 = vmul.f32 %v2009, %v2025
  %v2058 = vmul.f32 %v2010, %v2026
  %v2059 = vmul.f32 %v2011, %v2027
  %v2060 = vmul.f32 %v2012, %v2028
  %v2061 = vmul.f32 %v2013, %v2029
  %v2062 = vmul.f32 %v2014, %v2030
  %v2063 = vsub.f32 %v2031, %v2047
  %v2064 = vsub.f32 %v2032, %v2048
  %v2065 = vsub.f32 %v2033, %v2049
  %v2066 = vsub.f32 %v2034, %v2050
  %v2067 = vsub.f32 %v2035, %v2051
  %v2068 = vsub.f32 %v2036, %v2052
  %v2069 = vsub.f32 %v2037, %v2053
  %v2070 = vsub.f32 %v2038, %v2054
  %v2071 = vsub.f32 %v2039, %v2055
  %v2072 = vsub.f32 %v2040, %v2056
  %v2073 = vsub.f32 %v2041, %v2057
  %v2074 = vsub.f32 %v2042, %v2058
  %v2075 = vsub.f32 %v2043, %v2059
  %v2076 = vsub.f32 %v2044, %v2060
  %v2077 = vsub.f32 %v2045, %v2061
  %v2078 = vsub.f32 %v2046, %v2062
  %v2079 = vand.u32 2147483647, %v1999
  %v2080 = vand.u32 2147483647, %v2000
  %v2081 = vand.u32 2147483647, %v2001
  %v2082 = vand.u32 2147483647, %v2002
  %v2083 = vand.u32 2147483647, %v2003
  %v2084 = vand.u32 2147483647, %v2004
  %v2085 = vand.u32 2147483647, %v2005
  %v2086 = vand.u32 2147483647, %v2006
  %v2087 = vand.u32 2147483647, %v2007
  %v2088 = vand.u32 2147483647, %v2008
  %v2089 = vand.u32 2147483647, %v2009
  %v2090 = vand.u32 2147483647, %v2010
  %v2091 = vand.u32 2147483647, %v2011
  %v2092 = vand.u32 2147483647, %v2012
  %v2093 = vand.u32 2147483647, %v2013
  %v2094 = vand.u32 2147483647, %v2014
  %v2095 = vsub.f32 0.0, %v2079
  %v2096 = vsub.f32 0.0, %v2080
  %v2097 = vsub.f32 0.0, %v2081
  %v2098 = vsub.f32 0.0, %v2082
  %v2099 = vsub.f32 0.0, %v2083
  %v2100 = vsub.f32 0.0, %v2084
  %v2101 = vsub.f32 0.0, %v2085
  %v2102 = vsub.f32 0.0, %v2086
  %v2103 = vsub.f32 0.0, %v2087
  %v2104 = vsub.f32 0.0, %v2088
  %v2105 = vsub.f32 0.0, %v2089
  %v2106 = vsub.f32 0.0, %v2090
  %v2107 = vsub.f32 0.0, %v2091
  %v2108 = vsub.f32 0.0, %v2092
  %v2109 = vsub.f32 0.0, %v2093
  %v2110 = vsub.f32 0.0, %v2094
  %v2111 = vmul.f32 %v2095, 1.442695
  %v2112 = vpow.pop %v2111
  %v2113 = vmul.f32 %v2096, 1.442695
  %v2114 = vpow.pop %v2113
  %v2115 = vmul.f32 %v2097, 1.442695
  %v2116 = vpow.pop %v2115
  %v2117 = vmul.f32 %v2098, 1.442695
  %v2118 = vpow.pop %v2117
  %v2119 = vmul.f32 %v2099, 1.442695
  %v2120 = vpow.pop %v2119
  %v2121 = vmul.f32 %v2100, 1.442695
  %v2122 = vpow.pop %v2121
  %v2123 = vmul.f32 %v2101, 1.442695
  %v2124 = vpow.pop %v2123
  %v2125 = vmul.f32 %v2102, 1.442695
  %v2126 = vpow.pop %v2125
  %v2127 = vmul.f32 %v2103, 1.442695
  %v2128 = vpow.pop %v2127
  %v2129 = vmul.f32 %v2104, 1.442695
  %v2130 = vpow.pop %v2129
  %v2131 = vmul.f32 %v2105, 1.442695
  %v2132 = vpow.pop %v2131
  %v2133 = vmul.f32 %v2106, 1.442695
  %v2134 = vpow.pop %v2133
  %v2135 = vmul.f32 %v2107, 1.442695
  %v2136 = vpow.pop %v2135
  %v2137 = vmul.f32 %v2108, 1.442695
  %v2138 = vpow.pop %v2137
  %v2139 = vmul.f32 %v2109, 1.442695
  %v2140 = vpow.pop %v2139
  %v2141 = vmul.f32 %v2110, 1.442695
  %v2142 = vpow.pop %v2141
  %v2143 = vadd.f32 %v2112, 1.0
  %v2144 = vlog2.pop %v2143
  %v2145 = vmul.f32 %v2144, 0.6931472
  %v2146 = vmul.f32 -0.5, %v2112
  %v2147 = vadd.f32 %v2146, 1.0
  %v2148 = vmul.f32 %v2147, %v2112
  %v2149 = vand.u32 2147483647, %v2112
  %vm2150 = vcmp.lt.f32.partialorder %v2149, 0.0004427343
  %v2151 = vsel %vm2150, %v2148, %v2145
  %v2152 = vadd.f32 %v2114, 1.0
  %v2153 = vlog2.pop %v2152
  %v2154 = vmul.f32 %v2153, 0.6931472
  %v2155 = vmul.f32 -0.5, %v2114
  %v2156 = vadd.f32 %v2155, 1.0
  %v2157 = vmul.f32 %v2156, %v2114
  %v2158 = vand.u32 2147483647, %v2114
  %vm2159 = vcmp.lt.f32.partialorder %v2158, 0.0004427343
  %v2160 = vsel %vm2159, %v2157, %v2154
  %v2161 = vadd.f32 %v2116, 1.0
  %v2162 = vlog2.pop %v2161
  %v2163 = vmul.f32 %v2162, 0.6931472
  %v2164 = vmul.f32 -0.5, %v2116
  %v2165 = vadd.f32 %v2164, 1.0
  %v2166 = vmul.f32 %v2165, %v2116
  %v2167 = vand.u32 2147483647, %v2116
  %vm2168 = vcmp.lt.f32.partialorder %v2167, 0.0004427343
  %v2169 = vsel %vm2168, %v2166, %v2163
  %v2170 = vadd.f32 %v2118, 1.0
  %v2171 = vlog2.pop %v2170
  %v2172 = vmul.f32 %v2171, 0.6931472
  %v2173 = vmul.f32 -0.5, %v2118
  %v2174 = vadd.f32 %v2173, 1.0
  %v2175 = vmul.f32 %v2174, %v2118
  %v2176 = vand.u32 2147483647, %v2118
  %vm2177 = vcmp.lt.f32.partialorder %v2176, 0.0004427343
  %v2178 = vsel %vm2177, %v2175, %v2172
  %v2179 = vadd.f32 %v2120, 1.0
  %v2180 = vlog2.pop %v2179
  %v2181 = vmul.f32 %v2180, 0.6931472
  %v2182 = vmul.f32 -0.5, %v2120
  %v2183 = vadd.f32 %v2182, 1.0
  %v2184 = vmul.f32 %v2183, %v2120
  %v2185 = vand.u32 2147483647, %v2120
  %vm2186 = vcmp.lt.f32.partialorder %v2185, 0.0004427343
  %v2187 = vsel %vm2186, %v2184, %v2181
  %v2188 = vadd.f32 %v2122, 1.0
  %v2189 = vlog2.pop %v2188
  %v2190 = vmul.f32 %v2189, 0.6931472
  %v2191 = vmul.f32 -0.5, %v2122
  %v2192 = vadd.f32 %v2191, 1.0
  %v2193 = vmul.f32 %v2192, %v2122
  %v2194 = vand.u32 2147483647, %v2122
  %vm2195 = vcmp.lt.f32.partialorder %v2194, 0.0004427343
  %v2196 = vsel %vm2195, %v2193, %v2190
  %v2197 = vadd.f32 %v2124, 1.0
  %v2198 = vlog2.pop %v2197
  %v2199 = vmul.f32 %v2198, 0.6931472
  %v2200 = vmul.f32 -0.5, %v2124
  %v2201 = vadd.f32 %v2200, 1.0
  %v2202 = vmul.f32 %v2201, %v2124
  %v2203 = vand.u32 2147483647, %v2124
  %vm2204 = vcmp.lt.f32.partialorder %v2203, 0.0004427343
  %v2205 = vsel %vm2204, %v2202, %v2199
  %v2206 = vadd.f32 %v2126, 1.0
  %v2207 = vlog2.pop %v2206
  %v2208 = vmul.f32 %v2207, 0.6931472
  %v2209 = vmul.f32 -0.5, %v2126
  %v2210 = vadd.f32 %v2209, 1.0
  %v2211 = vmul.f32 %v2210, %v2126
  %v2212 = vand.u32 2147483647, %v2126
  %vm2213 = vcmp.lt.f32.partialorder %v2212, 0.0004427343
  %v2214 = vsel %vm2213, %v2211, %v2208
  %v2215 = vadd.f32 %v2128, 1.0
  %v2216 = vlog2.pop %v2215
  %v2217 = vmul.f32 %v2216, 0.6931472
  %v2218 = vmul.f32 -0.5, %v2128
  %v2219 = vadd.f32 %v2218, 1.0
  %v2220 = vmul.f32 %v2219, %v2128
  %v2221 = vand.u32 2147483647, %v2128
  %vm2222 = vcmp.lt.f32.partialorder %v2221, 0.0004427343
  %v2223 = vsel %vm2222, %v2220, %v2217
  %v2224 = vadd.f32 %v2130, 1.0
  %v2225 = vlog2.pop %v2224
  %v2226 = vmul.f32 %v2225, 0.6931472
  %v2227 = vmul.f32 -0.5, %v2130
  %v2228 = vadd.f32 %v2227, 1.0
  %v2229 = vmul.f32 %v2228, %v2130
  %v2230 = vand.u32 2147483647, %v2130
  %vm2231 = vcmp.lt.f32.partialorder %v2230, 0.0004427343
  %v2232 = vsel %vm2231, %v2229, %v2226
  %v2233 = vadd.f32 %v2132, 1.0
  %v2234 = vlog2.pop %v2233
  %v2235 = vmul.f32 %v2234, 0.6931472
  %v2236 = vmul.f32 -0.5, %v2132
  %v2237 = vadd.f32 %v2236, 1.0
  %v2238 = vmul.f32 %v2237, %v2132
  %v2239 = vand.u32 2147483647, %v2132
  %vm2240 = vcmp.lt.f32.partialorder %v2239, 0.0004427343
  %v2241 = vsel %vm2240, %v2238, %v2235
  %v2242 = vadd.f32 %v2134, 1.0
  %v2243 = vlog2.pop %v2242
  %v2244 = vmul.f32 %v2243, 0.6931472
  %v2245 = vmul.f32 -0.5, %v2134
  %v2246 = vadd.f32 %v2245, 1.0
  %v2247 = vmul.f32 %v2246, %v2134
  %v2248 = vand.u32 2147483647, %v2134
  %vm2249 = vcmp.lt.f32.partialorder %v2248, 0.0004427343
  %v2250 = vsel %vm2249, %v2247, %v2244
  %v2251 = vadd.f32 %v2136, 1.0
  %v2252 = vlog2.pop %v2251
  %v2253 = vmul.f32 %v2252, 0.6931472
  %v2254 = vmul.f32 -0.5, %v2136
  %v2255 = vadd.f32 %v2254, 1.0
  %v2256 = vmul.f32 %v2255, %v2136
  %v2257 = vand.u32 2147483647, %v2136
  %vm2258 = vcmp.lt.f32.partialorder %v2257, 0.0004427343
  %v2259 = vsel %vm2258, %v2256, %v2253
  %v2260 = vadd.f32 %v2138, 1.0
  %v2261 = vlog2.pop %v2260
  %v2262 = vmul.f32 %v2261, 0.6931472
  %v2263 = vmul.f32 -0.5, %v2138
  %v2264 = vadd.f32 %v2263, 1.0
  %v2265 = vmul.f32 %v2264, %v2138
  %v2266 = vand.u32 2147483647, %v2138
  %vm2267 = vcmp.lt.f32.partialorder %v2266, 0.0004427343
  %v2268 = vsel %vm2267, %v2265, %v2262
  %v2269 = vadd.f32 %v2140, 1.0
  %v2270 = vlog2.pop %v2269
  %v2271 = vmul.f32 %v2270, 0.6931472
  %v2272 = vmul.f32 -0.5, %v2140
  %v2273 = vadd.f32 %v2272, 1.0
  %v2274 = vmul.f32 %v2273, %v2140
  %v2275 = vand.u32 2147483647, %v2140
  %vm2276 = vcmp.lt.f32.partialorder %v2275, 0.0004427343
  %v2277 = vsel %vm2276, %v2274, %v2271
  %v2278 = vadd.f32 %v2142, 1.0
  %v2279 = vlog2.pop %v2278
  %v2280 = vmul.f32 %v2279, 0.6931472
  %v2281 = vmul.f32 -0.5, %v2142
  %v2282 = vadd.f32 %v2281, 1.0
  %v2283 = vmul.f32 %v2282, %v2142
  %v2284 = vand.u32 2147483647, %v2142
  %vm2285 = vcmp.lt.f32.partialorder %v2284, 0.0004427343
  %v2286 = vsel %vm2285, %v2283, %v2280
  %v2287 = vadd.f32 %v2063, %v2151
  %v2288 = vadd.f32 %v2064, %v2160
  %v2289 = vadd.f32 %v2065, %v2169
  %v2290 = vadd.f32 %v2066, %v2178
  %v2291 = vadd.f32 %v2067, %v2187
  %v2292 = vadd.f32 %v2068, %v2196
  %v2293 = vadd.f32 %v2069, %v2205
  %v2294 = vadd.f32 %v2070, %v2214
  %v2295 = vadd.f32 %v2071, %v2223
  %v2296 = vadd.f32 %v2072, %v2232
  %v2297 = vadd.f32 %v2073, %v2241
  %v2298 = vadd.f32 %v2074, %v2250
  %v2299 = vadd.f32 %v2075, %v2259
  %v2300 = vadd.f32 %v2076, %v2268
  %v2301 = vadd.f32 %v2077, %v2277
  %v2302 = vadd.f32 %v2078, %v2286
  %v2303 = vsel %vm420, %v2287, 0.0
  %v2304 = vsel %vm421, %v2288, 0.0
  %v2305 = vsel %vm422, %v2289, 0.0
  %v2306 = vsel %vm423, %v2290, 0.0
  %v2307 = vsel %vm424, %v2291, 0.0
  %v2308 = vsel %vm425, %v2292, 0.0
  %v2309 = vsel %vm426, %v2293, 0.0
  %v2310 = vsel %vm427, %v2294, 0.0
  %v2311 = vsel %vm428, %v2295, 0.0
  %v2312 = vsel %vm429, %v2296, 0.0
  %v2313 = vsel %vm430, %v2297, 0.0
  %v2314 = vsel %vm431, %v2298, 0.0
  %v2315 = vsel %vm432, %v2299, 0.0
  %v2316 = vsel %vm433, %v2300, 0.0
  %v2317 = vsel %vm434, %v2301, 0.0
  %v2318 = vsel %vm435, %v2302, 0.0
  %v2319 = vadd.f32 %v2303, %v2304
  %v2320 = vadd.f32 %v2319, %v2305
  %v2321 = vadd.f32 %v2320, %v2306
  %v2322 = vadd.f32 %v2321, %v2307
  %v2323 = vadd.f32 %v2322, %v2308
  %v2324 = vadd.f32 %v2323, %v2309
  %v2325 = vadd.f32 %v2324, %v2310
  %v2326 = vadd.f32 %v2325, %v2311
  %v2327 = vadd.f32 %v2326, %v2312
  %v2328 = vadd.f32 %v2327, %v2313
  %v2329 = vadd.f32 %v2328, %v2314
  %v2330 = vadd.f32 %v2329, %v2315
  %v2331 = vadd.f32 %v2330, %v2316
  %v2332 = vadd.f32 %v2331, %v2317
  %v2333 = vadd.f32 %v2332, %v2318
  %v2334 = vadd.f32 %v2333, 0.0
  %s2335 = scalar_lea.vmem %s14, 48
  %2336 = vst [vmem:[%s2335] sm:$0xff] %v2334
  %v2337 = vld [vmem:[%s7] sm:$0xff]
  %v2338 = vld [vmem:[%s7 + $0x8] sm:$0xff]
  %v2339 = vld [vmem:[%s7 + $0x10] sm:$0xff]
  %v2340 = vld [vmem:[%s7 + $0x18] sm:$0xff]
  %v2341 = vld [vmem:[%s7 + $0x20] sm:$0xff]
  %v2342 = vld [vmem:[%s7 + $0x28] sm:$0xff]
  %v2343 = vld [vmem:[%s7 + $0x30] sm:$0xff]
  %v2344 = vld [vmem:[%s7 + $0x38] sm:$0xff]
  %v2345 = vld [vmem:[%s7 + $0x40] sm:$0xff]
  %v2346 = vld [vmem:[%s7 + $0x48] sm:$0xff]
  %v2347 = vld [vmem:[%s7 + $0x50] sm:$0xff]
  %v2348 = vld [vmem:[%s7 + $0x58] sm:$0xff]
  %v2349 = vld [vmem:[%s7 + $0x60] sm:$0xff]
  %v2350 = vld [vmem:[%s7 + $0x68] sm:$0xff]
  %v2351 = vld [vmem:[%s7 + $0x70] sm:$0xff]
  %v2352 = vld [vmem:[%s7 + $0x78] sm:$0xff]
  %v2353 = vld [vmem:[%s12] sm:$0xff]
  %v2354 = vld [vmem:[%s12 + $0x8] sm:$0xff]
  %v2355 = vld [vmem:[%s12 + $0x10] sm:$0xff]
  %v2356 = vld [vmem:[%s12 + $0x18] sm:$0xff]
  %v2357 = vld [vmem:[%s12 + $0x20] sm:$0xff]
  %v2358 = vld [vmem:[%s12 + $0x28] sm:$0xff]
  %v2359 = vld [vmem:[%s12 + $0x30] sm:$0xff]
  %v2360 = vld [vmem:[%s12 + $0x38] sm:$0xff]
  %v2361 = vld [vmem:[%s12 + $0x40] sm:$0xff]
  %v2362 = vld [vmem:[%s12 + $0x48] sm:$0xff]
  %v2363 = vld [vmem:[%s12 + $0x50] sm:$0xff]
  %v2364 = vld [vmem:[%s12 + $0x58] sm:$0xff]
  %v2365 = vld [vmem:[%s12 + $0x60] sm:$0xff]
  %v2366 = vld [vmem:[%s12 + $0x68] sm:$0xff]
  %v2367 = vld [vmem:[%s12 + $0x70] sm:$0xff]
  %v2368 = vld [vmem:[%s12 + $0x78] sm:$0xff]
  %v2369 = vmax.f32 %v2337, 0.0
  %v2370 = vmax.f32 %v2338, 0.0
  %v2371 = vmax.f32 %v2339, 0.0
  %v2372 = vmax.f32 %v2340, 0.0
  %v2373 = vmax.f32 %v2341, 0.0
  %v2374 = vmax.f32 %v2342, 0.0
  %v2375 = vmax.f32 %v2343, 0.0
  %v2376 = vmax.f32 %v2344, 0.0
  %v2377 = vmax.f32 %v2345, 0.0
  %v2378 = vmax.f32 %v2346, 0.0
  %v2379 = vmax.f32 %v2347, 0.0
  %v2380 = vmax.f32 %v2348, 0.0
  %v2381 = vmax.f32 %v2349, 0.0
  %v2382 = vmax.f32 %v2350, 0.0
  %v2383 = vmax.f32 %v2351, 0.0
  %v2384 = vmax.f32 %v2352, 0.0
  %v2385 = vmul.f32 %v2337, %v2353
  %v2386 = vmul.f32 %v2338, %v2354
  %v2387 = vmul.f32 %v2339, %v2355
  %v2388 = vmul.f32 %v2340, %v2356
  %v2389 = vmul.f32 %v2341, %v2357
  %v2390 = vmul.f32 %v2342, %v2358
  %v2391 = vmul.f32 %v2343, %v2359
  %v2392 = vmul.f32 %v2344, %v2360
  %v2393 = vmul.f32 %v2345, %v2361
  %v2394 = vmul.f32 %v2346, %v2362
  %v2395 = vmul.f32 %v2347, %v2363
  %v2396 = vmul.f32 %v2348, %v2364
  %v2397 = vmul.f32 %v2349, %v2365
  %v2398 = vmul.f32 %v2350, %v2366
  %v2399 = vmul.f32 %v2351, %v2367
  %v2400 = vmul.f32 %v2352, %v2368
  %v2401 = vsub.f32 %v2369, %v2385
  %v2402 = vsub.f32 %v2370, %v2386
  %v2403 = vsub.f32 %v2371, %v2387
  %v2404 = vsub.f32 %v2372, %v2388
  %v2405 = vsub.f32 %v2373, %v2389
  %v2406 = vsub.f32 %v2374, %v2390
  %v2407 = vsub.f32 %v2375, %v2391
  %v2408 = vsub.f32 %v2376, %v2392
  %v2409 = vsub.f32 %v2377, %v2393
  %v2410 = vsub.f32 %v2378, %v2394
  %v2411 = vsub.f32 %v2379, %v2395
  %v2412 = vsub.f32 %v2380, %v2396
  %v2413 = vsub.f32 %v2381, %v2397
  %v2414 = vsub.f32 %v2382, %v2398
  %v2415 = vsub.f32 %v2383, %v2399
  %v2416 = vsub.f32 %v2384, %v2400
  %v2417 = vand.u32 2147483647, %v2337
  %v2418 = vand.u32 2147483647, %v2338
  %v2419 = vand.u32 2147483647, %v2339
  %v2420 = vand.u32 2147483647, %v2340
  %v2421 = vand.u32 2147483647, %v2341
  %v2422 = vand.u32 2147483647, %v2342
  %v2423 = vand.u32 2147483647, %v2343
  %v2424 = vand.u32 2147483647, %v2344
  %v2425 = vand.u32 2147483647, %v2345
  %v2426 = vand.u32 2147483647, %v2346
  %v2427 = vand.u32 2147483647, %v2347
  %v2428 = vand.u32 2147483647, %v2348
  %v2429 = vand.u32 2147483647, %v2349
  %v2430 = vand.u32 2147483647, %v2350
  %v2431 = vand.u32 2147483647, %v2351
  %v2432 = vand.u32 2147483647, %v2352
  %v2433 = vsub.f32 0.0, %v2417
  %v2434 = vsub.f32 0.0, %v2418
  %v2435 = vsub.f32 0.0, %v2419
  %v2436 = vsub.f32 0.0, %v2420
  %v2437 = vsub.f32 0.0, %v2421
  %v2438 = vsub.f32 0.0, %v2422
  %v2439 = vsub.f32 0.0, %v2423
  %v2440 = vsub.f32 0.0, %v2424
  %v2441 = vsub.f32 0.0, %v2425
  %v2442 = vsub.f32 0.0, %v2426
  %v2443 = vsub.f32 0.0, %v2427
  %v2444 = vsub.f32 0.0, %v2428
  %v2445 = vsub.f32 0.0, %v2429
  %v2446 = vsub.f32 0.0, %v2430
  %v2447 = vsub.f32 0.0, %v2431
  %v2448 = vsub.f32 0.0, %v2432
  %v2449 = vmul.f32 %v2433, 1.442695
  %v2450 = vpow.pop %v2449
  %v2451 = vmul.f32 %v2434, 1.442695
  %v2452 = vpow.pop %v2451
  %v2453 = vmul.f32 %v2435, 1.442695
  %v2454 = vpow.pop %v2453
  %v2455 = vmul.f32 %v2436, 1.442695
  %v2456 = vpow.pop %v2455
  %v2457 = vmul.f32 %v2437, 1.442695
  %v2458 = vpow.pop %v2457
  %v2459 = vmul.f32 %v2438, 1.442695
  %v2460 = vpow.pop %v2459
  %v2461 = vmul.f32 %v2439, 1.442695
  %v2462 = vpow.pop %v2461
  %v2463 = vmul.f32 %v2440, 1.442695
  %v2464 = vpow.pop %v2463
  %v2465 = vmul.f32 %v2441, 1.442695
  %v2466 = vpow.pop %v2465
  %v2467 = vmul.f32 %v2442, 1.442695
  %v2468 = vpow.pop %v2467
  %v2469 = vmul.f32 %v2443, 1.442695
  %v2470 = vpow.pop %v2469
  %v2471 = vmul.f32 %v2444, 1.442695
  %v2472 = vpow.pop %v2471
  %v2473 = vmul.f32 %v2445, 1.442695
  %v2474 = vpow.pop %v2473
  %v2475 = vmul.f32 %v2446, 1.442695
  %v2476 = vpow.pop %v2475
  %v2477 = vmul.f32 %v2447, 1.442695
  %v2478 = vpow.pop %v2477
  %v2479 = vmul.f32 %v2448, 1.442695
  %v2480 = vpow.pop %v2479
  %v2481 = vadd.f32 %v2450, 1.0
  %v2482 = vlog2.pop %v2481
  %v2483 = vmul.f32 %v2482, 0.6931472
  %v2484 = vmul.f32 -0.5, %v2450
  %v2485 = vadd.f32 %v2484, 1.0
  %v2486 = vmul.f32 %v2485, %v2450
  %v2487 = vand.u32 2147483647, %v2450
  %vm2488 = vcmp.lt.f32.partialorder %v2487, 0.0004427343
  %v2489 = vsel %vm2488, %v2486, %v2483
  %v2490 = vadd.f32 %v2452, 1.0
  %v2491 = vlog2.pop %v2490
  %v2492 = vmul.f32 %v2491, 0.6931472
  %v2493 = vmul.f32 -0.5, %v2452
  %v2494 = vadd.f32 %v2493, 1.0
  %v2495 = vmul.f32 %v2494, %v2452
  %v2496 = vand.u32 2147483647, %v2452
  %vm2497 = vcmp.lt.f32.partialorder %v2496, 0.0004427343
  %v2498 = vsel %vm2497, %v2495, %v2492
  %v2499 = vadd.f32 %v2454, 1.0
  %v2500 = vlog2.pop %v2499
  %v2501 = vmul.f32 %v2500, 0.6931472
  %v2502 = vmul.f32 -0.5, %v2454
  %v2503 = vadd.f32 %v2502, 1.0
  %v2504 = vmul.f32 %v2503, %v2454
  %v2505 = vand.u32 2147483647, %v2454
  %vm2506 = vcmp.lt.f32.partialorder %v2505, 0.0004427343
  %v2507 = vsel %vm2506, %v2504, %v2501
  %v2508 = vadd.f32 %v2456, 1.0
  %v2509 = vlog2.pop %v2508
  %v2510 = vmul.f32 %v2509, 0.6931472
  %v2511 = vmul.f32 -0.5, %v2456
  %v2512 = vadd.f32 %v2511, 1.0
  %v2513 = vmul.f32 %v2512, %v2456
  %v2514 = vand.u32 2147483647, %v2456
  %vm2515 = vcmp.lt.f32.partialorder %v2514, 0.0004427343
  %v2516 = vsel %vm2515, %v2513, %v2510
  %v2517 = vadd.f32 %v2458, 1.0
  %v2518 = vlog2.pop %v2517
  %v2519 = vmul.f32 %v2518, 0.6931472
  %v2520 = vmul.f32 -0.5, %v2458
  %v2521 = vadd.f32 %v2520, 1.0
  %v2522 = vmul.f32 %v2521, %v2458
  %v2523 = vand.u32 2147483647, %v2458
  %vm2524 = vcmp.lt.f32.partialorder %v2523, 0.0004427343
  %v2525 = vsel %vm2524, %v2522, %v2519
  %v2526 = vadd.f32 %v2460, 1.0
  %v2527 = vlog2.pop %v2526
  %v2528 = vmul.f32 %v2527, 0.6931472
  %v2529 = vmul.f32 -0.5, %v2460
  %v2530 = vadd.f32 %v2529, 1.0
  %v2531 = vmul.f32 %v2530, %v2460
  %v2532 = vand.u32 2147483647, %v2460
  %vm2533 = vcmp.lt.f32.partialorder %v2532, 0.0004427343
  %v2534 = vsel %vm2533, %v2531, %v2528
  %v2535 = vadd.f32 %v2462, 1.0
  %v2536 = vlog2.pop %v2535
  %v2537 = vmul.f32 %v2536, 0.6931472
  %v2538 = vmul.f32 -0.5, %v2462
  %v2539 = vadd.f32 %v2538, 1.0
  %v2540 = vmul.f32 %v2539, %v2462
  %v2541 = vand.u32 2147483647, %v2462
  %vm2542 = vcmp.lt.f32.partialorder %v2541, 0.0004427343
  %v2543 = vsel %vm2542, %v2540, %v2537
  %v2544 = vadd.f32 %v2464, 1.0
  %v2545 = vlog2.pop %v2544
  %v2546 = vmul.f32 %v2545, 0.6931472
  %v2547 = vmul.f32 -0.5, %v2464
  %v2548 = vadd.f32 %v2547, 1.0
  %v2549 = vmul.f32 %v2548, %v2464
  %v2550 = vand.u32 2147483647, %v2464
  %vm2551 = vcmp.lt.f32.partialorder %v2550, 0.0004427343
  %v2552 = vsel %vm2551, %v2549, %v2546
  %v2553 = vadd.f32 %v2466, 1.0
  %v2554 = vlog2.pop %v2553
  %v2555 = vmul.f32 %v2554, 0.6931472
  %v2556 = vmul.f32 -0.5, %v2466
  %v2557 = vadd.f32 %v2556, 1.0
  %v2558 = vmul.f32 %v2557, %v2466
  %v2559 = vand.u32 2147483647, %v2466
  %vm2560 = vcmp.lt.f32.partialorder %v2559, 0.0004427343
  %v2561 = vsel %vm2560, %v2558, %v2555
  %v2562 = vadd.f32 %v2468, 1.0
  %v2563 = vlog2.pop %v2562
  %v2564 = vmul.f32 %v2563, 0.6931472
  %v2565 = vmul.f32 -0.5, %v2468
  %v2566 = vadd.f32 %v2565, 1.0
  %v2567 = vmul.f32 %v2566, %v2468
  %v2568 = vand.u32 2147483647, %v2468
  %vm2569 = vcmp.lt.f32.partialorder %v2568, 0.0004427343
  %v2570 = vsel %vm2569, %v2567, %v2564
  %v2571 = vadd.f32 %v2470, 1.0
  %v2572 = vlog2.pop %v2571
  %v2573 = vmul.f32 %v2572, 0.6931472
  %v2574 = vmul.f32 -0.5, %v2470
  %v2575 = vadd.f32 %v2574, 1.0
  %v2576 = vmul.f32 %v2575, %v2470
  %v2577 = vand.u32 2147483647, %v2470
  %vm2578 = vcmp.lt.f32.partialorder %v2577, 0.0004427343
  %v2579 = vsel %vm2578, %v2576, %v2573
  %v2580 = vadd.f32 %v2472, 1.0
  %v2581 = vlog2.pop %v2580
  %v2582 = vmul.f32 %v2581, 0.6931472
  %v2583 = vmul.f32 -0.5, %v2472
  %v2584 = vadd.f32 %v2583, 1.0
  %v2585 = vmul.f32 %v2584, %v2472
  %v2586 = vand.u32 2147483647, %v2472
  %vm2587 = vcmp.lt.f32.partialorder %v2586, 0.0004427343
  %v2588 = vsel %vm2587, %v2585, %v2582
  %v2589 = vadd.f32 %v2474, 1.0
  %v2590 = vlog2.pop %v2589
  %v2591 = vmul.f32 %v2590, 0.6931472
  %v2592 = vmul.f32 -0.5, %v2474
  %v2593 = vadd.f32 %v2592, 1.0
  %v2594 = vmul.f32 %v2593, %v2474
  %v2595 = vand.u32 2147483647, %v2474
  %vm2596 = vcmp.lt.f32.partialorder %v2595, 0.0004427343
  %v2597 = vsel %vm2596, %v2594, %v2591
  %v2598 = vadd.f32 %v2476, 1.0
  %v2599 = vlog2.pop %v2598
  %v2600 = vmul.f32 %v2599, 0.6931472
  %v2601 = vmul.f32 -0.5, %v2476
  %v2602 = vadd.f32 %v2601, 1.0
  %v2603 = vmul.f32 %v2602, %v2476
  %v2604 = vand.u32 2147483647, %v2476
  %vm2605 = vcmp.lt.f32.partialorder %v2604, 0.0004427343
  %v2606 = vsel %vm2605, %v2603, %v2600
  %v2607 = vadd.f32 %v2478, 1.0
  %v2608 = vlog2.pop %v2607
  %v2609 = vmul.f32 %v2608, 0.6931472
  %v2610 = vmul.f32 -0.5, %v2478
  %v2611 = vadd.f32 %v2610, 1.0
  %v2612 = vmul.f32 %v2611, %v2478
  %v2613 = vand.u32 2147483647, %v2478
  %vm2614 = vcmp.lt.f32.partialorder %v2613, 0.0004427343
  %v2615 = vsel %vm2614, %v2612, %v2609
  %v2616 = vadd.f32 %v2480, 1.0
  %v2617 = vlog2.pop %v2616
  %v2618 = vmul.f32 %v2617, 0.6931472
  %v2619 = vmul.f32 -0.5, %v2480
  %v2620 = vadd.f32 %v2619, 1.0
  %v2621 = vmul.f32 %v2620, %v2480
  %v2622 = vand.u32 2147483647, %v2480
  %vm2623 = vcmp.lt.f32.partialorder %v2622, 0.0004427343
  %v2624 = vsel %vm2623, %v2621, %v2618
  %v2625 = vadd.f32 %v2401, %v2489
  %v2626 = vadd.f32 %v2402, %v2498
  %v2627 = vadd.f32 %v2403, %v2507
  %v2628 = vadd.f32 %v2404, %v2516
  %v2629 = vadd.f32 %v2405, %v2525
  %v2630 = vadd.f32 %v2406, %v2534
  %v2631 = vadd.f32 %v2407, %v2543
  %v2632 = vadd.f32 %v2408, %v2552
  %v2633 = vadd.f32 %v2409, %v2561
  %v2634 = vadd.f32 %v2410, %v2570
  %v2635 = vadd.f32 %v2411, %v2579
  %v2636 = vadd.f32 %v2412, %v2588
  %v2637 = vadd.f32 %v2413, %v2597
  %v2638 = vadd.f32 %v2414, %v2606
  %v2639 = vadd.f32 %v2415, %v2615
  %v2640 = vadd.f32 %v2416, %v2624
  %v2641 = vsel %vm420, %v2625, 0.0
  %v2642 = vsel %vm421, %v2626, 0.0
  %v2643 = vsel %vm422, %v2627, 0.0
  %v2644 = vsel %vm423, %v2628, 0.0
  %v2645 = vsel %vm424, %v2629, 0.0
  %v2646 = vsel %vm425, %v2630, 0.0
  %v2647 = vsel %vm426, %v2631, 0.0
  %v2648 = vsel %vm427, %v2632, 0.0
  %v2649 = vsel %vm428, %v2633, 0.0
  %v2650 = vsel %vm429, %v2634, 0.0
  %v2651 = vsel %vm430, %v2635, 0.0
  %v2652 = vsel %vm431, %v2636, 0.0
  %v2653 = vsel %vm432, %v2637, 0.0
  %v2654 = vsel %vm433, %v2638, 0.0
  %v2655 = vsel %vm434, %v2639, 0.0
  %v2656 = vsel %vm435, %v2640, 0.0
  %v2657 = vadd.f32 %v2641, %v2642
  %v2658 = vadd.f32 %v2657, %v2643
  %v2659 = vadd.f32 %v2658, %v2644
  %v2660 = vadd.f32 %v2659, %v2645
  %v2661 = vadd.f32 %v2660, %v2646
  %v2662 = vadd.f32 %v2661, %v2647
  %v2663 = vadd.f32 %v2662, %v2648
  %v2664 = vadd.f32 %v2663, %v2649
  %v2665 = vadd.f32 %v2664, %v2650
  %v2666 = vadd.f32 %v2665, %v2651
  %v2667 = vadd.f32 %v2666, %v2652
  %v2668 = vadd.f32 %v2667, %v2653
  %v2669 = vadd.f32 %v2668, %v2654
  %v2670 = vadd.f32 %v2669, %v2655
  %v2671 = vadd.f32 %v2670, %v2656
  %v2672 = vadd.f32 %v2671, 0.0
  %s2673 = scalar_lea.vmem %s14, 56
  %2674 = vst [vmem:[%s2673] sm:$0xff] %v2672
  %v2675 = vld [vmem:[%s8] sm:$0xff]
  %v2676 = vld [vmem:[%s8 + $0x8] sm:$0xff]
  %v2677 = vld [vmem:[%s8 + $0x10] sm:$0xff]
  %v2678 = vld [vmem:[%s8 + $0x18] sm:$0xff]
  %v2679 = vld [vmem:[%s8 + $0x20] sm:$0xff]
  %v2680 = vld [vmem:[%s8 + $0x28] sm:$0xff]
  %v2681 = vld [vmem:[%s8 + $0x30] sm:$0xff]
  %v2682 = vld [vmem:[%s8 + $0x38] sm:$0xff]
  %v2683 = vld [vmem:[%s8 + $0x40] sm:$0xff]
  %v2684 = vld [vmem:[%s8 + $0x48] sm:$0xff]
  %v2685 = vld [vmem:[%s8 + $0x50] sm:$0xff]
  %v2686 = vld [vmem:[%s8 + $0x58] sm:$0xff]
  %v2687 = vld [vmem:[%s8 + $0x60] sm:$0xff]
  %v2688 = vld [vmem:[%s8 + $0x68] sm:$0xff]
  %v2689 = vld [vmem:[%s8 + $0x70] sm:$0xff]
  %v2690 = vld [vmem:[%s8 + $0x78] sm:$0xff]
  %v2691 = vld [vmem:[%s13] sm:$0xff]
  %v2692 = vld [vmem:[%s13 + $0x8] sm:$0xff]
  %v2693 = vld [vmem:[%s13 + $0x10] sm:$0xff]
  %v2694 = vld [vmem:[%s13 + $0x18] sm:$0xff]
  %v2695 = vld [vmem:[%s13 + $0x20] sm:$0xff]
  %v2696 = vld [vmem:[%s13 + $0x28] sm:$0xff]
  %v2697 = vld [vmem:[%s13 + $0x30] sm:$0xff]
  %v2698 = vld [vmem:[%s13 + $0x38] sm:$0xff]
  %v2699 = vld [vmem:[%s13 + $0x40] sm:$0xff]
  %v2700 = vld [vmem:[%s13 + $0x48] sm:$0xff]
  %v2701 = vld [vmem:[%s13 + $0x50] sm:$0xff]
  %v2702 = vld [vmem:[%s13 + $0x58] sm:$0xff]
  %v2703 = vld [vmem:[%s13 + $0x60] sm:$0xff]
  %v2704 = vld [vmem:[%s13 + $0x68] sm:$0xff]
  %v2705 = vld [vmem:[%s13 + $0x70] sm:$0xff]
  %v2706 = vld [vmem:[%s13 + $0x78] sm:$0xff]
  %v2707 = vlog2.pop %v2675
  %v2708 = vmul.f32 %v2707, 0.6931472
  %v2709 = vlog2.pop %v2676
  %v2710 = vmul.f32 %v2709, 0.6931472
  %v2711 = vlog2.pop %v2677
  %v2712 = vmul.f32 %v2711, 0.6931472
  %v2713 = vlog2.pop %v2678
  %v2714 = vmul.f32 %v2713, 0.6931472
  %v2715 = vlog2.pop %v2679
  %v2716 = vmul.f32 %v2715, 0.6931472
  %v2717 = vlog2.pop %v2680
  %v2718 = vmul.f32 %v2717, 0.6931472
  %v2719 = vlog2.pop %v2681
  %v2720 = vmul.f32 %v2719, 0.6931472
  %v2721 = vlog2.pop %v2682
  %v2722 = vmul.f32 %v2721, 0.6931472
  %v2723 = vlog2.pop %v2683
  %v2724 = vmul.f32 %v2723, 0.6931472
  %v2725 = vlog2.pop %v2684
  %v2726 = vmul.f32 %v2725, 0.6931472
  %v2727 = vlog2.pop %v2685
  %v2728 = vmul.f32 %v2727, 0.6931472
  %v2729 = vlog2.pop %v2686
  %v2730 = vmul.f32 %v2729, 0.6931472
  %v2731 = vlog2.pop %v2687
  %v2732 = vmul.f32 %v2731, 0.6931472
  %v2733 = vlog2.pop %v2688
  %v2734 = vmul.f32 %v2733, 0.6931472
  %v2735 = vlog2.pop %v2689
  %v2736 = vmul.f32 %v2735, 0.6931472
  %v2737 = vlog2.pop %v2690
  %v2738 = vmul.f32 %v2737, 0.6931472
  %v2739 = vmax.f32 %v2708, -100.0
  %v2740 = vmax.f32 %v2710, -100.0
  %v2741 = vmax.f32 %v2712, -100.0
  %v2742 = vmax.f32 %v2714, -100.0
  %v2743 = vmax.f32 %v2716, -100.0
  %v2744 = vmax.f32 %v2718, -100.0
  %v2745 = vmax.f32 %v2720, -100.0
  %v2746 = vmax.f32 %v2722, -100.0
  %v2747 = vmax.f32 %v2724, -100.0
  %v2748 = vmax.f32 %v2726, -100.0
  %v2749 = vmax.f32 %v2728, -100.0
  %v2750 = vmax.f32 %v2730, -100.0
  %v2751 = vmax.f32 %v2732, -100.0
  %v2752 = vmax.f32 %v2734, -100.0
  %v2753 = vmax.f32 %v2736, -100.0
  %v2754 = vmax.f32 %v2738, -100.0
  %v2755 = vsub.f32 1.0, %v2675
  %v2756 = vsub.f32 1.0, %v2676
  %v2757 = vsub.f32 1.0, %v2677
  %v2758 = vsub.f32 1.0, %v2678
  %v2759 = vsub.f32 1.0, %v2679
  %v2760 = vsub.f32 1.0, %v2680
  %v2761 = vsub.f32 1.0, %v2681
  %v2762 = vsub.f32 1.0, %v2682
  %v2763 = vsub.f32 1.0, %v2683
  %v2764 = vsub.f32 1.0, %v2684
  %v2765 = vsub.f32 1.0, %v2685
  %v2766 = vsub.f32 1.0, %v2686
  %v2767 = vsub.f32 1.0, %v2687
  %v2768 = vsub.f32 1.0, %v2688
  %v2769 = vsub.f32 1.0, %v2689
  %v2770 = vsub.f32 1.0, %v2690
  %v2771 = vlog2.pop %v2755
  %v2772 = vmul.f32 %v2771, 0.6931472
  %v2773 = vlog2.pop %v2756
  %v2774 = vmul.f32 %v2773, 0.6931472
  %v2775 = vlog2.pop %v2757
  %v2776 = vmul.f32 %v2775, 0.6931472
  %v2777 = vlog2.pop %v2758
  %v2778 = vmul.f32 %v2777, 0.6931472
  %v2779 = vlog2.pop %v2759
  %v2780 = vmul.f32 %v2779, 0.6931472
  %v2781 = vlog2.pop %v2760
  %v2782 = vmul.f32 %v2781, 0.6931472
  %v2783 = vlog2.pop %v2761
  %v2784 = vmul.f32 %v2783, 0.6931472
  %v2785 = vlog2.pop %v2762
  %v2786 = vmul.f32 %v2785, 0.6931472
  %v2787 = vlog2.pop %v2763
  %v2788 = vmul.f32 %v2787, 0.6931472
  %v2789 = vlog2.pop %v2764
  %v2790 = vmul.f32 %v2789, 0.6931472
  %v2791 = vlog2.pop %v2765
  %v2792 = vmul.f32 %v2791, 0.6931472
  %v2793 = vlog2.pop %v2766
  %v2794 = vmul.f32 %v2793, 0.6931472
  %v2795 = vlog2.pop %v2767
  %v2796 = vmul.f32 %v2795, 0.6931472
  %v2797 = vlog2.pop %v2768
  %v2798 = vmul.f32 %v2797, 0.6931472
  %v2799 = vlog2.pop %v2769
  %v2800 = vmul.f32 %v2799, 0.6931472
  %v2801 = vlog2.pop %v2770
  %v2802 = vmul.f32 %v2801, 0.6931472
  %v2803 = vmax.f32 %v2772, -100.0
  %v2804 = vmax.f32 %v2774, -100.0
  %v2805 = vmax.f32 %v2776, -100.0
  %v2806 = vmax.f32 %v2778, -100.0
  %v2807 = vmax.f32 %v2780, -100.0
  %v2808 = vmax.f32 %v2782, -100.0
  %v2809 = vmax.f32 %v2784, -100.0
  %v2810 = vmax.f32 %v2786, -100.0
  %v2811 = vmax.f32 %v2788, -100.0
  %v2812 = vmax.f32 %v2790, -100.0
  %v2813 = vmax.f32 %v2792, -100.0
  %v2814 = vmax.f32 %v2794, -100.0
  %v2815 = vmax.f32 %v2796, -100.0
  %v2816 = vmax.f32 %v2798, -100.0
  %v2817 = vmax.f32 %v2800, -100.0
  %v2818 = vmax.f32 %v2802, -100.0
  %v2819 = vmul.f32 %v2691, %v2739
  %v2820 = vmul.f32 %v2692, %v2740
  %v2821 = vmul.f32 %v2693, %v2741
  %v2822 = vmul.f32 %v2694, %v2742
  %v2823 = vmul.f32 %v2695, %v2743
  %v2824 = vmul.f32 %v2696, %v2744
  %v2825 = vmul.f32 %v2697, %v2745
  %v2826 = vmul.f32 %v2698, %v2746
  %v2827 = vmul.f32 %v2699, %v2747
  %v2828 = vmul.f32 %v2700, %v2748
  %v2829 = vmul.f32 %v2701, %v2749
  %v2830 = vmul.f32 %v2702, %v2750
  %v2831 = vmul.f32 %v2703, %v2751
  %v2832 = vmul.f32 %v2704, %v2752
  %v2833 = vmul.f32 %v2705, %v2753
  %v2834 = vmul.f32 %v2706, %v2754
  %v2835 = vsub.f32 1.0, %v2691
  %v2836 = vsub.f32 1.0, %v2692
  %v2837 = vsub.f32 1.0, %v2693
  %v2838 = vsub.f32 1.0, %v2694
  %v2839 = vsub.f32 1.0, %v2695
  %v2840 = vsub.f32 1.0, %v2696
  %v2841 = vsub.f32 1.0, %v2697
  %v2842 = vsub.f32 1.0, %v2698
  %v2843 = vsub.f32 1.0, %v2699
  %v2844 = vsub.f32 1.0, %v2700
  %v2845 = vsub.f32 1.0, %v2701
  %v2846 = vsub.f32 1.0, %v2702
  %v2847 = vsub.f32 1.0, %v2703
  %v2848 = vsub.f32 1.0, %v2704
  %v2849 = vsub.f32 1.0, %v2705
  %v2850 = vsub.f32 1.0, %v2706
  %v2851 = vmul.f32 %v2835, %v2803
  %v2852 = vmul.f32 %v2836, %v2804
  %v2853 = vmul.f32 %v2837, %v2805
  %v2854 = vmul.f32 %v2838, %v2806
  %v2855 = vmul.f32 %v2839, %v2807
  %v2856 = vmul.f32 %v2840, %v2808
  %v2857 = vmul.f32 %v2841, %v2809
  %v2858 = vmul.f32 %v2842, %v2810
  %v2859 = vmul.f32 %v2843, %v2811
  %v2860 = vmul.f32 %v2844, %v2812
  %v2861 = vmul.f32 %v2845, %v2813
  %v2862 = vmul.f32 %v2846, %v2814
  %v2863 = vmul.f32 %v2847, %v2815
  %v2864 = vmul.f32 %v2848, %v2816
  %v2865 = vmul.f32 %v2849, %v2817
  %v2866 = vmul.f32 %v2850, %v2818
  %v2867 = vadd.f32 %v2819, %v2851
  %v2868 = vadd.f32 %v2820, %v2852
  %v2869 = vadd.f32 %v2821, %v2853
  %v2870 = vadd.f32 %v2822, %v2854
  %v2871 = vadd.f32 %v2823, %v2855
  %v2872 = vadd.f32 %v2824, %v2856
  %v2873 = vadd.f32 %v2825, %v2857
  %v2874 = vadd.f32 %v2826, %v2858
  %v2875 = vadd.f32 %v2827, %v2859
  %v2876 = vadd.f32 %v2828, %v2860
  %v2877 = vadd.f32 %v2829, %v2861
  %v2878 = vadd.f32 %v2830, %v2862
  %v2879 = vadd.f32 %v2831, %v2863
  %v2880 = vadd.f32 %v2832, %v2864
  %v2881 = vadd.f32 %v2833, %v2865
  %v2882 = vadd.f32 %v2834, %v2866
  %v2883 = vsub.f32 0.0, %v2867
  %v2884 = vsub.f32 0.0, %v2868
  %v2885 = vsub.f32 0.0, %v2869
  %v2886 = vsub.f32 0.0, %v2870
  %v2887 = vsub.f32 0.0, %v2871
  %v2888 = vsub.f32 0.0, %v2872
  %v2889 = vsub.f32 0.0, %v2873
  %v2890 = vsub.f32 0.0, %v2874
  %v2891 = vsub.f32 0.0, %v2875
  %v2892 = vsub.f32 0.0, %v2876
  %v2893 = vsub.f32 0.0, %v2877
  %v2894 = vsub.f32 0.0, %v2878
  %v2895 = vsub.f32 0.0, %v2879
  %v2896 = vsub.f32 0.0, %v2880
  %v2897 = vsub.f32 0.0, %v2881
  %v2898 = vsub.f32 0.0, %v2882
  %v2899 = vsel %vm420, %v2883, 0.0
  %v2900 = vsel %vm421, %v2884, 0.0
  %v2901 = vsel %vm422, %v2885, 0.0
  %v2902 = vsel %vm423, %v2886, 0.0
  %v2903 = vsel %vm424, %v2887, 0.0
  %v2904 = vsel %vm425, %v2888, 0.0
  %v2905 = vsel %vm426, %v2889, 0.0
  %v2906 = vsel %vm427, %v2890, 0.0
  %v2907 = vsel %vm428, %v2891, 0.0
  %v2908 = vsel %vm429, %v2892, 0.0
  %v2909 = vsel %vm430, %v2893, 0.0
  %v2910 = vsel %vm431, %v2894, 0.0
  %v2911 = vsel %vm432, %v2895, 0.0
  %v2912 = vsel %vm433, %v2896, 0.0
  %v2913 = vsel %vm434, %v2897, 0.0
  %v2914 = vsel %vm435, %v2898, 0.0
  %v2915 = vadd.f32 %v2899, %v2900
  %v2916 = vadd.f32 %v2915, %v2901
  %v2917 = vadd.f32 %v2916, %v2902
  %v2918 = vadd.f32 %v2917, %v2903
  %v2919 = vadd.f32 %v2918, %v2904
  %v2920 = vadd.f32 %v2919, %v2905
  %v2921 = vadd.f32 %v2920, %v2906
  %v2922 = vadd.f32 %v2921, %v2907
  %v2923 = vadd.f32 %v2922, %v2908
  %v2924 = vadd.f32 %v2923, %v2909
  %v2925 = vadd.f32 %v2924, %v2910
  %v2926 = vadd.f32 %v2925, %v2911
  %v2927 = vadd.f32 %v2926, %v2912
  %v2928 = vadd.f32 %v2927, %v2913
  %v2929 = vadd.f32 %v2928, %v2914
  %v2930 = vadd.f32 %v2929, 0.0
  %s2931 = scalar_lea.vmem %s14, 64
  %2932 = vst [vmem:[%s2931] sm:$0xff] %v2930
  %v2933 = vld [vmem:[%s9] sm:$0xff]
  %v2934 = vld [vmem:[%s9 + $0x8] sm:$0xff]
  %v2935 = vld [vmem:[%s9 + $0x10] sm:$0xff]
  %v2936 = vld [vmem:[%s9 + $0x18] sm:$0xff]
  %v2937 = vld [vmem:[%s9 + $0x20] sm:$0xff]
  %v2938 = vld [vmem:[%s9 + $0x28] sm:$0xff]
  %v2939 = vld [vmem:[%s9 + $0x30] sm:$0xff]
  %v2940 = vld [vmem:[%s9 + $0x38] sm:$0xff]
  %v2941 = vld [vmem:[%s9 + $0x40] sm:$0xff]
  %v2942 = vld [vmem:[%s9 + $0x48] sm:$0xff]
  %v2943 = vld [vmem:[%s9 + $0x50] sm:$0xff]
  %v2944 = vld [vmem:[%s9 + $0x58] sm:$0xff]
  %v2945 = vld [vmem:[%s9 + $0x60] sm:$0xff]
  %v2946 = vld [vmem:[%s9 + $0x68] sm:$0xff]
  %v2947 = vld [vmem:[%s9 + $0x70] sm:$0xff]
  %v2948 = vld [vmem:[%s9 + $0x78] sm:$0xff]
  %v2949 = vld [vmem:[%s12] sm:$0xff]
  %v2950 = vld [vmem:[%s12 + $0x8] sm:$0xff]
  %v2951 = vld [vmem:[%s12 + $0x10] sm:$0xff]
  %v2952 = vld [vmem:[%s12 + $0x18] sm:$0xff]
  %v2953 = vld [vmem:[%s12 + $0x20] sm:$0xff]
  %v2954 = vld [vmem:[%s12 + $0x28] sm:$0xff]
  %v2955 = vld [vmem:[%s12 + $0x30] sm:$0xff]
  %v2956 = vld [vmem:[%s12 + $0x38] sm:$0xff]
  %v2957 = vld [vmem:[%s12 + $0x40] sm:$0xff]
  %v2958 = vld [vmem:[%s12 + $0x48] sm:$0xff]
  %v2959 = vld [vmem:[%s12 + $0x50] sm:$0xff]
  %v2960 = vld [vmem:[%s12 + $0x58] sm:$0xff]
  %v2961 = vld [vmem:[%s12 + $0x60] sm:$0xff]
  %v2962 = vld [vmem:[%s12 + $0x68] sm:$0xff]
  %v2963 = vld [vmem:[%s12 + $0x70] sm:$0xff]
  %v2964 = vld [vmem:[%s12 + $0x78] sm:$0xff]
  %v2965 = vmax.f32 %v2933, 0.0
  %v2966 = vmax.f32 %v2934, 0.0
  %v2967 = vmax.f32 %v2935, 0.0
  %v2968 = vmax.f32 %v2936, 0.0
  %v2969 = vmax.f32 %v2937, 0.0
  %v2970 = vmax.f32 %v2938, 0.0
  %v2971 = vmax.f32 %v2939, 0.0
  %v2972 = vmax.f32 %v2940, 0.0
  %v2973 = vmax.f32 %v2941, 0.0
  %v2974 = vmax.f32 %v2942, 0.0
  %v2975 = vmax.f32 %v2943, 0.0
  %v2976 = vmax.f32 %v2944, 0.0
  %v2977 = vmax.f32 %v2945, 0.0
  %v2978 = vmax.f32 %v2946, 0.0
  %v2979 = vmax.f32 %v2947, 0.0
  %v2980 = vmax.f32 %v2948, 0.0
  %v2981 = vmul.f32 %v2933, %v2949
  %v2982 = vmul.f32 %v2934, %v2950
  %v2983 = vmul.f32 %v2935, %v2951
  %v2984 = vmul.f32 %v2936, %v2952
  %v2985 = vmul.f32 %v2937, %v2953
  %v2986 = vmul.f32 %v2938, %v2954
  %v2987 = vmul.f32 %v2939, %v2955
  %v2988 = vmul.f32 %v2940, %v2956
  %v2989 = vmul.f32 %v2941, %v2957
  %v2990 = vmul.f32 %v2942, %v2958
  %v2991 = vmul.f32 %v2943, %v2959
  %v2992 = vmul.f32 %v2944, %v2960
  %v2993 = vmul.f32 %v2945, %v2961
  %v2994 = vmul.f32 %v2946, %v2962
  %v2995 = vmul.f32 %v2947, %v2963
  %v2996 = vmul.f32 %v2948, %v2964
  %v2997 = vsub.f32 %v2965, %v2981
  %v2998 = vsub.f32 %v2966, %v2982
  %v2999 = vsub.f32 %v2967, %v2983
  %v3000 = vsub.f32 %v2968, %v2984
  %v3001 = vsub.f32 %v2969, %v2985
  %v3002 = vsub.f32 %v2970, %v2986
  %v3003 = vsub.f32 %v2971, %v2987
  %v3004 = vsub.f32 %v2972, %v2988
  %v3005 = vsub.f32 %v2973, %v2989
  %v3006 = vsub.f32 %v2974, %v2990
  %v3007 = vsub.f32 %v2975, %v2991
  %v3008 = vsub.f32 %v2976, %v2992
  %v3009 = vsub.f32 %v2977, %v2993
  %v3010 = vsub.f32 %v2978, %v2994
  %v3011 = vsub.f32 %v2979, %v2995
  %v3012 = vsub.f32 %v2980, %v2996
  %v3013 = vand.u32 2147483647, %v2933
  %v3014 = vand.u32 2147483647, %v2934
  %v3015 = vand.u32 2147483647, %v2935
  %v3016 = vand.u32 2147483647, %v2936
  %v3017 = vand.u32 2147483647, %v2937
  %v3018 = vand.u32 2147483647, %v2938
  %v3019 = vand.u32 2147483647, %v2939
  %v3020 = vand.u32 2147483647, %v2940
  %v3021 = vand.u32 2147483647, %v2941
  %v3022 = vand.u32 2147483647, %v2942
  %v3023 = vand.u32 2147483647, %v2943
  %v3024 = vand.u32 2147483647, %v2944
  %v3025 = vand.u32 2147483647, %v2945
  %v3026 = vand.u32 2147483647, %v2946
  %v3027 = vand.u32 2147483647, %v2947
  %v3028 = vand.u32 2147483647, %v2948
  %v3029 = vsub.f32 0.0, %v3013
  %v3030 = vsub.f32 0.0, %v3014
  %v3031 = vsub.f32 0.0, %v3015
  %v3032 = vsub.f32 0.0, %v3016
  %v3033 = vsub.f32 0.0, %v3017
  %v3034 = vsub.f32 0.0, %v3018
  %v3035 = vsub.f32 0.0, %v3019
  %v3036 = vsub.f32 0.0, %v3020
  %v3037 = vsub.f32 0.0, %v3021
  %v3038 = vsub.f32 0.0, %v3022
  %v3039 = vsub.f32 0.0, %v3023
  %v3040 = vsub.f32 0.0, %v3024
  %v3041 = vsub.f32 0.0, %v3025
  %v3042 = vsub.f32 0.0, %v3026
  %v3043 = vsub.f32 0.0, %v3027
  %v3044 = vsub.f32 0.0, %v3028
  %v3045 = vmul.f32 %v3029, 1.442695
  %v3046 = vpow.pop %v3045
  %v3047 = vmul.f32 %v3030, 1.442695
  %v3048 = vpow.pop %v3047
  %v3049 = vmul.f32 %v3031, 1.442695
  %v3050 = vpow.pop %v3049
  %v3051 = vmul.f32 %v3032, 1.442695
  %v3052 = vpow.pop %v3051
  %v3053 = vmul.f32 %v3033, 1.442695
  %v3054 = vpow.pop %v3053
  %v3055 = vmul.f32 %v3034, 1.442695
  %v3056 = vpow.pop %v3055
  %v3057 = vmul.f32 %v3035, 1.442695
  %v3058 = vpow.pop %v3057
  %v3059 = vmul.f32 %v3036, 1.442695
  %v3060 = vpow.pop %v3059
  %v3061 = vmul.f32 %v3037, 1.442695
  %v3062 = vpow.pop %v3061
  %v3063 = vmul.f32 %v3038, 1.442695
  %v3064 = vpow.pop %v3063
  %v3065 = vmul.f32 %v3039, 1.442695
  %v3066 = vpow.pop %v3065
  %v3067 = vmul.f32 %v3040, 1.442695
  %v3068 = vpow.pop %v3067
  %v3069 = vmul.f32 %v3041, 1.442695
  %v3070 = vpow.pop %v3069
  %v3071 = vmul.f32 %v3042, 1.442695
  %v3072 = vpow.pop %v3071
  %v3073 = vmul.f32 %v3043, 1.442695
  %v3074 = vpow.pop %v3073
  %v3075 = vmul.f32 %v3044, 1.442695
  %v3076 = vpow.pop %v3075
  %v3077 = vadd.f32 %v3046, 1.0
  %v3078 = vlog2.pop %v3077
  %v3079 = vmul.f32 %v3078, 0.6931472
  %v3080 = vmul.f32 -0.5, %v3046
  %v3081 = vadd.f32 %v3080, 1.0
  %v3082 = vmul.f32 %v3081, %v3046
  %v3083 = vand.u32 2147483647, %v3046
  %vm3084 = vcmp.lt.f32.partialorder %v3083, 0.0004427343
  %v3085 = vsel %vm3084, %v3082, %v3079
  %v3086 = vadd.f32 %v3048, 1.0
  %v3087 = vlog2.pop %v3086
  %v3088 = vmul.f32 %v3087, 0.6931472
  %v3089 = vmul.f32 -0.5, %v3048
  %v3090 = vadd.f32 %v3089, 1.0
  %v3091 = vmul.f32 %v3090, %v3048
  %v3092 = vand.u32 2147483647, %v3048
  %vm3093 = vcmp.lt.f32.partialorder %v3092, 0.0004427343
  %v3094 = vsel %vm3093, %v3091, %v3088
  %v3095 = vadd.f32 %v3050, 1.0
  %v3096 = vlog2.pop %v3095
  %v3097 = vmul.f32 %v3096, 0.6931472
  %v3098 = vmul.f32 -0.5, %v3050
  %v3099 = vadd.f32 %v3098, 1.0
  %v3100 = vmul.f32 %v3099, %v3050
  %v3101 = vand.u32 2147483647, %v3050
  %vm3102 = vcmp.lt.f32.partialorder %v3101, 0.0004427343
  %v3103 = vsel %vm3102, %v3100, %v3097
  %v3104 = vadd.f32 %v3052, 1.0
  %v3105 = vlog2.pop %v3104
  %v3106 = vmul.f32 %v3105, 0.6931472
  %v3107 = vmul.f32 -0.5, %v3052
  %v3108 = vadd.f32 %v3107, 1.0
  %v3109 = vmul.f32 %v3108, %v3052
  %v3110 = vand.u32 2147483647, %v3052
  %vm3111 = vcmp.lt.f32.partialorder %v3110, 0.0004427343
  %v3112 = vsel %vm3111, %v3109, %v3106
  %v3113 = vadd.f32 %v3054, 1.0
  %v3114 = vlog2.pop %v3113
  %v3115 = vmul.f32 %v3114, 0.6931472
  %v3116 = vmul.f32 -0.5, %v3054
  %v3117 = vadd.f32 %v3116, 1.0
  %v3118 = vmul.f32 %v3117, %v3054
  %v3119 = vand.u32 2147483647, %v3054
  %vm3120 = vcmp.lt.f32.partialorder %v3119, 0.0004427343
  %v3121 = vsel %vm3120, %v3118, %v3115
  %v3122 = vadd.f32 %v3056, 1.0
  %v3123 = vlog2.pop %v3122
  %v3124 = vmul.f32 %v3123, 0.6931472
  %v3125 = vmul.f32 -0.5, %v3056
  %v3126 = vadd.f32 %v3125, 1.0
  %v3127 = vmul.f32 %v3126, %v3056
  %v3128 = vand.u32 2147483647, %v3056
  %vm3129 = vcmp.lt.f32.partialorder %v3128, 0.0004427343
  %v3130 = vsel %vm3129, %v3127, %v3124
  %v3131 = vadd.f32 %v3058, 1.0
  %v3132 = vlog2.pop %v3131
  %v3133 = vmul.f32 %v3132, 0.6931472
  %v3134 = vmul.f32 -0.5, %v3058
  %v3135 = vadd.f32 %v3134, 1.0
  %v3136 = vmul.f32 %v3135, %v3058
  %v3137 = vand.u32 2147483647, %v3058
  %vm3138 = vcmp.lt.f32.partialorder %v3137, 0.0004427343
  %v3139 = vsel %vm3138, %v3136, %v3133
  %v3140 = vadd.f32 %v3060, 1.0
  %v3141 = vlog2.pop %v3140
  %v3142 = vmul.f32 %v3141, 0.6931472
  %v3143 = vmul.f32 -0.5, %v3060
  %v3144 = vadd.f32 %v3143, 1.0
  %v3145 = vmul.f32 %v3144, %v3060
  %v3146 = vand.u32 2147483647, %v3060
  %vm3147 = vcmp.lt.f32.partialorder %v3146, 0.0004427343
  %v3148 = vsel %vm3147, %v3145, %v3142
  %v3149 = vadd.f32 %v3062, 1.0
  %v3150 = vlog2.pop %v3149
  %v3151 = vmul.f32 %v3150, 0.6931472
  %v3152 = vmul.f32 -0.5, %v3062
  %v3153 = vadd.f32 %v3152, 1.0
  %v3154 = vmul.f32 %v3153, %v3062
  %v3155 = vand.u32 2147483647, %v3062
  %vm3156 = vcmp.lt.f32.partialorder %v3155, 0.0004427343
  %v3157 = vsel %vm3156, %v3154, %v3151
  %v3158 = vadd.f32 %v3064, 1.0
  %v3159 = vlog2.pop %v3158
  %v3160 = vmul.f32 %v3159, 0.6931472
  %v3161 = vmul.f32 -0.5, %v3064
  %v3162 = vadd.f32 %v3161, 1.0
  %v3163 = vmul.f32 %v3162, %v3064
  %v3164 = vand.u32 2147483647, %v3064
  %vm3165 = vcmp.lt.f32.partialorder %v3164, 0.0004427343
  %v3166 = vsel %vm3165, %v3163, %v3160
  %v3167 = vadd.f32 %v3066, 1.0
  %v3168 = vlog2.pop %v3167
  %v3169 = vmul.f32 %v3168, 0.6931472
  %v3170 = vmul.f32 -0.5, %v3066
  %v3171 = vadd.f32 %v3170, 1.0
  %v3172 = vmul.f32 %v3171, %v3066
  %v3173 = vand.u32 2147483647, %v3066
  %vm3174 = vcmp.lt.f32.partialorder %v3173, 0.0004427343
  %v3175 = vsel %vm3174, %v3172, %v3169
  %v3176 = vadd.f32 %v3068, 1.0
  %v3177 = vlog2.pop %v3176
  %v3178 = vmul.f32 %v3177, 0.6931472
  %v3179 = vmul.f32 -0.5, %v3068
  %v3180 = vadd.f32 %v3179, 1.0
  %v3181 = vmul.f32 %v3180, %v3068
  %v3182 = vand.u32 2147483647, %v3068
  %vm3183 = vcmp.lt.f32.partialorder %v3182, 0.0004427343
  %v3184 = vsel %vm3183, %v3181, %v3178
  %v3185 = vadd.f32 %v3070, 1.0
  %v3186 = vlog2.pop %v3185
  %v3187 = vmul.f32 %v3186, 0.6931472
  %v3188 = vmul.f32 -0.5, %v3070
  %v3189 = vadd.f32 %v3188, 1.0
  %v3190 = vmul.f32 %v3189, %v3070
  %v3191 = vand.u32 2147483647, %v3070
  %vm3192 = vcmp.lt.f32.partialorder %v3191, 0.0004427343
  %v3193 = vsel %vm3192, %v3190, %v3187
  %v3194 = vadd.f32 %v3072, 1.0
  %v3195 = vlog2.pop %v3194
  %v3196 = vmul.f32 %v3195, 0.6931472
  %v3197 = vmul.f32 -0.5, %v3072
  %v3198 = vadd.f32 %v3197, 1.0
  %v3199 = vmul.f32 %v3198, %v3072
  %v3200 = vand.u32 2147483647, %v3072
  %vm3201 = vcmp.lt.f32.partialorder %v3200, 0.0004427343
  %v3202 = vsel %vm3201, %v3199, %v3196
  %v3203 = vadd.f32 %v3074, 1.0
  %v3204 = vlog2.pop %v3203
  %v3205 = vmul.f32 %v3204, 0.6931472
  %v3206 = vmul.f32 -0.5, %v3074
  %v3207 = vadd.f32 %v3206, 1.0
  %v3208 = vmul.f32 %v3207, %v3074
  %v3209 = vand.u32 2147483647, %v3074
  %vm3210 = vcmp.lt.f32.partialorder %v3209, 0.0004427343
  %v3211 = vsel %vm3210, %v3208, %v3205
  %v3212 = vadd.f32 %v3076, 1.0
  %v3213 = vlog2.pop %v3212
  %v3214 = vmul.f32 %v3213, 0.6931472
  %v3215 = vmul.f32 -0.5, %v3076
  %v3216 = vadd.f32 %v3215, 1.0
  %v3217 = vmul.f32 %v3216, %v3076
  %v3218 = vand.u32 2147483647, %v3076
  %vm3219 = vcmp.lt.f32.partialorder %v3218, 0.0004427343
  %v3220 = vsel %vm3219, %v3217, %v3214
  %v3221 = vadd.f32 %v2997, %v3085
  %v3222 = vadd.f32 %v2998, %v3094
  %v3223 = vadd.f32 %v2999, %v3103
  %v3224 = vadd.f32 %v3000, %v3112
  %v3225 = vadd.f32 %v3001, %v3121
  %v3226 = vadd.f32 %v3002, %v3130
  %v3227 = vadd.f32 %v3003, %v3139
  %v3228 = vadd.f32 %v3004, %v3148
  %v3229 = vadd.f32 %v3005, %v3157
  %v3230 = vadd.f32 %v3006, %v3166
  %v3231 = vadd.f32 %v3007, %v3175
  %v3232 = vadd.f32 %v3008, %v3184
  %v3233 = vadd.f32 %v3009, %v3193
  %v3234 = vadd.f32 %v3010, %v3202
  %v3235 = vadd.f32 %v3011, %v3211
  %v3236 = vadd.f32 %v3012, %v3220
  %v3237 = vsel %vm420, %v3221, 0.0
  %v3238 = vsel %vm421, %v3222, 0.0
  %v3239 = vsel %vm422, %v3223, 0.0
  %v3240 = vsel %vm423, %v3224, 0.0
  %v3241 = vsel %vm424, %v3225, 0.0
  %v3242 = vsel %vm425, %v3226, 0.0
  %v3243 = vsel %vm426, %v3227, 0.0
  %v3244 = vsel %vm427, %v3228, 0.0
  %v3245 = vsel %vm428, %v3229, 0.0
  %v3246 = vsel %vm429, %v3230, 0.0
  %v3247 = vsel %vm430, %v3231, 0.0
  %v3248 = vsel %vm431, %v3232, 0.0
  %v3249 = vsel %vm432, %v3233, 0.0
  %v3250 = vsel %vm433, %v3234, 0.0
  %v3251 = vsel %vm434, %v3235, 0.0
  %v3252 = vsel %vm435, %v3236, 0.0
  %v3253 = vadd.f32 %v3237, %v3238
  %v3254 = vadd.f32 %v3253, %v3239
  %v3255 = vadd.f32 %v3254, %v3240
  %v3256 = vadd.f32 %v3255, %v3241
  %v3257 = vadd.f32 %v3256, %v3242
  %v3258 = vadd.f32 %v3257, %v3243
  %v3259 = vadd.f32 %v3258, %v3244
  %v3260 = vadd.f32 %v3259, %v3245
  %v3261 = vadd.f32 %v3260, %v3246
  %v3262 = vadd.f32 %v3261, %v3247
  %v3263 = vadd.f32 %v3262, %v3248
  %v3264 = vadd.f32 %v3263, %v3249
  %v3265 = vadd.f32 %v3264, %v3250
  %v3266 = vadd.f32 %v3265, %v3251
  %v3267 = vadd.f32 %v3266, %v3252
  %v3268 = vadd.f32 %v3267, 0.0
  %s3269 = scalar_lea.vmem %s14, 72
  %3270 = vst [vmem:[%s3269] sm:$0xff] %v3268
  %v3271 = vld [vmem:[%s10] sm:$0xff]
  %v3272 = vld [vmem:[%s10 + $0x8] sm:$0xff]
  %v3273 = vld [vmem:[%s10 + $0x10] sm:$0xff]
  %v3274 = vld [vmem:[%s10 + $0x18] sm:$0xff]
  %v3275 = vld [vmem:[%s10 + $0x20] sm:$0xff]
  %v3276 = vld [vmem:[%s10 + $0x28] sm:$0xff]
  %v3277 = vld [vmem:[%s10 + $0x30] sm:$0xff]
  %v3278 = vld [vmem:[%s10 + $0x38] sm:$0xff]
  %v3279 = vld [vmem:[%s10 + $0x40] sm:$0xff]
  %v3280 = vld [vmem:[%s10 + $0x48] sm:$0xff]
  %v3281 = vld [vmem:[%s10 + $0x50] sm:$0xff]
  %v3282 = vld [vmem:[%s10 + $0x58] sm:$0xff]
  %v3283 = vld [vmem:[%s10 + $0x60] sm:$0xff]
  %v3284 = vld [vmem:[%s10 + $0x68] sm:$0xff]
  %v3285 = vld [vmem:[%s10 + $0x70] sm:$0xff]
  %v3286 = vld [vmem:[%s10 + $0x78] sm:$0xff]
  %v3287 = vld [vmem:[%s12] sm:$0xff]
  %v3288 = vld [vmem:[%s12 + $0x8] sm:$0xff]
  %v3289 = vld [vmem:[%s12 + $0x10] sm:$0xff]
  %v3290 = vld [vmem:[%s12 + $0x18] sm:$0xff]
  %v3291 = vld [vmem:[%s12 + $0x20] sm:$0xff]
  %v3292 = vld [vmem:[%s12 + $0x28] sm:$0xff]
  %v3293 = vld [vmem:[%s12 + $0x30] sm:$0xff]
  %v3294 = vld [vmem:[%s12 + $0x38] sm:$0xff]
  %v3295 = vld [vmem:[%s12 + $0x40] sm:$0xff]
  %v3296 = vld [vmem:[%s12 + $0x48] sm:$0xff]
  %v3297 = vld [vmem:[%s12 + $0x50] sm:$0xff]
  %v3298 = vld [vmem:[%s12 + $0x58] sm:$0xff]
  %v3299 = vld [vmem:[%s12 + $0x60] sm:$0xff]
  %v3300 = vld [vmem:[%s12 + $0x68] sm:$0xff]
  %v3301 = vld [vmem:[%s12 + $0x70] sm:$0xff]
  %v3302 = vld [vmem:[%s12 + $0x78] sm:$0xff]
  %v3303 = vmax.f32 %v3271, 0.0
  %v3304 = vmax.f32 %v3272, 0.0
  %v3305 = vmax.f32 %v3273, 0.0
  %v3306 = vmax.f32 %v3274, 0.0
  %v3307 = vmax.f32 %v3275, 0.0
  %v3308 = vmax.f32 %v3276, 0.0
  %v3309 = vmax.f32 %v3277, 0.0
  %v3310 = vmax.f32 %v3278, 0.0
  %v3311 = vmax.f32 %v3279, 0.0
  %v3312 = vmax.f32 %v3280, 0.0
  %v3313 = vmax.f32 %v3281, 0.0
  %v3314 = vmax.f32 %v3282, 0.0
  %v3315 = vmax.f32 %v3283, 0.0
  %v3316 = vmax.f32 %v3284, 0.0
  %v3317 = vmax.f32 %v3285, 0.0
  %v3318 = vmax.f32 %v3286, 0.0
  %v3319 = vmul.f32 %v3271, %v3287
  %v3320 = vmul.f32 %v3272, %v3288
  %v3321 = vmul.f32 %v3273, %v3289
  %v3322 = vmul.f32 %v3274, %v3290
  %v3323 = vmul.f32 %v3275, %v3291
  %v3324 = vmul.f32 %v3276, %v3292
  %v3325 = vmul.f32 %v3277, %v3293
  %v3326 = vmul.f32 %v3278, %v3294
  %v3327 = vmul.f32 %v3279, %v3295
  %v3328 = vmul.f32 %v3280, %v3296
  %v3329 = vmul.f32 %v3281, %v3297
  %v3330 = vmul.f32 %v3282, %v3298
  %v3331 = vmul.f32 %v3283, %v3299
  %v3332 = vmul.f32 %v3284, %v3300
  %v3333 = vmul.f32 %v3285, %v3301
  %v3334 = vmul.f32 %v3286, %v3302
  %v3335 = vsub.f32 %v3303, %v3319
  %v3336 = vsub.f32 %v3304, %v3320
  %v3337 = vsub.f32 %v3305, %v3321
  %v3338 = vsub.f32 %v3306, %v3322
  %v3339 = vsub.f32 %v3307, %v3323
  %v3340 = vsub.f32 %v3308, %v3324
  %v3341 = vsub.f32 %v3309, %v3325
  %v3342 = vsub.f32 %v3310, %v3326
  %v3343 = vsub.f32 %v3311, %v3327
  %v3344 = vsub.f32 %v3312, %v3328
  %v3345 = vsub.f32 %v3313, %v3329
  %v3346 = vsub.f32 %v3314, %v3330
  %v3347 = vsub.f32 %v3315, %v3331
  %v3348 = vsub.f32 %v3316, %v3332
  %v3349 = vsub.f32 %v3317, %v3333
  %v3350 = vsub.f32 %v3318, %v3334
  %v3351 = vand.u32 2147483647, %v3271
  %v3352 = vand.u32 2147483647, %v3272
  %v3353 = vand.u32 2147483647, %v3273
  %v3354 = vand.u32 2147483647, %v3274
  %v3355 = vand.u32 2147483647, %v3275
  %v3356 = vand.u32 2147483647, %v3276
  %v3357 = vand.u32 2147483647, %v3277
  %v3358 = vand.u32 2147483647, %v3278
  %v3359 = vand.u32 2147483647, %v3279
  %v3360 = vand.u32 2147483647, %v3280
  %v3361 = vand.u32 2147483647, %v3281
  %v3362 = vand.u32 2147483647, %v3282
  %v3363 = vand.u32 2147483647, %v3283
  %v3364 = vand.u32 2147483647, %v3284
  %v3365 = vand.u32 2147483647, %v3285
  %v3366 = vand.u32 2147483647, %v3286
  %v3367 = vsub.f32 0.0, %v3351
  %v3368 = vsub.f32 0.0, %v3352
  %v3369 = vsub.f32 0.0, %v3353
  %v3370 = vsub.f32 0.0, %v3354
  %v3371 = vsub.f32 0.0, %v3355
  %v3372 = vsub.f32 0.0, %v3356
  %v3373 = vsub.f32 0.0, %v3357
  %v3374 = vsub.f32 0.0, %v3358
  %v3375 = vsub.f32 0.0, %v3359
  %v3376 = vsub.f32 0.0, %v3360
  %v3377 = vsub.f32 0.0, %v3361
  %v3378 = vsub.f32 0.0, %v3362
  %v3379 = vsub.f32 0.0, %v3363
  %v3380 = vsub.f32 0.0, %v3364
  %v3381 = vsub.f32 0.0, %v3365
  %v3382 = vsub.f32 0.0, %v3366
  %v3383 = vmul.f32 %v3367, 1.442695
  %v3384 = vpow.pop %v3383
  %v3385 = vmul.f32 %v3368, 1.442695
  %v3386 = vpow.pop %v3385
  %v3387 = vmul.f32 %v3369, 1.442695
  %v3388 = vpow.pop %v3387
  %v3389 = vmul.f32 %v3370, 1.442695
  %v3390 = vpow.pop %v3389
  %v3391 = vmul.f32 %v3371, 1.442695
  %v3392 = vpow.pop %v3391
  %v3393 = vmul.f32 %v3372, 1.442695
  %v3394 = vpow.pop %v3393
  %v3395 = vmul.f32 %v3373, 1.442695
  %v3396 = vpow.pop %v3395
  %v3397 = vmul.f32 %v3374, 1.442695
  %v3398 = vpow.pop %v3397
  %v3399 = vmul.f32 %v3375, 1.442695
  %v3400 = vpow.pop %v3399
  %v3401 = vmul.f32 %v3376, 1.442695
  %v3402 = vpow.pop %v3401
  %v3403 = vmul.f32 %v3377, 1.442695
  %v3404 = vpow.pop %v3403
  %v3405 = vmul.f32 %v3378, 1.442695
  %v3406 = vpow.pop %v3405
  %v3407 = vmul.f32 %v3379, 1.442695
  %v3408 = vpow.pop %v3407
  %v3409 = vmul.f32 %v3380, 1.442695
  %v3410 = vpow.pop %v3409
  %v3411 = vmul.f32 %v3381, 1.442695
  %v3412 = vpow.pop %v3411
  %v3413 = vmul.f32 %v3382, 1.442695
  %v3414 = vpow.pop %v3413
  %v3415 = vadd.f32 %v3384, 1.0
  %v3416 = vlog2.pop %v3415
  %v3417 = vmul.f32 %v3416, 0.6931472
  %v3418 = vmul.f32 -0.5, %v3384
  %v3419 = vadd.f32 %v3418, 1.0
  %v3420 = vmul.f32 %v3419, %v3384
  %v3421 = vand.u32 2147483647, %v3384
  %vm3422 = vcmp.lt.f32.partialorder %v3421, 0.0004427343
  %v3423 = vsel %vm3422, %v3420, %v3417
  %v3424 = vadd.f32 %v3386, 1.0
  %v3425 = vlog2.pop %v3424
  %v3426 = vmul.f32 %v3425, 0.6931472
  %v3427 = vmul.f32 -0.5, %v3386
  %v3428 = vadd.f32 %v3427, 1.0
  %v3429 = vmul.f32 %v3428, %v3386
  %v3430 = vand.u32 2147483647, %v3386
  %vm3431 = vcmp.lt.f32.partialorder %v3430, 0.0004427343
  %v3432 = vsel %vm3431, %v3429, %v3426
  %v3433 = vadd.f32 %v3388, 1.0
  %v3434 = vlog2.pop %v3433
  %v3435 = vmul.f32 %v3434, 0.6931472
  %v3436 = vmul.f32 -0.5, %v3388
  %v3437 = vadd.f32 %v3436, 1.0
  %v3438 = vmul.f32 %v3437, %v3388
  %v3439 = vand.u32 2147483647, %v3388
  %vm3440 = vcmp.lt.f32.partialorder %v3439, 0.0004427343
  %v3441 = vsel %vm3440, %v3438, %v3435
  %v3442 = vadd.f32 %v3390, 1.0
  %v3443 = vlog2.pop %v3442
  %v3444 = vmul.f32 %v3443, 0.6931472
  %v3445 = vmul.f32 -0.5, %v3390
  %v3446 = vadd.f32 %v3445, 1.0
  %v3447 = vmul.f32 %v3446, %v3390
  %v3448 = vand.u32 2147483647, %v3390
  %vm3449 = vcmp.lt.f32.partialorder %v3448, 0.0004427343
  %v3450 = vsel %vm3449, %v3447, %v3444
  %v3451 = vadd.f32 %v3392, 1.0
  %v3452 = vlog2.pop %v3451
  %v3453 = vmul.f32 %v3452, 0.6931472
  %v3454 = vmul.f32 -0.5, %v3392
  %v3455 = vadd.f32 %v3454, 1.0
  %v3456 = vmul.f32 %v3455, %v3392
  %v3457 = vand.u32 2147483647, %v3392
  %vm3458 = vcmp.lt.f32.partialorder %v3457, 0.0004427343
  %v3459 = vsel %vm3458, %v3456, %v3453
  %v3460 = vadd.f32 %v3394, 1.0
  %v3461 = vlog2.pop %v3460
  %v3462 = vmul.f32 %v3461, 0.6931472
  %v3463 = vmul.f32 -0.5, %v3394
  %v3464 = vadd.f32 %v3463, 1.0
  %v3465 = vmul.f32 %v3464, %v3394
  %v3466 = vand.u32 2147483647, %v3394
  %vm3467 = vcmp.lt.f32.partialorder %v3466, 0.0004427343
  %v3468 = vsel %vm3467, %v3465, %v3462
  %v3469 = vadd.f32 %v3396, 1.0
  %v3470 = vlog2.pop %v3469
  %v3471 = vmul.f32 %v3470, 0.6931472
  %v3472 = vmul.f32 -0.5, %v3396
  %v3473 = vadd.f32 %v3472, 1.0
  %v3474 = vmul.f32 %v3473, %v3396
  %v3475 = vand.u32 2147483647, %v3396
  %vm3476 = vcmp.lt.f32.partialorder %v3475, 0.0004427343
  %v3477 = vsel %vm3476, %v3474, %v3471
  %v3478 = vadd.f32 %v3398, 1.0
  %v3479 = vlog2.pop %v3478
  %v3480 = vmul.f32 %v3479, 0.6931472
  %v3481 = vmul.f32 -0.5, %v3398
  %v3482 = vadd.f32 %v3481, 1.0
  %v3483 = vmul.f32 %v3482, %v3398
  %v3484 = vand.u32 2147483647, %v3398
  %vm3485 = vcmp.lt.f32.partialorder %v3484, 0.0004427343
  %v3486 = vsel %vm3485, %v3483, %v3480
  %v3487 = vadd.f32 %v3400, 1.0
  %v3488 = vlog2.pop %v3487
  %v3489 = vmul.f32 %v3488, 0.6931472
  %v3490 = vmul.f32 -0.5, %v3400
  %v3491 = vadd.f32 %v3490, 1.0
  %v3492 = vmul.f32 %v3491, %v3400
  %v3493 = vand.u32 2147483647, %v3400
  %vm3494 = vcmp.lt.f32.partialorder %v3493, 0.0004427343
  %v3495 = vsel %vm3494, %v3492, %v3489
  %v3496 = vadd.f32 %v3402, 1.0
  %v3497 = vlog2.pop %v3496
  %v3498 = vmul.f32 %v3497, 0.6931472
  %v3499 = vmul.f32 -0.5, %v3402
  %v3500 = vadd.f32 %v3499, 1.0
  %v3501 = vmul.f32 %v3500, %v3402
  %v3502 = vand.u32 2147483647, %v3402
  %vm3503 = vcmp.lt.f32.partialorder %v3502, 0.0004427343
  %v3504 = vsel %vm3503, %v3501, %v3498
  %v3505 = vadd.f32 %v3404, 1.0
  %v3506 = vlog2.pop %v3505
  %v3507 = vmul.f32 %v3506, 0.6931472
  %v3508 = vmul.f32 -0.5, %v3404
  %v3509 = vadd.f32 %v3508, 1.0
  %v3510 = vmul.f32 %v3509, %v3404
  %v3511 = vand.u32 2147483647, %v3404
  %vm3512 = vcmp.lt.f32.partialorder %v3511, 0.0004427343
  %v3513 = vsel %vm3512, %v3510, %v3507
  %v3514 = vadd.f32 %v3406, 1.0
  %v3515 = vlog2.pop %v3514
  %v3516 = vmul.f32 %v3515, 0.6931472
  %v3517 = vmul.f32 -0.5, %v3406
  %v3518 = vadd.f32 %v3517, 1.0
  %v3519 = vmul.f32 %v3518, %v3406
  %v3520 = vand.u32 2147483647, %v3406
  %vm3521 = vcmp.lt.f32.partialorder %v3520, 0.0004427343
  %v3522 = vsel %vm3521, %v3519, %v3516
  %v3523 = vadd.f32 %v3408, 1.0
  %v3524 = vlog2.pop %v3523
  %v3525 = vmul.f32 %v3524, 0.6931472
  %v3526 = vmul.f32 -0.5, %v3408
  %v3527 = vadd.f32 %v3526, 1.0
  %v3528 = vmul.f32 %v3527, %v3408
  %v3529 = vand.u32 2147483647, %v3408
  %vm3530 = vcmp.lt.f32.partialorder %v3529, 0.0004427343
  %v3531 = vsel %vm3530, %v3528, %v3525
  %v3532 = vadd.f32 %v3410, 1.0
  %v3533 = vlog2.pop %v3532
  %v3534 = vmul.f32 %v3533, 0.6931472
  %v3535 = vmul.f32 -0.5, %v3410
  %v3536 = vadd.f32 %v3535, 1.0
  %v3537 = vmul.f32 %v3536, %v3410
  %v3538 = vand.u32 2147483647, %v3410
  %vm3539 = vcmp.lt.f32.partialorder %v3538, 0.0004427343
  %v3540 = vsel %vm3539, %v3537, %v3534
  %v3541 = vadd.f32 %v3412, 1.0
  %v3542 = vlog2.pop %v3541
  %v3543 = vmul.f32 %v3542, 0.6931472
  %v3544 = vmul.f32 -0.5, %v3412
  %v3545 = vadd.f32 %v3544, 1.0
  %v3546 = vmul.f32 %v3545, %v3412
  %v3547 = vand.u32 2147483647, %v3412
  %vm3548 = vcmp.lt.f32.partialorder %v3547, 0.0004427343
  %v3549 = vsel %vm3548, %v3546, %v3543
  %v3550 = vadd.f32 %v3414, 1.0
  %v3551 = vlog2.pop %v3550
  %v3552 = vmul.f32 %v3551, 0.6931472
  %v3553 = vmul.f32 -0.5, %v3414
  %v3554 = vadd.f32 %v3553, 1.0
  %v3555 = vmul.f32 %v3554, %v3414
  %v3556 = vand.u32 2147483647, %v3414
  %vm3557 = vcmp.lt.f32.partialorder %v3556, 0.0004427343
  %v3558 = vsel %vm3557, %v3555, %v3552
  %v3559 = vadd.f32 %v3335, %v3423
  %v3560 = vadd.f32 %v3336, %v3432
  %v3561 = vadd.f32 %v3337, %v3441
  %v3562 = vadd.f32 %v3338, %v3450
  %v3563 = vadd.f32 %v3339, %v3459
  %v3564 = vadd.f32 %v3340, %v3468
  %v3565 = vadd.f32 %v3341, %v3477
  %v3566 = vadd.f32 %v3342, %v3486
  %v3567 = vadd.f32 %v3343, %v3495
  %v3568 = vadd.f32 %v3344, %v3504
  %v3569 = vadd.f32 %v3345, %v3513
  %v3570 = vadd.f32 %v3346, %v3522
  %v3571 = vadd.f32 %v3347, %v3531
  %v3572 = vadd.f32 %v3348, %v3540
  %v3573 = vadd.f32 %v3349, %v3549
  %v3574 = vadd.f32 %v3350, %v3558
  %v3575 = vsel %vm420, %v3559, 0.0
  %v3576 = vsel %vm421, %v3560, 0.0
  %v3577 = vsel %vm422, %v3561, 0.0
  %v3578 = vsel %vm423, %v3562, 0.0
  %v3579 = vsel %vm424, %v3563, 0.0
  %v3580 = vsel %vm425, %v3564, 0.0
  %v3581 = vsel %vm426, %v3565, 0.0
  %v3582 = vsel %vm427, %v3566, 0.0
  %v3583 = vsel %vm428, %v3567, 0.0
  %v3584 = vsel %vm429, %v3568, 0.0
  %v3585 = vsel %vm430, %v3569, 0.0
  %v3586 = vsel %vm431, %v3570, 0.0
  %v3587 = vsel %vm432, %v3571, 0.0
  %v3588 = vsel %vm433, %v3572, 0.0
  %v3589 = vsel %vm434, %v3573, 0.0
  %v3590 = vsel %vm435, %v3574, 0.0
  %v3591 = vadd.f32 %v3575, %v3576
  %v3592 = vadd.f32 %v3591, %v3577
  %v3593 = vadd.f32 %v3592, %v3578
  %v3594 = vadd.f32 %v3593, %v3579
  %v3595 = vadd.f32 %v3594, %v3580
  %v3596 = vadd.f32 %v3595, %v3581
  %v3597 = vadd.f32 %v3596, %v3582
  %v3598 = vadd.f32 %v3597, %v3583
  %v3599 = vadd.f32 %v3598, %v3584
  %v3600 = vadd.f32 %v3599, %v3585
  %v3601 = vadd.f32 %v3600, %v3586
  %v3602 = vadd.f32 %v3601, %v3587
  %v3603 = vadd.f32 %v3602, %v3588
  %v3604 = vadd.f32 %v3603, %v3589
  %v3605 = vadd.f32 %v3604, %v3590
  %v3606 = vadd.f32 %v3605, 0.0
  %s3607 = scalar_lea.vmem %s14, 80
  %3608 = vst [vmem:[%s3607] sm:$0xff] %v3606
  %v3609 = vld [vmem:[%s11] sm:$0xff]
  %v3610 = vld [vmem:[%s11 + $0x8] sm:$0xff]
  %v3611 = vld [vmem:[%s11 + $0x10] sm:$0xff]
  %v3612 = vld [vmem:[%s11 + $0x18] sm:$0xff]
  %v3613 = vld [vmem:[%s11 + $0x20] sm:$0xff]
  %v3614 = vld [vmem:[%s11 + $0x28] sm:$0xff]
  %v3615 = vld [vmem:[%s11 + $0x30] sm:$0xff]
  %v3616 = vld [vmem:[%s11 + $0x38] sm:$0xff]
  %v3617 = vld [vmem:[%s11 + $0x40] sm:$0xff]
  %v3618 = vld [vmem:[%s11 + $0x48] sm:$0xff]
  %v3619 = vld [vmem:[%s11 + $0x50] sm:$0xff]
  %v3620 = vld [vmem:[%s11 + $0x58] sm:$0xff]
  %v3621 = vld [vmem:[%s11 + $0x60] sm:$0xff]
  %v3622 = vld [vmem:[%s11 + $0x68] sm:$0xff]
  %v3623 = vld [vmem:[%s11 + $0x70] sm:$0xff]
  %v3624 = vld [vmem:[%s11 + $0x78] sm:$0xff]
  %v3625 = vld [vmem:[%s13] sm:$0xff]
  %v3626 = vld [vmem:[%s13 + $0x8] sm:$0xff]
  %v3627 = vld [vmem:[%s13 + $0x10] sm:$0xff]
  %v3628 = vld [vmem:[%s13 + $0x18] sm:$0xff]
  %v3629 = vld [vmem:[%s13 + $0x20] sm:$0xff]
  %v3630 = vld [vmem:[%s13 + $0x28] sm:$0xff]
  %v3631 = vld [vmem:[%s13 + $0x30] sm:$0xff]
  %v3632 = vld [vmem:[%s13 + $0x38] sm:$0xff]
  %v3633 = vld [vmem:[%s13 + $0x40] sm:$0xff]
  %v3634 = vld [vmem:[%s13 + $0x48] sm:$0xff]
  %v3635 = vld [vmem:[%s13 + $0x50] sm:$0xff]
  %v3636 = vld [vmem:[%s13 + $0x58] sm:$0xff]
  %v3637 = vld [vmem:[%s13 + $0x60] sm:$0xff]
  %v3638 = vld [vmem:[%s13 + $0x68] sm:$0xff]
  %v3639 = vld [vmem:[%s13 + $0x70] sm:$0xff]
  %v3640 = vld [vmem:[%s13 + $0x78] sm:$0xff]
  %v3641 = vlog2.pop %v3609
  %v3642 = vmul.f32 %v3641, 0.6931472
  %v3643 = vlog2.pop %v3610
  %v3644 = vmul.f32 %v3643, 0.6931472
  %v3645 = vlog2.pop %v3611
  %v3646 = vmul.f32 %v3645, 0.6931472
  %v3647 = vlog2.pop %v3612
  %v3648 = vmul.f32 %v3647, 0.6931472
  %v3649 = vlog2.pop %v3613
  %v3650 = vmul.f32 %v3649, 0.6931472
  %v3651 = vlog2.pop %v3614
  %v3652 = vmul.f32 %v3651, 0.6931472
  %v3653 = vlog2.pop %v3615
  %v3654 = vmul.f32 %v3653, 0.6931472
  %v3655 = vlog2.pop %v3616
  %v3656 = vmul.f32 %v3655, 0.6931472
  %v3657 = vlog2.pop %v3617
  %v3658 = vmul.f32 %v3657, 0.6931472
  %v3659 = vlog2.pop %v3618
  %v3660 = vmul.f32 %v3659, 0.6931472
  %v3661 = vlog2.pop %v3619
  %v3662 = vmul.f32 %v3661, 0.6931472
  %v3663 = vlog2.pop %v3620
  %v3664 = vmul.f32 %v3663, 0.6931472
  %v3665 = vlog2.pop %v3621
  %v3666 = vmul.f32 %v3665, 0.6931472
  %v3667 = vlog2.pop %v3622
  %v3668 = vmul.f32 %v3667, 0.6931472
  %v3669 = vlog2.pop %v3623
  %v3670 = vmul.f32 %v3669, 0.6931472
  %v3671 = vlog2.pop %v3624
  %v3672 = vmul.f32 %v3671, 0.6931472
  %v3673 = vmax.f32 %v3642, -100.0
  %v3674 = vmax.f32 %v3644, -100.0
  %v3675 = vmax.f32 %v3646, -100.0
  %v3676 = vmax.f32 %v3648, -100.0
  %v3677 = vmax.f32 %v3650, -100.0
  %v3678 = vmax.f32 %v3652, -100.0
  %v3679 = vmax.f32 %v3654, -100.0
  %v3680 = vmax.f32 %v3656, -100.0
  %v3681 = vmax.f32 %v3658, -100.0
  %v3682 = vmax.f32 %v3660, -100.0
  %v3683 = vmax.f32 %v3662, -100.0
  %v3684 = vmax.f32 %v3664, -100.0
  %v3685 = vmax.f32 %v3666, -100.0
  %v3686 = vmax.f32 %v3668, -100.0
  %v3687 = vmax.f32 %v3670, -100.0
  %v3688 = vmax.f32 %v3672, -100.0
  %v3689 = vsub.f32 1.0, %v3609
  %v3690 = vsub.f32 1.0, %v3610
  %v3691 = vsub.f32 1.0, %v3611
  %v3692 = vsub.f32 1.0, %v3612
  %v3693 = vsub.f32 1.0, %v3613
  %v3694 = vsub.f32 1.0, %v3614
  %v3695 = vsub.f32 1.0, %v3615
  %v3696 = vsub.f32 1.0, %v3616
  %v3697 = vsub.f32 1.0, %v3617
  %v3698 = vsub.f32 1.0, %v3618
  %v3699 = vsub.f32 1.0, %v3619
  %v3700 = vsub.f32 1.0, %v3620
  %v3701 = vsub.f32 1.0, %v3621
  %v3702 = vsub.f32 1.0, %v3622
  %v3703 = vsub.f32 1.0, %v3623
  %v3704 = vsub.f32 1.0, %v3624
  %v3705 = vlog2.pop %v3689
  %v3706 = vmul.f32 %v3705, 0.6931472
  %v3707 = vlog2.pop %v3690
  %v3708 = vmul.f32 %v3707, 0.6931472
  %v3709 = vlog2.pop %v3691
  %v3710 = vmul.f32 %v3709, 0.6931472
  %v3711 = vlog2.pop %v3692
  %v3712 = vmul.f32 %v3711, 0.6931472
  %v3713 = vlog2.pop %v3693
  %v3714 = vmul.f32 %v3713, 0.6931472
  %v3715 = vlog2.pop %v3694
  %v3716 = vmul.f32 %v3715, 0.6931472
  %v3717 = vlog2.pop %v3695
  %v3718 = vmul.f32 %v3717, 0.6931472
  %v3719 = vlog2.pop %v3696
  %v3720 = vmul.f32 %v3719, 0.6931472
  %v3721 = vlog2.pop %v3697
  %v3722 = vmul.f32 %v3721, 0.6931472
  %v3723 = vlog2.pop %v3698
  %v3724 = vmul.f32 %v3723, 0.6931472
  %v3725 = vlog2.pop %v3699
  %v3726 = vmul.f32 %v3725, 0.6931472
  %v3727 = vlog2.pop %v3700
  %v3728 = vmul.f32 %v3727, 0.6931472
  %v3729 = vlog2.pop %v3701
  %v3730 = vmul.f32 %v3729, 0.6931472
  %v3731 = vlog2.pop %v3702
  %v3732 = vmul.f32 %v3731, 0.6931472
  %v3733 = vlog2.pop %v3703
  %v3734 = vmul.f32 %v3733, 0.6931472
  %v3735 = vlog2.pop %v3704
  %v3736 = vmul.f32 %v3735, 0.6931472
  %v3737 = vmax.f32 %v3706, -100.0
  %v3738 = vmax.f32 %v3708, -100.0
  %v3739 = vmax.f32 %v3710, -100.0
  %v3740 = vmax.f32 %v3712, -100.0
  %v3741 = vmax.f32 %v3714, -100.0
  %v3742 = vmax.f32 %v3716, -100.0
  %v3743 = vmax.f32 %v3718, -100.0
  %v3744 = vmax.f32 %v3720, -100.0
  %v3745 = vmax.f32 %v3722, -100.0
  %v3746 = vmax.f32 %v3724, -100.0
  %v3747 = vmax.f32 %v3726, -100.0
  %v3748 = vmax.f32 %v3728, -100.0
  %v3749 = vmax.f32 %v3730, -100.0
  %v3750 = vmax.f32 %v3732, -100.0
  %v3751 = vmax.f32 %v3734, -100.0
  %v3752 = vmax.f32 %v3736, -100.0
  %v3753 = vmul.f32 %v3625, %v3673
  %v3754 = vmul.f32 %v3626, %v3674
  %v3755 = vmul.f32 %v3627, %v3675
  %v3756 = vmul.f32 %v3628, %v3676
  %v3757 = vmul.f32 %v3629, %v3677
  %v3758 = vmul.f32 %v3630, %v3678
  %v3759 = vmul.f32 %v3631, %v3679
  %v3760 = vmul.f32 %v3632, %v3680
  %v3761 = vmul.f32 %v3633, %v3681
  %v3762 = vmul.f32 %v3634, %v3682
  %v3763 = vmul.f32 %v3635, %v3683
  %v3764 = vmul.f32 %v3636, %v3684
  %v3765 = vmul.f32 %v3637, %v3685
  %v3766 = vmul.f32 %v3638, %v3686
  %v3767 = vmul.f32 %v3639, %v3687
  %v3768 = vmul.f32 %v3640, %v3688
  %v3769 = vsub.f32 1.0, %v3625
  %v3770 = vsub.f32 1.0, %v3626
  %v3771 = vsub.f32 1.0, %v3627
  %v3772 = vsub.f32 1.0, %v3628
  %v3773 = vsub.f32 1.0, %v3629
  %v3774 = vsub.f32 1.0, %v3630
  %v3775 = vsub.f32 1.0, %v3631
  %v3776 = vsub.f32 1.0, %v3632
  %v3777 = vsub.f32 1.0, %v3633
  %v3778 = vsub.f32 1.0, %v3634
  %v3779 = vsub.f32 1.0, %v3635
  %v3780 = vsub.f32 1.0, %v3636
  %v3781 = vsub.f32 1.0, %v3637
  %v3782 = vsub.f32 1.0, %v3638
  %v3783 = vsub.f32 1.0, %v3639
  %v3784 = vsub.f32 1.0, %v3640
  %v3785 = vmul.f32 %v3769, %v3737
  %v3786 = vmul.f32 %v3770, %v3738
  %v3787 = vmul.f32 %v3771, %v3739
  %v3788 = vmul.f32 %v3772, %v3740
  %v3789 = vmul.f32 %v3773, %v3741
  %v3790 = vmul.f32 %v3774, %v3742
  %v3791 = vmul.f32 %v3775, %v3743
  %v3792 = vmul.f32 %v3776, %v3744
  %v3793 = vmul.f32 %v3777, %v3745
  %v3794 = vmul.f32 %v3778, %v3746
  %v3795 = vmul.f32 %v3779, %v3747
  %v3796 = vmul.f32 %v3780, %v3748
  %v3797 = vmul.f32 %v3781, %v3749
  %v3798 = vmul.f32 %v3782, %v3750
  %v3799 = vmul.f32 %v3783, %v3751
  %v3800 = vmul.f32 %v3784, %v3752
  %v3801 = vadd.f32 %v3753, %v3785
  %v3802 = vadd.f32 %v3754, %v3786
  %v3803 = vadd.f32 %v3755, %v3787
  %v3804 = vadd.f32 %v3756, %v3788
  %v3805 = vadd.f32 %v3757, %v3789
  %v3806 = vadd.f32 %v3758, %v3790
  %v3807 = vadd.f32 %v3759, %v3791
  %v3808 = vadd.f32 %v3760, %v3792
  %v3809 = vadd.f32 %v3761, %v3793
  %v3810 = vadd.f32 %v3762, %v3794
  %v3811 = vadd.f32 %v3763, %v3795
  %v3812 = vadd.f32 %v3764, %v3796
  %v3813 = vadd.f32 %v3765, %v3797
  %v3814 = vadd.f32 %v3766, %v3798
  %v3815 = vadd.f32 %v3767, %v3799
  %v3816 = vadd.f32 %v3768, %v3800
  %v3817 = vsub.f32 0.0, %v3801
  %v3818 = vsub.f32 0.0, %v3802
  %v3819 = vsub.f32 0.0, %v3803
  %v3820 = vsub.f32 0.0, %v3804
  %v3821 = vsub.f32 0.0, %v3805
  %v3822 = vsub.f32 0.0, %v3806
  %v3823 = vsub.f32 0.0, %v3807
  %v3824 = vsub.f32 0.0, %v3808
  %v3825 = vsub.f32 0.0, %v3809
  %v3826 = vsub.f32 0.0, %v3810
  %v3827 = vsub.f32 0.0, %v3811
  %v3828 = vsub.f32 0.0, %v3812
  %v3829 = vsub.f32 0.0, %v3813
  %v3830 = vsub.f32 0.0, %v3814
  %v3831 = vsub.f32 0.0, %v3815
  %v3832 = vsub.f32 0.0, %v3816
  %v3833 = vsel %vm420, %v3817, 0.0
  %v3834 = vsel %vm421, %v3818, 0.0
  %v3835 = vsel %vm422, %v3819, 0.0
  %v3836 = vsel %vm423, %v3820, 0.0
  %v3837 = vsel %vm424, %v3821, 0.0
  %v3838 = vsel %vm425, %v3822, 0.0
  %v3839 = vsel %vm426, %v3823, 0.0
  %v3840 = vsel %vm427, %v3824, 0.0
  %v3841 = vsel %vm428, %v3825, 0.0
  %v3842 = vsel %vm429, %v3826, 0.0
  %v3843 = vsel %vm430, %v3827, 0.0
  %v3844 = vsel %vm431, %v3828, 0.0
  %v3845 = vsel %vm432, %v3829, 0.0
  %v3846 = vsel %vm433, %v3830, 0.0
  %v3847 = vsel %vm434, %v3831, 0.0
  %v3848 = vsel %vm435, %v3832, 0.0
  %v3849 = vadd.f32 %v3833, %v3834
  %v3850 = vadd.f32 %v3849, %v3835
  %v3851 = vadd.f32 %v3850, %v3836
  %v3852 = vadd.f32 %v3851, %v3837
  %v3853 = vadd.f32 %v3852, %v3838
  %v3854 = vadd.f32 %v3853, %v3839
  %v3855 = vadd.f32 %v3854, %v3840
  %v3856 = vadd.f32 %v3855, %v3841
  %v3857 = vadd.f32 %v3856, %v3842
  %v3858 = vadd.f32 %v3857, %v3843
  %v3859 = vadd.f32 %v3858, %v3844
  %v3860 = vadd.f32 %v3859, %v3845
  %v3861 = vadd.f32 %v3860, %v3846
  %v3862 = vadd.f32 %v3861, %v3847
  %v3863 = vadd.f32 %v3862, %v3848
  %v3864 = vadd.f32 %v3863, 0.0
  %s3865 = scalar_lea.vmem %s14, 88
  %3866 = vst [vmem:[%s3865] sm:$0xff] %v3864
  // Predicated region
  $region58: #{cel_forward.1} parent=0 // pred_check
    _
  $region59: #{cel_forward.1} parent=0 // pred_check_branch
    %3868 = sbr.rel (0) target = $region61
  $region60: #{cel_forward.1} parent=0 // pred_region
    _
  $region61: #{cel_forward.1} parent=0 // pred_fallthru
    _
  // Predicated region
  $region62: #{cel_forward.1} parent=0 // pred_check
    _
  $region63: #{cel_forward.1} parent=0 // pred_check_branch
    %3870 = sbr.rel (0) target = $region65
  $region64: #{cel_forward.1} parent=0 // pred_region
    _
  $region65: #{cel_forward.1} parent=0 // pred_fallthru
    _

</llo_original>
